<compile_context>
chip_gen: v5e
topology: v5e:2x2
jax: 0.10.0
libtpu: 0.0.40
codegen_flags: <defaults>
</compile_context>

<pallas_src>
import jax
import jax.numpy as jnp
from jax.experimental import pallas as pl
from jax.experimental.pallas import tpu as pltpu


# -----------------------------------------------------------------------------
# Fused kernel:
#   low[b, n]      = sum_c w_mask[c] * emb[b, c, n] + b_mask        (VPU+XLU)
#   masks[b, m]    = low[b, :] @ K[:, m]                            (MXU, lane-dense)
#   mask_image     = (masks > 0) * 255  -> uint8                    (VPU, lane-dense)
#   iou[b]         = sigmoid(mean_n(emb[b]) . w_iou + b_iou)        (VPU/EUP)
# -----------------------------------------------------------------------------
def _fused_sam_head_kernel(emb_ref, w_mask_ref, w_iou_ref, k_ref,
                           b_mask_ref, b_iou_ref,
                           masks_ref, mask_img_ref, lowres_ref, iou_ref):
    e = emb_ref[...]                                   # (B, C, N) f32
    w_m = w_mask_ref[...]                              # (C, 1)

    # Mask logits: VPU multiply + sublane reduce over C (no 1-wide MXU matmul).
    low = jnp.sum(e * w_m[None, :, :], axis=1) + b_mask_ref[0, 0]   # (B, N)
    lowres_ref[...] = low

    # Bilinear upsample as a single lane-dense MXU matmul: (B, N) @ (N, H*W).
    masks = jnp.dot(low, k_ref[...], preferred_element_type=jnp.float32)
    masks_ref[...] = masks                             # (B, H*W), 4096-wide stores

    # Model.forward hot path: mask_image = (masks > 0) * 255 as uint8.
    mask_img_ref[...] = jnp.where(masks > 0.0, 255, 0).astype(jnp.uint8)

    # IoU head: lane reduce over spatial, VPU dot over C, sigmoid (EUP).
    pooled = jnp.mean(e, axis=2)                       # (B, C)
    logit = jnp.sum(pooled * w_iou_ref[...], axis=1, keepdims=True) + b_iou_ref[0, 0]
    iou_ref[...] = jax.nn.sigmoid(logit)               # (B, 1)


def fused_sam_head(emb_bcn, w_mask, w_iou, interp, b_mask, b_iou, out_hw):
    B, C, N = emb_bcn.shape
    HW = out_hw
    vmem = pltpu.MemorySpace.VMEM
    smem = pltpu.MemorySpace.SMEM
    return pl.pallas_call(
        _fused_sam_head_kernel,
        out_shape=(
            jax.ShapeDtypeStruct((B, HW), jnp.float32),   # masks (flat)
            jax.ShapeDtypeStruct((B, HW), jnp.uint8),     # mask_image (flat)
            jax.ShapeDtypeStruct((B, N), jnp.float32),    # low_res_masks (flat)
            jax.ShapeDtypeStruct((B, 1), jnp.float32),    # iou_predictions
        ),
        in_specs=[
            pl.BlockSpec(memory_space=vmem),   # emb  (B, C, N)
            pl.BlockSpec(memory_space=vmem),   # w_mask (C, 1)
            pl.BlockSpec(memory_space=vmem),   # w_iou  (1, C)
            pl.BlockSpec(memory_space=vmem),   # interp (N, H*W)
            pl.BlockSpec(memory_space=smem),   # b_mask (1, 1)
            pl.BlockSpec(memory_space=smem),   # b_iou  (1, 1)
        ],
        out_specs=(
            pl.BlockSpec(memory_space=vmem),
            pl.BlockSpec(memory_space=vmem),
            pl.BlockSpec(memory_space=vmem),
            pl.BlockSpec(memory_space=vmem),
        ),
    )(emb_bcn, w_mask, w_iou, interp, b_mask, b_iou)


# -----------------------------------------------------------------------------
# Full forward (mirrors Model.forward return signature).
# -----------------------------------------------------------------------------
def model_forward(image_embeddings, params, upscale=4):
    """image_embeddings: (B, C, Hl, Wl) float32 (NCHW, as in PyTorch)."""
    B, C, Hl, Wl = image_embeddings.shape
    N = Hl * Wl
    H, W = Hl * upscale, Wl * upscale

    # Contiguous reshape only -- embedding stays channels-first, HW on lanes.
    emb = image_embeddings.reshape(B, C, N)

    masks_flat, mask_img_flat, lowres_flat, iou_predictions = fused_sam_head(
        emb, params["w_mask"], params["w_iou"], params["interp"],
        params["b_mask"], params["b_iou"], out_hw=H * W)

    masks = masks_flat.reshape(B, 1, H, W)
    mask_image = mask_img_flat.reshape(-1, H, W, 1)          # uint8
    low_res_masks = lowres_flat.reshape(B, 1, Hl, Wl)
    return masks, mask_image, iou_predictions, low_res_masks


# -----------------------------------------------------------------------------
# Parameter / interpolation-matrix construction (host-side, done once).
# -----------------------------------------------------------------------------
def _bilinear_matrix(out_size, in_size):
    """(out_size, in_size) half-pixel (align_corners=False) bilinear weights."""
    src = (jnp.arange(out_size, dtype=jnp.float32) + 0.5) * (in_size / out_size) - 0.5
    i0 = jnp.floor(src)
    frac = src - i0
    lo = jnp.clip(i0, 0, in_size - 1).astype(jnp.int32)
    hi = jnp.clip(i0 + 1.0, 0, in_size - 1).astype(jnp.int32)
    return (jax.nn.one_hot(lo, in_size, dtype=jnp.float32) * (1.0 - frac)[:, None]
            + jax.nn.one_hot(hi, in_size, dtype=jnp.float32) * frac[:, None])


def make_params(C, Hl, Wl, upscale):
    k1, k2 = jax.random.split(jax.random.PRNGKey(1))
    H, W = Hl * upscale, Wl * upscale
    U_h = _bilinear_matrix(H, Hl)                     # (H, Hl)
    U_w = _bilinear_matrix(W, Wl)                     # (W, Wl)
    # K[i*Wl + j, h*W + w] = U_h[h, i] * U_w[w, j]
    K = jnp.einsum("hi,wj->ijhw", U_h, U_w).reshape(Hl * Wl, H * W)
    return {
        "w_mask": jax.random.normal(k1, (C, 1), jnp.float32) / jnp.sqrt(float(C)),
        "b_mask": jnp.zeros((1, 1), jnp.float32),
        "w_iou": jax.random.normal(k2, (1, C), jnp.float32) / jnp.sqrt(float(C)),
        "b_iou": jnp.zeros((1, 1), jnp.float32),
        "interp": K.astype(jnp.float32),
    }


if __name__ == "__main__":
    B, C, Hl, Wl, upscale = 2, 32, 16, 16, 4
    H, W = Hl * upscale, Wl * upscale

    key = jax.random.PRNGKey(0)
    image_embeddings = jax.random.normal(key, (B, C, Hl, Wl), jnp.float32)
    params = make_params(C, Hl, Wl, upscale)

    masks, mask_image, iou_predictions, low_res_masks = jax.block_until_ready(
        model_forward(image_embeddings, params, upscale))

    # Shape / dtype checks (Model.forward return contract).
    assert masks.shape == (B, 1, H, W) and masks.dtype == jnp.float32
    assert mask_image.shape == (B, H, W, 1) and mask_image.dtype == jnp.uint8
    assert iou_predictions.shape == (B, 1) and iou_predictions.dtype == jnp.float32
    assert low_res_masks.shape == (B, 1, Hl, Wl)

    # Pure-JAX reference of the same synthetic head + upsample.
    emb = image_embeddings.reshape(B, C, Hl * Wl)
    low_ref = jnp.einsum("bcn,c->bn", emb, params["w_mask"][:, 0]) + params["b_mask"][0, 0]
    masks_ref = (low_ref @ params["interp"]).reshape(B, 1, H, W)
    pooled = emb.mean(axis=2)
    iou_ref = jax.nn.sigmoid(
        jnp.sum(pooled * params["w_iou"], axis=1, keepdims=True) + params["b_iou"][0, 0])

    assert bool(jnp.allclose(low_res_masks.reshape(B, -1), low_ref, atol=1e-5, rtol=1e-5))
    assert bool(jnp.allclose(masks, masks_ref, atol=1e-4, rtol=1e-4))
    assert bool(jnp.allclose(iou_predictions, iou_ref, atol=1e-5, rtol=1e-5))

    # Model.forward body check: mask_image == (masks > 0) * 255 as uint8.
    ref_img = ((masks > 0).reshape(-1, H, W, 1) * 255).astype(jnp.uint8)
    assert bool(jnp.array_equal(mask_image, ref_img))

    print("KERNEL_OK")
</pallas_src>

<mosaic_0001>
module attributes {stable_mosaic.version = 11 : i64} {
  func.func @_fused_sam_head_kernel(%arg0: memref<2x32x256xf32, #tpu.memory_space<vmem>>, %arg1: memref<32x1xf32, #tpu.memory_space<vmem>>, %arg2: memref<1x32xf32, #tpu.memory_space<vmem>>, %arg3: memref<256x4096xf32, #tpu.memory_space<vmem>>, %arg4: memref<1x1xf32, #tpu.memory_space<smem>>, %arg5: memref<1x1xf32, #tpu.memory_space<smem>>, %arg6: memref<2x4096xf32, #tpu.memory_space<vmem>>, %arg7: memref<2x4096xi8, #tpu.memory_space<vmem>>, %arg8: memref<2x256xf32, #tpu.memory_space<vmem>>, %arg9: memref<2x1xf32, #tpu.memory_space<vmem>>) attributes {dimension_semantics = [], scalar_prefetch = 0 : i64, scratch_operands = 0 : i64, tpu.core_type = #tpu.core_type<tc>} {
    %c0 = arith.constant 0 : index
    %c0_0 = arith.constant 0 : index
    %c0_1 = arith.constant 0 : index
    %0 = vector.load %arg0[%c0, %c0_0, %c0_1] : memref<2x32x256xf32, #tpu.memory_space<vmem>>, vector<2x32x256xf32>
    %c0_2 = arith.constant 0 : index
    %c0_3 = arith.constant 0 : index
    %1 = vector.load %arg1[%c0_2, %c0_3] : memref<32x1xf32, #tpu.memory_space<vmem>>, vector<32x1xf32>
    %2 = vector.shape_cast %1 : vector<32x1xf32> to vector<1x32x1xf32>
    %3 = vector.broadcast %2 : vector<1x32x1xf32> to vector<2x32x256xf32>
    %4 = arith.mulf %0, %3 : vector<2x32x256xf32>
    %cst = arith.constant dense<0.000000e+00> : vector<2x256xf32>
    %5 = vector.multi_reduction <add>, %4, %cst [1] : vector<2x32x256xf32> to vector<2x256xf32>
    %c0_4 = arith.constant 0 : index
    %c0_5 = arith.constant 0 : index
    %6 = memref.load %arg4[%c0_4, %c0_5] : memref<1x1xf32, #tpu.memory_space<smem>>
    %7 = vector.broadcast %6 : f32 to vector<2x256xf32>
    %8 = arith.addf %5, %7 : vector<2x256xf32>
    %c0_6 = arith.constant 0 : index
    %c0_7 = arith.constant 0 : index
    %9 = vector.load %arg8[%c0_6, %c0_7] : memref<2x256xf32, #tpu.memory_space<vmem>>, vector<2x256xf32>
    tpu.vector_store %arg8[%c0_6, %c0_7], %8 {strides = array<i32>} : memref<2x256xf32, #tpu.memory_space<vmem>>, vector<2x256xf32>,
    %c0_8 = arith.constant 0 : index
    %c0_9 = arith.constant 0 : index
    %10 = vector.load %arg3[%c0_8, %c0_9] : memref<256x4096xf32, #tpu.memory_space<vmem>>, vector<256x4096xf32>
    %cst_10 = arith.constant dense<0.000000e+00> : vector<2x4096xf32>
    %11 = tpu.matmul %8, %10, %cst_10 {dimension_numbers = #tpu.dot_dimension_numbers<[1], [0], [0], [1], [0, 0, 1, 1], [], []>} : vector<2x256xf32>, vector<256x4096xf32>, vector<2x4096xf32> -> vector<2x4096xf32>
    %c0_11 = arith.constant 0 : index
    %c0_12 = arith.constant 0 : index
    %12 = vector.load %arg6[%c0_11, %c0_12] : memref<2x4096xf32, #tpu.memory_space<vmem>>, vector<2x4096xf32>
    tpu.vector_store %arg6[%c0_11, %c0_12], %11 {strides = array<i32>} : memref<2x4096xf32, #tpu.memory_space<vmem>>, vector<2x4096xf32>,
    %cst_13 = arith.constant 0.000000e+00 : f32
    %13 = vector.broadcast %cst_13 : f32 to vector<2x4096xf32>
    %14 = arith.cmpf ogt, %11, %13 : vector<2x4096xf32>
    %c255_i32 = arith.constant 255 : i32
    %c0_i32 = arith.constant 0 : i32
    %15 = vector.broadcast %c255_i32 : i32 to vector<2x4096xi32>
    %16 = vector.broadcast %c0_i32 : i32 to vector<2x4096xi32>
    %17 = arith.select %14, %15, %16 : vector<2x4096xi1>, vector<2x4096xi32>
    %18 = arith.trunci %17 : vector<2x4096xi32> to vector<2x4096xi8>
    %c0_14 = arith.constant 0 : index
    %c0_15 = arith.constant 0 : index
    %19 = vector.load %arg7[%c0_14, %c0_15] : memref<2x4096xi8, #tpu.memory_space<vmem>>, vector<2x4096xi8>
    tpu.vector_store %arg7[%c0_14, %c0_15], %18 {strides = array<i32>} : memref<2x4096xi8, #tpu.memory_space<vmem>>, vector<2x4096xi8>,
    %cst_16 = arith.constant dense<0.000000e+00> : vector<2x32xf32>
    %20 = vector.multi_reduction <add>, %0, %cst_16 [2] : vector<2x32x256xf32> to vector<2x32xf32>
    %cst_17 = arith.constant 2.560000e+02 : f32
    %21 = vector.broadcast %cst_17 : f32 to vector<2x32xf32>
    %22 = arith.divf %20, %21 : vector<2x32xf32>
    %c0_18 = arith.constant 0 : index
    %c0_19 = arith.constant 0 : index
    %23 = vector.load %arg2[%c0_18, %c0_19] : memref<1x32xf32, #tpu.memory_space<vmem>>, vector<1x32xf32>
    %24 = vector.broadcast %23 : vector<1x32xf32> to vector<2x32xf32>
    %25 = arith.mulf %22, %24 : vector<2x32xf32>
    %cst_20 = arith.constant dense<0.000000e+00> : vector<2xf32>
    %26 = vector.multi_reduction <add>, %25, %cst_20 [1] : vector<2x32xf32> to vector<2xf32>
    %27 = vector.shape_cast %26 : vector<2xf32> to vector<2x1xf32>
    %c0_21 = arith.constant 0 : index
    %c0_22 = arith.constant 0 : index
    %28 = memref.load %arg5[%c0_21, %c0_22] : memref<1x1xf32, #tpu.memory_space<smem>>
    %29 = vector.broadcast %28 : f32 to vector<2x1xf32>
    %30 = arith.addf %27, %29 : vector<2x1xf32>
    %31 = arith.negf %30 : vector<2x1xf32>
    %32 = math.exp %31 : vector<2x1xf32>
    %cst_23 = arith.constant 1.000000e+00 : f32
    %33 = vector.broadcast %cst_23 : f32 to vector<2x1xf32>
    %34 = arith.addf %33, %32 : vector<2x1xf32>
    %35 = arith.divf %33, %34 : vector<2x1xf32>
    %c0_24 = arith.constant 0 : index
    %c0_25 = arith.constant 0 : index
    %36 = vector.load %arg9[%c0_24, %c0_25] : memref<2x1xf32, #tpu.memory_space<vmem>>, vector<2x1xf32>
    tpu.vector_store %arg9[%c0_24, %c0_25], %35 {strides = array<i32>} : memref<2x1xf32, #tpu.memory_space<vmem>>, vector<2x1xf32>,
    return
  }
}

</mosaic_0001>

<llo_original>
// kernel: tpu_custom_call.1
$region0: #{tpu_custom_call.1}
  #allocation0 [shape = 'u32[]', space=smem, size = 0x4, offset = 0x4, fixed_abs, tag = 'smem constant byte address 0x4 - core index']
  #allocation1 [shape = 'u32[72,128]{1,0:T(1,128)}', space=vmem, size = 0x9000, scoped, tag = 'internal scratch']
  #allocation2 [shape = 'f32[1,1]{1,0:T(1,128)S(6)}', space=smem, size = 0x200, scoped, tag = 'scoped memory for tpu_custom_call.1']
  #allocation3 [shape = 'f32[1,1]{1,0:T(1,128)S(6)}', space=smem, size = 0x200, scoped, tag = 'scoped memory for tpu_custom_call.1']
  %s0 = inlined_call_operand.hbm [shape: f32[2,32,256], index: 0, kind: input, shape index: {}]
  %s1 = inlined_call_operand.vmem [shape: f32[32,1], index: 1, kind: input, shape index: {}]
  %s2 = inlined_call_operand.hbm [shape: f32[1,32], index: 2, kind: input, shape index: {}]
  %s3 = inlined_call_operand.hbm [shape: f32[256,4096], index: 3, kind: input, shape index: {}]
  %s4 = inlined_call_operand.<no memory space> [shape: f32[1,1], index: 4, kind: input, shape index: {}]
  %s5 = inlined_call_operand.<no memory space> [shape: f32[1,1], index: 5, kind: input, shape index: {}]
  %s6 = inlined_call_operand.hbm [shape: f32[2,4096], index: 6, kind: output, shape index: {0}]
  %s7 = inlined_call_operand.hbm [shape: u8[2,4096], index: 7, kind: output, shape index: {1}]
  %s8 = inlined_call_operand.hbm [shape: f32[2,256], index: 8, kind: output, shape index: {2}]
  %s9 = inlined_call_operand.vmem [shape: f32[2,1], index: 9, kind: output, shape index: {3}]
  %10 = xla_tuple %s6, %s7, %s8, %s9
  %s11 = sld [smem:[#allocation0]]
  $region70: #{tpu_custom_call.1} parent=0
    _
  %s13 = ssub.s32 1, %s11
  %s14 = scalar_select 0, %s13, %s11
  %15 = sst [smem:[#allocation2]] %s4
  %16 = sst [smem:[#allocation3]] %s5
  $region1: #{tpu_custom_call.1} parent=0
    #allocation4 [shape = 'u8[65536]{0}', space=vmem, size = 0x10000, scoped, tag = 'input window, operand 0, single buffered']
    #allocation5 [shape = 's32[1]{0}', space=sflag, size = 0x4, scoped, tag = 'scoped memory for tpu_custom_call.1']
    #allocation6 [shape = 's32[1]{0}', space=sflag, size = 0x4, scoped, tag = 'scoped memory for tpu_custom_call.1']
    #allocation7 [shape = 'u8[512]{0}', space=vmem, size = 0x400, scoped, tag = 'input window, operand 2, single buffered']
    #allocation8 [shape = 's32[1]{0}', space=sflag, size = 0x4, scoped, tag = 'scoped memory for tpu_custom_call.1']
    #allocation9 [shape = 'u8[4194304]{0}', space=vmem, size = 0x400000, scoped, tag = 'input window, operand 3, single buffered']
    #allocation10 [shape = 'u8[32768]{0}', space=vmem, size = 0x8000, scoped, tag = 'output window, operand 0, single buffered']
    #allocation11 [shape = 'u8[16384]{0}', space=vmem, size = 0x4000, scoped, tag = 'output window, operand 1, single buffered']
    #allocation12 [shape = 's32[1]{0}', space=sflag, size = 0x4, scoped, tag = 'scoped memory for tpu_custom_call.1']
    #allocation13 [shape = 'u8[2048]{0}', space=vmem, size = 0x800, scoped, tag = 'output window, operand 2, single buffered']
    %17 = vsyncpa [#allocation5], 0
    %18 = vsyncpa [#allocation8], 0
    %19 = vsyncpa [#allocation6], 0
    %20 = vsyncpa [#allocation12], 0
    // Predicated region
    $region2: #{tpu_custom_call.1} parent=1 // pred_check
      _
    $region3: #{tpu_custom_call.1} parent=1 // pred_check_branch
      %22 = sbr.rel (0) target = $region5
    $region4: #{tpu_custom_call.1} parent=1 // pred_region
      %24 = vsyncadd [#allocation5], 0
      %s25 = sshll.u32 %s0, 4
      %s26 = int_to_ptr.hbm [resolvable:$true] %s25
      %s27 = sshll.u32 [#allocation4], 4
      %s28 = int_to_ptr.vmem [resolvable:$true] %s27
      %33 = dma.hbm_to_vmem [thread:$0]  %s26, 2048, %s28, [#allocation5], 256, 256, 16
    $region5: #{tpu_custom_call.1} parent=1 // pred_fallthru
      _
    // Predicated region
    $region6: #{tpu_custom_call.1} parent=1 // pred_check
      _
    $region7: #{tpu_custom_call.1} parent=1 // pred_check_branch
      %35 = sbr.rel (0) target = $region9
    $region8: #{tpu_custom_call.1} parent=1 // pred_region
      _
    $region9: #{tpu_custom_call.1} parent=1 // pred_fallthru
      _
    // Predicated region
    $region10: #{tpu_custom_call.1} parent=1 // pred_check
      _
    $region11: #{tpu_custom_call.1} parent=1 // pred_check_branch
      %37 = sbr.rel (0) target = $region13
    $region12: #{tpu_custom_call.1} parent=1 // pred_region
      %39 = vsyncadd [#allocation8], 0
      %s41 = sshll.u32 %s2, 4
      %s42 = int_to_ptr.hbm [resolvable:$true] %s41
      %s43 = sshll.u32 [#allocation7], 4
      %s44 = int_to_ptr.vmem [resolvable:$true] %s43
      %46 = dma.hbm_to_vmem [thread:$0]  %s42, 16, %s44, [#allocation8]
    $region13: #{tpu_custom_call.1} parent=1 // pred_fallthru
      _
    // Predicated region
    $region14: #{tpu_custom_call.1} parent=1 // pred_check
      _
    $region15: #{tpu_custom_call.1} parent=1 // pred_check_branch
      %48 = sbr.rel (0) target = $region17
    $region16: #{tpu_custom_call.1} parent=1 // pred_region
      %50 = vsyncadd [#allocation8], 0
      %s51 = sshll.u32 %s3, 4
      %s52 = int_to_ptr.hbm [resolvable:$true] %s51
      %s53 = sshll.u32 [#allocation9], 4
      %s54 = int_to_ptr.vmem [resolvable:$true] %s53
      %59 = dma.hbm_to_vmem [thread:$0]  %s52, 131072, %s54, [#allocation8], 4096, 4096, 256
    $region17: #{tpu_custom_call.1} parent=1 // pred_fallthru
      _
    // Predicated region
    $region18: #{tpu_custom_call.1} parent=1 // pred_check
      _
    $region19: #{tpu_custom_call.1} parent=1 // pred_check_branch
      %61 = sbr.rel (0) target = $region21
    $region20: #{tpu_custom_call.1} parent=1 // pred_region
      _
    $region21: #{tpu_custom_call.1} parent=1 // pred_fallthru
      _
    // Predicated region
    $region22: #{tpu_custom_call.1} parent=1 // pred_check
      _
    $region23: #{tpu_custom_call.1} parent=1 // pred_check_branch
      %63 = sbr.rel (0) target = $region25
    $region24: #{tpu_custom_call.1} parent=1 // pred_region
      _
    $region25: #{tpu_custom_call.1} parent=1 // pred_fallthru
      _
    // Predicated region
    $region26: #{tpu_custom_call.1} parent=1 // pred_check
      _
    $region27: #{tpu_custom_call.1} parent=1 // pred_check_branch
      %65 = sbr.rel (0) target = $region29
    $region28: #{tpu_custom_call.1} parent=1 // pred_region
      %67 = dma.done [#allocation5], 2048
    $region29: #{tpu_custom_call.1} parent=1 // pred_fallthru
      _
    // Predicated region
    $region30: #{tpu_custom_call.1} parent=1 // pred_check
      _
    $region31: #{tpu_custom_call.1} parent=1 // pred_check_branch
      %69 = sbr.rel (0) target = $region33
    $region32: #{tpu_custom_call.1} parent=1 // pred_region
      %71 = dma.done [#allocation8], 16
    $region33: #{tpu_custom_call.1} parent=1 // pred_fallthru
      _
    // Predicated region
    $region34: #{tpu_custom_call.1} parent=1 // pred_check
      _
    $region35: #{tpu_custom_call.1} parent=1 // pred_check_branch
      %73 = sbr.rel (0) target = $region37
    $region36: #{tpu_custom_call.1} parent=1 // pred_region
      %75 = dma.done [#allocation8], 131072
    $region37: #{tpu_custom_call.1} parent=1 // pred_fallthru
      _
    %v76 = vld [vmem:[#allocation4] sm:$0xff]
    %v77 = vld [vmem:[#allocation4 + $0x8] sm:$0xff]
    %v78 = vld [vmem:[#allocation4 + $0x10] sm:$0xff]
    %v79 = vld [vmem:[#allocation4 + $0x18] sm:$0xff]
    %v80 = vld [vmem:[#allocation4 + $0x20] sm:$0xff]
    %v81 = vld [vmem:[#allocation4 + $0x28] sm:$0xff]
    %v82 = vld [vmem:[#allocation4 + $0x30] sm:$0xff]
    %v83 = vld [vmem:[#allocation4 + $0x38] sm:$0xff]
    %v84 = vld [vmem:[#allocation4 + $0x40] sm:$0xff]
    %v85 = vld [vmem:[#allocation4 + $0x48] sm:$0xff]
    %v86 = vld [vmem:[#allocation4 + $0x50] sm:$0xff]
    %v87 = vld [vmem:[#allocation4 + $0x58] sm:$0xff]
    %v88 = vld [vmem:[#allocation4 + $0x60] sm:$0xff]
    %v89 = vld [vmem:[#allocation4 + $0x68] sm:$0xff]
    %v90 = vld [vmem:[#allocation4 + $0x70] sm:$0xff]
    %v91 = vld [vmem:[#allocation4 + $0x78] sm:$0xff]
    %v92 = vld [vmem:[%s1] sm:$0xff]
    %v93 = vld [vmem:[%s1 + $0x8] sm:$0xff]
    %v94 = vld [vmem:[%s1 + $0x10] sm:$0xff]
    %v95 = vld [vmem:[%s1 + $0x18] sm:$0xff]
    %97 = vset.pattern.permute.xlu0 0
    %98 = vperm.xlu0 %97, %v92
    %v99 = vpop.permute.xlu0 %98
    %102 = vset.pattern.permute.xlu0 0
    %103 = vperm.xlu0 %102, %v93
    %v104 = vpop.permute.xlu0 %103
    %107 = vset.pattern.permute.xlu0 0
    %108 = vperm.xlu0 %107, %v94
    %v109 = vpop.permute.xlu0 %108
    %112 = vset.pattern.permute.xlu0 0
    %113 = vperm.xlu0 %112, %v95
    %v114 = vpop.permute.xlu0 %113
    %v116 = vmul.f32 %v76, %v99
    %v117 = vmul.f32 %v77, %v99
    %v118 = vmul.f32 %v78, %v104
    %v119 = vmul.f32 %v79, %v104
    %v120 = vmul.f32 %v80, %v109
    %v121 = vmul.f32 %v81, %v109
    %v122 = vmul.f32 %v82, %v114
    %v123 = vmul.f32 %v83, %v114
    %v124 = vmul.f32 %v84, %v99
    %v125 = vmul.f32 %v85, %v99
    %v126 = vmul.f32 %v86, %v104
    %v127 = vmul.f32 %v87, %v104
    %v128 = vmul.f32 %v88, %v109
    %v129 = vmul.f32 %v89, %v109
    %v130 = vmul.f32 %v90, %v114
    %v131 = vmul.f32 %v91, %v114
    %v132 = vadd.f32 %v116, %v118
    %v133 = vadd.f32 %v132, %v120
    %v134 = vadd.f32 %v133, %v122
    %v135 = vrot.slane %v134, 4
    %v136 = vadd.f32 %v134, %v135
    %v137 = vrot.slane %v136, 2
    %v138 = vadd.f32 %v136, %v137
    %v139 = vrot.slane %v138, 1
    %v140 = vadd.f32 %v138, %v139
    %v141 = vadd.f32 %v117, %v119
    %v142 = vadd.f32 %v141, %v121
    %v143 = vadd.f32 %v142, %v123
    %v144 = vrot.slane %v143, 4
    %v145 = vadd.f32 %v143, %v144
    %v146 = vrot.slane %v145, 2
    %v147 = vadd.f32 %v145, %v146
    %v148 = vrot.slane %v147, 1
    %v149 = vadd.f32 %v147, %v148
    %v150 = vadd.f32 %v124, %v126
    %v151 = vadd.f32 %v150, %v128
    %v152 = vadd.f32 %v151, %v130
    %v153 = vrot.slane %v152, 4
    %v154 = vadd.f32 %v152, %v153
    %v155 = vrot.slane %v154, 2
    %v156 = vadd.f32 %v154, %v155
    %v157 = vrot.slane %v156, 1
    %v158 = vadd.f32 %v156, %v157
    %v159 = vadd.f32 %v125, %v127
    %v160 = vadd.f32 %v159, %v129
    %v161 = vadd.f32 %v160, %v131
    %v162 = vrot.slane %v161, 4
    %v163 = vadd.f32 %v161, %v162
    %v164 = vrot.slane %v163, 2
    %v165 = vadd.f32 %v163, %v164
    %v166 = vrot.slane %v165, 1
    %v167 = vadd.f32 %v165, %v166
    %s168 = sld [smem:[#allocation2]]
    %v169 = vstv %s168
    %v170 = vadd.f32 %v140, %v169
    %v171 = vadd.f32 %v149, %v169
    %v172 = vadd.f32 %v158, %v169
    %v173 = vadd.f32 %v167, %v169
    %v178 = vrot.slane %v171, 6
    %v179 = vrot.slane %v173, 6
    %vm180 = vcmask 1041408
    %v181 = vsel %vm180, %v170, %v178
    %v182 = vsel %vm180, %v172, %v179
    %vm183 = vcmask 1042434
    %vm184 = vcmask 1044484
    %v185 = vsel %vm184, %v181, %v181
    %vm186 = vcmask 1046534
    %v187 = vsel %vm186, %v181, %v185
    %v188 = vrot.slane %v182, 7
    %vm189 = vcmask 1041409
    %v190 = vsel %vm189, %v188, %v187
    %vm191 = vcmask 1043459
    %v192 = vsel %vm191, %v188, %v190
    %vm193 = vcmask 1045509
    %v194 = vsel %vm193, %v188, %v192
    %vm195 = vcmask 1047559
    %v196 = vsel %vm195, %v188, %v194
    %198 = vst [vmem:[#allocation13] sm:$0xf] %v196
    %v199 = vld [vmem:[#allocation9] sm:$0xff]
    %v200 = vld [vmem:[#allocation9 + $0x8] sm:$0xff]
    %v201 = vld [vmem:[#allocation9 + $0x10] sm:$0xff]
    %v202 = vld [vmem:[#allocation9 + $0x18] sm:$0xff]
    %v203 = vld [vmem:[#allocation9 + $0x20] sm:$0xff]
    %v204 = vld [vmem:[#allocation9 + $0x28] sm:$0xff]
    %v205 = vld [vmem:[#allocation9 + $0x30] sm:$0xff]
    %v206 = vld [vmem:[#allocation9 + $0x38] sm:$0xff]
    %v207 = vld [vmem:[#allocation9 + $0x40] sm:$0xff]
    %v208 = vld [vmem:[#allocation9 + $0x48] sm:$0xff]
    %v209 = vld [vmem:[#allocation9 + $0x50] sm:$0xff]
    %v210 = vld [vmem:[#allocation9 + $0x58] sm:$0xff]
    %v211 = vld [vmem:[#allocation9 + $0x60] sm:$0xff]
    %v212 = vld [vmem:[#allocation9 + $0x68] sm:$0xff]
    %v213 = vld [vmem:[#allocation9 + $0x70] sm:$0xff]
    %v214 = vld [vmem:[#allocation9 + $0x78] sm:$0xff]
    %v215 = vld [vmem:[#allocation9 + $0x80] sm:$0xff]
    %v216 = vld [vmem:[#allocation9 + $0x88] sm:$0xff]
    %v217 = vld [vmem:[#allocation9 + $0x90] sm:$0xff]
    %v218 = vld [vmem:[#allocation9 + $0x98] sm:$0xff]
    %v219 = vld [vmem:[#allocation9 + $0xa0] sm:$0xff]
    %v220 = vld [vmem:[#allocation9 + $0xa8] sm:$0xff]
    %v221 = vld [vmem:[#allocation9 + $0xb0] sm:$0xff]
    %v222 = vld [vmem:[#allocation9 + $0xb8] sm:$0xff]
    %v223 = vld [vmem:[#allocation9 + $0xc0] sm:$0xff]
    %v224 = vld [vmem:[#allocation9 + $0xc8] sm:$0xff]
    %v225 = vld [vmem:[#allocation9 + $0xd0] sm:$0xff]
    %v226 = vld [vmem:[#allocation9 + $0xd8] sm:$0xff]
    %v227 = vld [vmem:[#allocation9 + $0xe0] sm:$0xff]
    %v228 = vld [vmem:[#allocation9 + $0xe8] sm:$0xff]
    %v229 = vld [vmem:[#allocation9 + $0xf0] sm:$0xff]
    %v230 = vld [vmem:[#allocation9 + $0xf8] sm:$0xff]
    %v231 = vld [vmem:[#allocation9 + $0x100] sm:$0xff]
    %v232 = vld [vmem:[#allocation9 + $0x108] sm:$0xff]
    %v233 = vld [vmem:[#allocation9 + $0x110] sm:$0xff]
    %v234 = vld [vmem:[#allocation9 + $0x118] sm:$0xff]
    %v235 = vld [vmem:[#allocation9 + $0x120] sm:$0xff]
    %v236 = vld [vmem:[#allocation9 + $0x128] sm:$0xff]
    %v237 = vld [vmem:[#allocation9 + $0x130] sm:$0xff]
    %v238 = vld [vmem:[#allocation9 + $0x138] sm:$0xff]
    %v239 = vld [vmem:[#allocation9 + $0x140] sm:$0xff]
    %v240 = vld [vmem:[#allocation9 + $0x148] sm:$0xff]
    %v241 = vld [vmem:[#allocation9 + $0x150] sm:$0xff]
    %v242 = vld [vmem:[#allocation9 + $0x158] sm:$0xff]
    %v243 = vld [vmem:[#allocation9 + $0x160] sm:$0xff]
    %v244 = vld [vmem:[#allocation9 + $0x168] sm:$0xff]
    %v245 = vld [vmem:[#allocation9 + $0x170] sm:$0xff]
    %v246 = vld [vmem:[#allocation9 + $0x178] sm:$0xff]
    %v247 = vld [vmem:[#allocation9 + $0x180] sm:$0xff]
    %v248 = vld [vmem:[#allocation9 + $0x188] sm:$0xff]
    %v249 = vld [vmem:[#allocation9 + $0x190] sm:$0xff]
    %v250 = vld [vmem:[#allocation9 + $0x198] sm:$0xff]
    %v251 = vld [vmem:[#allocation9 + $0x1a0] sm:$0xff]
    %v252 = vld [vmem:[#allocation9 + $0x1a8] sm:$0xff]
    %v253 = vld [vmem:[#allocation9 + $0x1b0] sm:$0xff]
    %v254 = vld [vmem:[#allocation9 + $0x1b8] sm:$0xff]
    %v255 = vld [vmem:[#allocation9 + $0x1c0] sm:$0xff]
    %v256 = vld [vmem:[#allocation9 + $0x1c8] sm:$0xff]
    %v257 = vld [vmem:[#allocation9 + $0x1d0] sm:$0xff]
    %v258 = vld [vmem:[#allocation9 + $0x1d8] sm:$0xff]
    %v259 = vld [vmem:[#allocation9 + $0x1e0] sm:$0xff]
    %v260 = vld [vmem:[#allocation9 + $0x1e8] sm:$0xff]
    %v261 = vld [vmem:[#allocation9 + $0x1f0] sm:$0xff]
    %v262 = vld [vmem:[#allocation9 + $0x1f8] sm:$0xff]
    %v263 = vld [vmem:[#allocation9 + $0x200] sm:$0xff]
    %v264 = vld [vmem:[#allocation9 + $0x208] sm:$0xff]
    %v265 = vld [vmem:[#allocation9 + $0x210] sm:$0xff]
    %v266 = vld [vmem:[#allocation9 + $0x218] sm:$0xff]
    %v267 = vld [vmem:[#allocation9 + $0x220] sm:$0xff]
    %v268 = vld [vmem:[#allocation9 + $0x228] sm:$0xff]
    %v269 = vld [vmem:[#allocation9 + $0x230] sm:$0xff]
    %v270 = vld [vmem:[#allocation9 + $0x238] sm:$0xff]
    %v271 = vld [vmem:[#allocation9 + $0x240] sm:$0xff]
    %v272 = vld [vmem:[#allocation9 + $0x248] sm:$0xff]
    %v273 = vld [vmem:[#allocation9 + $0x250] sm:$0xff]
    %v274 = vld [vmem:[#allocation9 + $0x258] sm:$0xff]
    %v275 = vld [vmem:[#allocation9 + $0x260] sm:$0xff]
    %v276 = vld [vmem:[#allocation9 + $0x268] sm:$0xff]
    %v277 = vld [vmem:[#allocation9 + $0x270] sm:$0xff]
    %v278 = vld [vmem:[#allocation9 + $0x278] sm:$0xff]
    %v279 = vld [vmem:[#allocation9 + $0x280] sm:$0xff]
    %v280 = vld [vmem:[#allocation9 + $0x288] sm:$0xff]
    %v281 = vld [vmem:[#allocation9 + $0x290] sm:$0xff]
    %v282 = vld [vmem:[#allocation9 + $0x298] sm:$0xff]
    %v283 = vld [vmem:[#allocation9 + $0x2a0] sm:$0xff]
    %v284 = vld [vmem:[#allocation9 + $0x2a8] sm:$0xff]
    %v285 = vld [vmem:[#allocation9 + $0x2b0] sm:$0xff]
    %v286 = vld [vmem:[#allocation9 + $0x2b8] sm:$0xff]
    %v287 = vld [vmem:[#allocation9 + $0x2c0] sm:$0xff]
    %v288 = vld [vmem:[#allocation9 + $0x2c8] sm:$0xff]
    %v289 = vld [vmem:[#allocation9 + $0x2d0] sm:$0xff]
    %v290 = vld [vmem:[#allocation9 + $0x2d8] sm:$0xff]
    %v291 = vld [vmem:[#allocation9 + $0x2e0] sm:$0xff]
    %v292 = vld [vmem:[#allocation9 + $0x2e8] sm:$0xff]
    %v293 = vld [vmem:[#allocation9 + $0x2f0] sm:$0xff]
    %v294 = vld [vmem:[#allocation9 + $0x2f8] sm:$0xff]
    %v295 = vld [vmem:[#allocation9 + $0x300] sm:$0xff]
    %v296 = vld [vmem:[#allocation9 + $0x308] sm:$0xff]
    %v297 = vld [vmem:[#allocation9 + $0x310] sm:$0xff]
    %v298 = vld [vmem:[#allocation9 + $0x318] sm:$0xff]
    %v299 = vld [vmem:[#allocation9 + $0x320] sm:$0xff]
    %v300 = vld [vmem:[#allocation9 + $0x328] sm:$0xff]
    %v301 = vld [vmem:[#allocation9 + $0x330] sm:$0xff]
    %v302 = vld [vmem:[#allocation9 + $0x338] sm:$0xff]
    %v303 = vld [vmem:[#allocation9 + $0x340] sm:$0xff]
    %v304 = vld [vmem:[#allocation9 + $0x348] sm:$0xff]
    %v305 = vld [vmem:[#allocation9 + $0x350] sm:$0xff]
    %v306 = vld [vmem:[#allocation9 + $0x358] sm:$0xff]
    %v307 = vld [vmem:[#allocation9 + $0x360] sm:$0xff]
    %v308 = vld [vmem:[#allocation9 + $0x368] sm:$0xff]
    %v309 = vld [vmem:[#allocation9 + $0x370] sm:$0xff]
    %v310 = vld [vmem:[#allocation9 + $0x378] sm:$0xff]
    %v311 = vld [vmem:[#allocation9 + $0x380] sm:$0xff]
    %v312 = vld [vmem:[#allocation9 + $0x388] sm:$0xff]
    %v313 = vld [vmem:[#allocation9 + $0x390] sm:$0xff]
    %v314 = vld [vmem:[#allocation9 + $0x398] sm:$0xff]
    %v315 = vld [vmem:[#allocation9 + $0x3a0] sm:$0xff]
    %v316 = vld [vmem:[#allocation9 + $0x3a8] sm:$0xff]
    %v317 = vld [vmem:[#allocation9 + $0x3b0] sm:$0xff]
    %v318 = vld [vmem:[#allocation9 + $0x3b8] sm:$0xff]
    %v319 = vld [vmem:[#allocation9 + $0x3c0] sm:$0xff]
    %v320 = vld [vmem:[#allocation9 + $0x3c8] sm:$0xff]
    %v321 = vld [vmem:[#allocation9 + $0x3d0] sm:$0xff]
    %v322 = vld [vmem:[#allocation9 + $0x3d8] sm:$0xff]
    %v323 = vld [vmem:[#allocation9 + $0x3e0] sm:$0xff]
    %v324 = vld [vmem:[#allocation9 + $0x3e8] sm:$0xff]
    %v325 = vld [vmem:[#allocation9 + $0x3f0] sm:$0xff]
    %v326 = vld [vmem:[#allocation9 + $0x3f8] sm:$0xff]
    %v327 = vld [vmem:[#allocation9 + $0x400] sm:$0xff]
    %v328 = vld [vmem:[#allocation9 + $0x408] sm:$0xff]
    %v329 = vld [vmem:[#allocation9 + $0x410] sm:$0xff]
    %v330 = vld [vmem:[#allocation9 + $0x418] sm:$0xff]
    %v331 = vld [vmem:[#allocation9 + $0x420] sm:$0xff]
    %v332 = vld [vmem:[#allocation9 + $0x428] sm:$0xff]
    %v333 = vld [vmem:[#allocation9 + $0x430] sm:$0xff]
    %v334 = vld [vmem:[#allocation9 + $0x438] sm:$0xff]
    %v335 = vld [vmem:[#allocation9 + $0x440] sm:$0xff]
    %v336 = vld [vmem:[#allocation9 + $0x448] sm:$0xff]
    %v337 = vld [vmem:[#allocation9 + $0x450] sm:$0xff]
    %v338 = vld [vmem:[#allocation9 + $0x458] sm:$0xff]
    %v339 = vld [vmem:[#allocation9 + $0x460] sm:$0xff]
    %v340 = vld [vmem:[#allocation9 + $0x468] sm:$0xff]
    %v341 = vld [vmem:[#allocation9 + $0x470] sm:$0xff]
    %v342 = vld [vmem:[#allocation9 + $0x478] sm:$0xff]
    %v343 = vld [vmem:[#allocation9 + $0x480] sm:$0xff]
    %v344 = vld [vmem:[#allocation9 + $0x488] sm:$0xff]
    %v345 = vld [vmem:[#allocation9 + $0x490] sm:$0xff]
    %v346 = vld [vmem:[#allocation9 + $0x498] sm:$0xff]
    %v347 = vld [vmem:[#allocation9 + $0x4a0] sm:$0xff]
    %v348 = vld [vmem:[#allocation9 + $0x4a8] sm:$0xff]
    %v349 = vld [vmem:[#allocation9 + $0x4b0] sm:$0xff]
    %v350 = vld [vmem:[#allocation9 + $0x4b8] sm:$0xff]
    %v351 = vld [vmem:[#allocation9 + $0x4c0] sm:$0xff]
    %v352 = vld [vmem:[#allocation9 + $0x4c8] sm:$0xff]
    %v353 = vld [vmem:[#allocation9 + $0x4d0] sm:$0xff]
    %v354 = vld [vmem:[#allocation9 + $0x4d8] sm:$0xff]
    %v355 = vld [vmem:[#allocation9 + $0x4e0] sm:$0xff]
    %v356 = vld [vmem:[#allocation9 + $0x4e8] sm:$0xff]
    %v357 = vld [vmem:[#allocation9 + $0x4f0] sm:$0xff]
    %v358 = vld [vmem:[#allocation9 + $0x4f8] sm:$0xff]
    %v359 = vld [vmem:[#allocation9 + $0x500] sm:$0xff]
    %v360 = vld [vmem:[#allocation9 + $0x508] sm:$0xff]
    %v361 = vld [vmem:[#allocation9 + $0x510] sm:$0xff]
    %v362 = vld [vmem:[#allocation9 + $0x518] sm:$0xff]
    %v363 = vld [vmem:[#allocation9 + $0x520] sm:$0xff]
    %v364 = vld [vmem:[#allocation9 + $0x528] sm:$0xff]
    %v365 = vld [vmem:[#allocation9 + $0x530] sm:$0xff]
    %v366 = vld [vmem:[#allocation9 + $0x538] sm:$0xff]
    %v367 = vld [vmem:[#allocation9 + $0x540] sm:$0xff]
    %v368 = vld [vmem:[#allocation9 + $0x548] sm:$0xff]
    %v369 = vld [vmem:[#allocation9 + $0x550] sm:$0xff]
    %v370 = vld [vmem:[#allocation9 + $0x558] sm:$0xff]
    %v371 = vld [vmem:[#allocation9 + $0x560] sm:$0xff]
    %v372 = vld [vmem:[#allocation9 + $0x568] sm:$0xff]
    %v373 = vld [vmem:[#allocation9 + $0x570] sm:$0xff]
    %v374 = vld [vmem:[#allocation9 + $0x578] sm:$0xff]
    %v375 = vld [vmem:[#allocation9 + $0x580] sm:$0xff]
    %v376 = vld [vmem:[#allocation9 + $0x588] sm:$0xff]
    %v377 = vld [vmem:[#allocation9 + $0x590] sm:$0xff]
    %v378 = vld [vmem:[#allocation9 + $0x598] sm:$0xff]
    %v379 = vld [vmem:[#allocation9 + $0x5a0] sm:$0xff]
    %v380 = vld [vmem:[#allocation9 + $0x5a8] sm:$0xff]
    %v381 = vld [vmem:[#allocation9 + $0x5b0] sm:$0xff]
    %v382 = vld [vmem:[#allocation9 + $0x5b8] sm:$0xff]
    %v383 = vld [vmem:[#allocation9 + $0x5c0] sm:$0xff]
    %v384 = vld [vmem:[#allocation9 + $0x5c8] sm:$0xff]
    %v385 = vld [vmem:[#allocation9 + $0x5d0] sm:$0xff]
    %v386 = vld [vmem:[#allocation9 + $0x5d8] sm:$0xff]
    %v387 = vld [vmem:[#allocation9 + $0x5e0] sm:$0xff]
    %v388 = vld [vmem:[#allocation9 + $0x5e8] sm:$0xff]
    %v389 = vld [vmem:[#allocation9 + $0x5f0] sm:$0xff]
    %v390 = vld [vmem:[#allocation9 + $0x5f8] sm:$0xff]
    %v391 = vld [vmem:[#allocation9 + $0x600] sm:$0xff]
    %v392 = vld [vmem:[#allocation9 + $0x608] sm:$0xff]
    %v393 = vld [vmem:[#allocation9 + $0x610] sm:$0xff]
    %v394 = vld [vmem:[#allocation9 + $0x618] sm:$0xff]
    %v395 = vld [vmem:[#allocation9 + $0x620] sm:$0xff]
    %v396 = vld [vmem:[#allocation9 + $0x628] sm:$0xff]
    %v397 = vld [vmem:[#allocation9 + $0x630] sm:$0xff]
    %v398 = vld [vmem:[#allocation9 + $0x638] sm:$0xff]
    %v399 = vld [vmem:[#allocation9 + $0x640] sm:$0xff]
    %v400 = vld [vmem:[#allocation9 + $0x648] sm:$0xff]
    %v401 = vld [vmem:[#allocation9 + $0x650] sm:$0xff]
    %v402 = vld [vmem:[#allocation9 + $0x658] sm:$0xff]
    %v403 = vld [vmem:[#allocation9 + $0x660] sm:$0xff]
    %v404 = vld [vmem:[#allocation9 + $0x668] sm:$0xff]
    %v405 = vld [vmem:[#allocation9 + $0x670] sm:$0xff]
    %v406 = vld [vmem:[#allocation9 + $0x678] sm:$0xff]
    %v407 = vld [vmem:[#allocation9 + $0x680] sm:$0xff]
    %v408 = vld [vmem:[#allocation9 + $0x688] sm:$0xff]
    %v409 = vld [vmem:[#allocation9 + $0x690] sm:$0xff]
    %v410 = vld [vmem:[#allocation9 + $0x698] sm:$0xff]
    %v411 = vld [vmem:[#allocation9 + $0x6a0] sm:$0xff]
    %v412 = vld [vmem:[#allocation9 + $0x6a8] sm:$0xff]
    %v413 = vld [vmem:[#allocation9 + $0x6b0] sm:$0xff]
    %v414 = vld [vmem:[#allocation9 + $0x6b8] sm:$0xff]
    %v415 = vld [vmem:[#allocation9 + $0x6c0] sm:$0xff]
    %v416 = vld [vmem:[#allocation9 + $0x6c8] sm:$0xff]
    %v417 = vld [vmem:[#allocation9 + $0x6d0] sm:$0xff]
    %v418 = vld [vmem:[#allocation9 + $0x6d8] sm:$0xff]
    %v419 = vld [vmem:[#allocation9 + $0x6e0] sm:$0xff]
    %v420 = vld [vmem:[#allocation9 + $0x6e8] sm:$0xff]
    %v421 = vld [vmem:[#allocation9 + $0x6f0] sm:$0xff]
    %v422 = vld [vmem:[#allocation9 + $0x6f8] sm:$0xff]
    %v423 = vld [vmem:[#allocation9 + $0x700] sm:$0xff]
    %v424 = vld [vmem:[#allocation9 + $0x708] sm:$0xff]
    %v425 = vld [vmem:[#allocation9 + $0x710] sm:$0xff]
    %v426 = vld [vmem:[#allocation9 + $0x718] sm:$0xff]
    %v427 = vld [vmem:[#allocation9 + $0x720] sm:$0xff]
    %v428 = vld [vmem:[#allocation9 + $0x728] sm:$0xff]
    %v429 = vld [vmem:[#allocation9 + $0x730] sm:$0xff]
    %v430 = vld [vmem:[#allocation9 + $0x738] sm:$0xff]
    %v431 = vld [vmem:[#allocation9 + $0x740] sm:$0xff]
    %v432 = vld [vmem:[#allocation9 + $0x748] sm:$0xff]
    %v433 = vld [vmem:[#allocation9 + $0x750] sm:$0xff]
    %v434 = vld [vmem:[#allocation9 + $0x758] sm:$0xff]
    %v435 = vld [vmem:[#allocation9 + $0x760] sm:$0xff]
    %v436 = vld [vmem:[#allocation9 + $0x768] sm:$0xff]
    %v437 = vld [vmem:[#allocation9 + $0x770] sm:$0xff]
    %v438 = vld [vmem:[#allocation9 + $0x778] sm:$0xff]
    %v439 = vld [vmem:[#allocation9 + $0x780] sm:$0xff]
    %v440 = vld [vmem:[#allocation9 + $0x788] sm:$0xff]
    %v441 = vld [vmem:[#allocation9 + $0x790] sm:$0xff]
    %v442 = vld [vmem:[#allocation9 + $0x798] sm:$0xff]
    %v443 = vld [vmem:[#allocation9 + $0x7a0] sm:$0xff]
    %v444 = vld [vmem:[#allocation9 + $0x7a8] sm:$0xff]
    %v445 = vld [vmem:[#allocation9 + $0x7b0] sm:$0xff]
    %v446 = vld [vmem:[#allocation9 + $0x7b8] sm:$0xff]
    %v447 = vld [vmem:[#allocation9 + $0x7c0] sm:$0xff]
    %v448 = vld [vmem:[#allocation9 + $0x7c8] sm:$0xff]
    %v449 = vld [vmem:[#allocation9 + $0x7d0] sm:$0xff]
    %v450 = vld [vmem:[#allocation9 + $0x7d8] sm:$0xff]
    %v451 = vld [vmem:[#allocation9 + $0x7e0] sm:$0xff]
    %v452 = vld [vmem:[#allocation9 + $0x7e8] sm:$0xff]
    %v453 = vld [vmem:[#allocation9 + $0x7f0] sm:$0xff]
    %v454 = vld [vmem:[#allocation9 + $0x7f8] sm:$0xff]
    %v455 = vld [vmem:[#allocation9 + $0x800] sm:$0xff]
    %v456 = vld [vmem:[#allocation9 + $0x808] sm:$0xff]
    %v457 = vld [vmem:[#allocation9 + $0x810] sm:$0xff]
    %v458 = vld [vmem:[#allocation9 + $0x818] sm:$0xff]
    %v459 = vld [vmem:[#allocation9 + $0x820] sm:$0xff]
    %v460 = vld [vmem:[#allocation9 + $0x828] sm:$0xff]
    %v461 = vld [vmem:[#allocation9 + $0x830] sm:$0xff]
    %v462 = vld [vmem:[#allocation9 + $0x838] sm:$0xff]
    %v463 = vld [vmem:[#allocation9 + $0x840] sm:$0xff]
    %v464 = vld [vmem:[#allocation9 + $0x848] sm:$0xff]
    %v465 = vld [vmem:[#allocation9 + $0x850] sm:$0xff]
    %v466 = vld [vmem:[#allocation9 + $0x858] sm:$0xff]
    %v467 = vld [vmem:[#allocation9 + $0x860] sm:$0xff]
    %v468 = vld [vmem:[#allocation9 + $0x868] sm:$0xff]
    %v469 = vld [vmem:[#allocation9 + $0x870] sm:$0xff]
    %v470 = vld [vmem:[#allocation9 + $0x878] sm:$0xff]
    %v471 = vld [vmem:[#allocation9 + $0x880] sm:$0xff]
    %v472 = vld [vmem:[#allocation9 + $0x888] sm:$0xff]
    %v473 = vld [vmem:[#allocation9 + $0x890] sm:$0xff]
    %v474 = vld [vmem:[#allocation9 + $0x898] sm:$0xff]
    %v475 = vld [vmem:[#allocation9 + $0x8a0] sm:$0xff]
    %v476 = vld [vmem:[#allocation9 + $0x8a8] sm:$0xff]
    %v477 = vld [vmem:[#allocation9 + $0x8b0] sm:$0xff]
    %v478 = vld [vmem:[#allocation9 + $0x8b8] sm:$0xff]
    %v479 = vld [vmem:[#allocation9 + $0x8c0] sm:$0xff]
    %v480 = vld [vmem:[#allocation9 + $0x8c8] sm:$0xff]
    %v481 = vld [vmem:[#allocation9 + $0x8d0] sm:$0xff]
    %v482 = vld [vmem:[#allocation9 + $0x8d8] sm:$0xff]
    %v483 = vld [vmem:[#allocation9 + $0x8e0] sm:$0xff]
    %v484 = vld [vmem:[#allocation9 + $0x8e8] sm:$0xff]
    %v485 = vld [vmem:[#allocation9 + $0x8f0] sm:$0xff]
    %v486 = vld [vmem:[#allocation9 + $0x8f8] sm:$0xff]
    %v487 = vld [vmem:[#allocation9 + $0x900] sm:$0xff]
    %v488 = vld [vmem:[#allocation9 + $0x908] sm:$0xff]
    %v489 = vld [vmem:[#allocation9 + $0x910] sm:$0xff]
    %v490 = vld [vmem:[#allocation9 + $0x918] sm:$0xff]
    %v491 = vld [vmem:[#allocation9 + $0x920] sm:$0xff]
    %v492 = vld [vmem:[#allocation9 + $0x928] sm:$0xff]
    %v493 = vld [vmem:[#allocation9 + $0x930] sm:$0xff]
    %v494 = vld [vmem:[#allocation9 + $0x938] sm:$0xff]
    %v495 = vld [vmem:[#allocation9 + $0x940] sm:$0xff]
    %v496 = vld [vmem:[#allocation9 + $0x948] sm:$0xff]
    %v497 = vld [vmem:[#allocation9 + $0x950] sm:$0xff]
    %v498 = vld [vmem:[#allocation9 + $0x958] sm:$0xff]
    %v499 = vld [vmem:[#allocation9 + $0x960] sm:$0xff]
    %v500 = vld [vmem:[#allocation9 + $0x968] sm:$0xff]
    %v501 = vld [vmem:[#allocation9 + $0x970] sm:$0xff]
    %v502 = vld [vmem:[#allocation9 + $0x978] sm:$0xff]
    %v503 = vld [vmem:[#allocation9 + $0x980] sm:$0xff]
    %v504 = vld [vmem:[#allocation9 + $0x988] sm:$0xff]
    %v505 = vld [vmem:[#allocation9 + $0x990] sm:$0xff]
    %v506 = vld [vmem:[#allocation9 + $0x998] sm:$0xff]
    %v507 = vld [vmem:[#allocation9 + $0x9a0] sm:$0xff]
    %v508 = vld [vmem:[#allocation9 + $0x9a8] sm:$0xff]
    %v509 = vld [vmem:[#allocation9 + $0x9b0] sm:$0xff]
    %v510 = vld [vmem:[#allocation9 + $0x9b8] sm:$0xff]
    %v511 = vld [vmem:[#allocation9 + $0x9c0] sm:$0xff]
    %v512 = vld [vmem:[#allocation9 + $0x9c8] sm:$0xff]
    %v513 = vld [vmem:[#allocation9 + $0x9d0] sm:$0xff]
    %v514 = vld [vmem:[#allocation9 + $0x9d8] sm:$0xff]
    %v515 = vld [vmem:[#allocation9 + $0x9e0] sm:$0xff]
    %v516 = vld [vmem:[#allocation9 + $0x9e8] sm:$0xff]
    %v517 = vld [vmem:[#allocation9 + $0x9f0] sm:$0xff]
    %v518 = vld [vmem:[#allocation9 + $0x9f8] sm:$0xff]
    %v519 = vld [vmem:[#allocation9 + $0xa00] sm:$0xff]
    %v520 = vld [vmem:[#allocation9 + $0xa08] sm:$0xff]
    %v521 = vld [vmem:[#allocation9 + $0xa10] sm:$0xff]
    %v522 = vld [vmem:[#allocation9 + $0xa18] sm:$0xff]
    %v523 = vld [vmem:[#allocation9 + $0xa20] sm:$0xff]
    %v524 = vld [vmem:[#allocation9 + $0xa28] sm:$0xff]
    %v525 = vld [vmem:[#allocation9 + $0xa30] sm:$0xff]
    %v526 = vld [vmem:[#allocation9 + $0xa38] sm:$0xff]
    %v527 = vld [vmem:[#allocation9 + $0xa40] sm:$0xff]
    %v528 = vld [vmem:[#allocation9 + $0xa48] sm:$0xff]
    %v529 = vld [vmem:[#allocation9 + $0xa50] sm:$0xff]
    %v530 = vld [vmem:[#allocation9 + $0xa58] sm:$0xff]
    %v531 = vld [vmem:[#allocation9 + $0xa60] sm:$0xff]
    %v532 = vld [vmem:[#allocation9 + $0xa68] sm:$0xff]
    %v533 = vld [vmem:[#allocation9 + $0xa70] sm:$0xff]
    %v534 = vld [vmem:[#allocation9 + $0xa78] sm:$0xff]
    %v535 = vld [vmem:[#allocation9 + $0xa80] sm:$0xff]
    %v536 = vld [vmem:[#allocation9 + $0xa88] sm:$0xff]
    %v537 = vld [vmem:[#allocation9 + $0xa90] sm:$0xff]
    %v538 = vld [vmem:[#allocation9 + $0xa98] sm:$0xff]
    %v539 = vld [vmem:[#allocation9 + $0xaa0] sm:$0xff]
    %v540 = vld [vmem:[#allocation9 + $0xaa8] sm:$0xff]
    %v541 = vld [vmem:[#allocation9 + $0xab0] sm:$0xff]
    %v542 = vld [vmem:[#allocation9 + $0xab8] sm:$0xff]
    %v543 = vld [vmem:[#allocation9 + $0xac0] sm:$0xff]
    %v544 = vld [vmem:[#allocation9 + $0xac8] sm:$0xff]
    %v545 = vld [vmem:[#allocation9 + $0xad0] sm:$0xff]
    %v546 = vld [vmem:[#allocation9 + $0xad8] sm:$0xff]
    %v547 = vld [vmem:[#allocation9 + $0xae0] sm:$0xff]
    %v548 = vld [vmem:[#allocation9 + $0xae8] sm:$0xff]
    %v549 = vld [vmem:[#allocation9 + $0xaf0] sm:$0xff]
    %v550 = vld [vmem:[#allocation9 + $0xaf8] sm:$0xff]
    %v551 = vld [vmem:[#allocation9 + $0xb00] sm:$0xff]
    %v552 = vld [vmem:[#allocation9 + $0xb08] sm:$0xff]
    %v553 = vld [vmem:[#allocation9 + $0xb10] sm:$0xff]
    %v554 = vld [vmem:[#allocation9 + $0xb18] sm:$0xff]
    %v555 = vld [vmem:[#allocation9 + $0xb20] sm:$0xff]
    %v556 = vld [vmem:[#allocation9 + $0xb28] sm:$0xff]
    %v557 = vld [vmem:[#allocation9 + $0xb30] sm:$0xff]
    %v558 = vld [vmem:[#allocation9 + $0xb38] sm:$0xff]
    %v559 = vld [vmem:[#allocation9 + $0xb40] sm:$0xff]
    %v560 = vld [vmem:[#allocation9 + $0xb48] sm:$0xff]
    %v561 = vld [vmem:[#allocation9 + $0xb50] sm:$0xff]
    %v562 = vld [vmem:[#allocation9 + $0xb58] sm:$0xff]
    %v563 = vld [vmem:[#allocation9 + $0xb60] sm:$0xff]
    %v564 = vld [vmem:[#allocation9 + $0xb68] sm:$0xff]
    %v565 = vld [vmem:[#allocation9 + $0xb70] sm:$0xff]
    %v566 = vld [vmem:[#allocation9 + $0xb78] sm:$0xff]
    %v567 = vld [vmem:[#allocation9 + $0xb80] sm:$0xff]
    %v568 = vld [vmem:[#allocation9 + $0xb88] sm:$0xff]
    %v569 = vld [vmem:[#allocation9 + $0xb90] sm:$0xff]
    %v570 = vld [vmem:[#allocation9 + $0xb98] sm:$0xff]
    %v571 = vld [vmem:[#allocation9 + $0xba0] sm:$0xff]
    %v572 = vld [vmem:[#allocation9 + $0xba8] sm:$0xff]
    %v573 = vld [vmem:[#allocation9 + $0xbb0] sm:$0xff]
    %v574 = vld [vmem:[#allocation9 + $0xbb8] sm:$0xff]
    %v575 = vld [vmem:[#allocation9 + $0xbc0] sm:$0xff]
    %v576 = vld [vmem:[#allocation9 + $0xbc8] sm:$0xff]
    %v577 = vld [vmem:[#allocation9 + $0xbd0] sm:$0xff]
    %v578 = vld [vmem:[#allocation9 + $0xbd8] sm:$0xff]
    %v579 = vld [vmem:[#allocation9 + $0xbe0] sm:$0xff]
    %v580 = vld [vmem:[#allocation9 + $0xbe8] sm:$0xff]
    %v581 = vld [vmem:[#allocation9 + $0xbf0] sm:$0xff]
    %v582 = vld [vmem:[#allocation9 + $0xbf8] sm:$0xff]
    %v583 = vld [vmem:[#allocation9 + $0xc00] sm:$0xff]
    %v584 = vld [vmem:[#allocation9 + $0xc08] sm:$0xff]
    %v585 = vld [vmem:[#allocation9 + $0xc10] sm:$0xff]
    %v586 = vld [vmem:[#allocation9 + $0xc18] sm:$0xff]
    %v587 = vld [vmem:[#allocation9 + $0xc20] sm:$0xff]
    %v588 = vld [vmem:[#allocation9 + $0xc28] sm:$0xff]
    %v589 = vld [vmem:[#allocation9 + $0xc30] sm:$0xff]
    %v590 = vld [vmem:[#allocation9 + $0xc38] sm:$0xff]
    %v591 = vld [vmem:[#allocation9 + $0xc40] sm:$0xff]
    %v592 = vld [vmem:[#allocation9 + $0xc48] sm:$0xff]
    %v593 = vld [vmem:[#allocation9 + $0xc50] sm:$0xff]
    %v594 = vld [vmem:[#allocation9 + $0xc58] sm:$0xff]
    %v595 = vld [vmem:[#allocation9 + $0xc60] sm:$0xff]
    %v596 = vld [vmem:[#allocation9 + $0xc68] sm:$0xff]
    %v597 = vld [vmem:[#allocation9 + $0xc70] sm:$0xff]
    %v598 = vld [vmem:[#allocation9 + $0xc78] sm:$0xff]
    %v599 = vld [vmem:[#allocation9 + $0xc80] sm:$0xff]
    %v600 = vld [vmem:[#allocation9 + $0xc88] sm:$0xff]
    %v601 = vld [vmem:[#allocation9 + $0xc90] sm:$0xff]
    %v602 = vld [vmem:[#allocation9 + $0xc98] sm:$0xff]
    %v603 = vld [vmem:[#allocation9 + $0xca0] sm:$0xff]
    %v604 = vld [vmem:[#allocation9 + $0xca8] sm:$0xff]
    %v605 = vld [vmem:[#allocation9 + $0xcb0] sm:$0xff]
    %v606 = vld [vmem:[#allocation9 + $0xcb8] sm:$0xff]
    %v607 = vld [vmem:[#allocation9 + $0xcc0] sm:$0xff]
    %v608 = vld [vmem:[#allocation9 + $0xcc8] sm:$0xff]
    %v609 = vld [vmem:[#allocation9 + $0xcd0] sm:$0xff]
    %v610 = vld [vmem:[#allocation9 + $0xcd8] sm:$0xff]
    %v611 = vld [vmem:[#allocation9 + $0xce0] sm:$0xff]
    %v612 = vld [vmem:[#allocation9 + $0xce8] sm:$0xff]
    %v613 = vld [vmem:[#allocation9 + $0xcf0] sm:$0xff]
    %v614 = vld [vmem:[#allocation9 + $0xcf8] sm:$0xff]
    %v615 = vld [vmem:[#allocation9 + $0xd00] sm:$0xff]
    %v616 = vld [vmem:[#allocation9 + $0xd08] sm:$0xff]
    %v617 = vld [vmem:[#allocation9 + $0xd10] sm:$0xff]
    %v618 = vld [vmem:[#allocation9 + $0xd18] sm:$0xff]
    %v619 = vld [vmem:[#allocation9 + $0xd20] sm:$0xff]
    %v620 = vld [vmem:[#allocation9 + $0xd28] sm:$0xff]
    %v621 = vld [vmem:[#allocation9 + $0xd30] sm:$0xff]
    %v622 = vld [vmem:[#allocation9 + $0xd38] sm:$0xff]
    %v623 = vld [vmem:[#allocation9 + $0xd40] sm:$0xff]
    %v624 = vld [vmem:[#allocation9 + $0xd48] sm:$0xff]
    %v625 = vld [vmem:[#allocation9 + $0xd50] sm:$0xff]
    %v626 = vld [vmem:[#allocation9 + $0xd58] sm:$0xff]
    %v627 = vld [vmem:[#allocation9 + $0xd60] sm:$0xff]
    %v628 = vld [vmem:[#allocation9 + $0xd68] sm:$0xff]
    %v629 = vld [vmem:[#allocation9 + $0xd70] sm:$0xff]
    %v630 = vld [vmem:[#allocation9 + $0xd78] sm:$0xff]
    %v631 = vld [vmem:[#allocation9 + $0xd80] sm:$0xff]
    %v632 = vld [vmem:[#allocation9 + $0xd88] sm:$0xff]
    %v633 = vld [vmem:[#allocation9 + $0xd90] sm:$0xff]
    %v634 = vld [vmem:[#allocation9 + $0xd98] sm:$0xff]
    %v635 = vld [vmem:[#allocation9 + $0xda0] sm:$0xff]
    %v636 = vld [vmem:[#allocation9 + $0xda8] sm:$0xff]
    %v637 = vld [vmem:[#allocation9 + $0xdb0] sm:$0xff]
    %v638 = vld [vmem:[#allocation9 + $0xdb8] sm:$0xff]
    %v639 = vld [vmem:[#allocation9 + $0xdc0] sm:$0xff]
    %v640 = vld [vmem:[#allocation9 + $0xdc8] sm:$0xff]
    %v641 = vld [vmem:[#allocation9 + $0xdd0] sm:$0xff]
    %v642 = vld [vmem:[#allocation9 + $0xdd8] sm:$0xff]
    %v643 = vld [vmem:[#allocation9 + $0xde0] sm:$0xff]
    %v644 = vld [vmem:[#allocation9 + $0xde8] sm:$0xff]
    %v645 = vld [vmem:[#allocation9 + $0xdf0] sm:$0xff]
    %v646 = vld [vmem:[#allocation9 + $0xdf8] sm:$0xff]
    %v647 = vld [vmem:[#allocation9 + $0xe00] sm:$0xff]
    %v648 = vld [vmem:[#allocation9 + $0xe08] sm:$0xff]
    %v649 = vld [vmem:[#allocation9 + $0xe10] sm:$0xff]
    %v650 = vld [vmem:[#allocation9 + $0xe18] sm:$0xff]
    %v651 = vld [vmem:[#allocation9 + $0xe20] sm:$0xff]
    %v652 = vld [vmem:[#allocation9 + $0xe28] sm:$0xff]
    %v653 = vld [vmem:[#allocation9 + $0xe30] sm:$0xff]
    %v654 = vld [vmem:[#allocation9 + $0xe38] sm:$0xff]
    %v655 = vld [vmem:[#allocation9 + $0xe40] sm:$0xff]
    %v656 = vld [vmem:[#allocation9 + $0xe48] sm:$0xff]
    %v657 = vld [vmem:[#allocation9 + $0xe50] sm:$0xff]
    %v658 = vld [vmem:[#allocation9 + $0xe58] sm:$0xff]
    %v659 = vld [vmem:[#allocation9 + $0xe60] sm:$0xff]
    %v660 = vld [vmem:[#allocation9 + $0xe68] sm:$0xff]
    %v661 = vld [vmem:[#allocation9 + $0xe70] sm:$0xff]
    %v662 = vld [vmem:[#allocation9 + $0xe78] sm:$0xff]
    %v663 = vld [vmem:[#allocation9 + $0xe80] sm:$0xff]
    %v664 = vld [vmem:[#allocation9 + $0xe88] sm:$0xff]
    %v665 = vld [vmem:[#allocation9 + $0xe90] sm:$0xff]
    %v666 = vld [vmem:[#allocation9 + $0xe98] sm:$0xff]
    %v667 = vld [vmem:[#allocation9 + $0xea0] sm:$0xff]
    %v668 = vld [vmem:[#allocation9 + $0xea8] sm:$0xff]
    %v669 = vld [vmem:[#allocation9 + $0xeb0] sm:$0xff]
    %v670 = vld [vmem:[#allocation9 + $0xeb8] sm:$0xff]
    %v671 = vld [vmem:[#allocation9 + $0xec0] sm:$0xff]
    %v672 = vld [vmem:[#allocation9 + $0xec8] sm:$0xff]
    %v673 = vld [vmem:[#allocation9 + $0xed0] sm:$0xff]
    %v674 = vld [vmem:[#allocation9 + $0xed8] sm:$0xff]
    %v675 = vld [vmem:[#allocation9 + $0xee0] sm:$0xff]
    %v676 = vld [vmem:[#allocation9 + $0xee8] sm:$0xff]
    %v677 = vld [vmem:[#allocation9 + $0xef0] sm:$0xff]
    %v678 = vld [vmem:[#allocation9 + $0xef8] sm:$0xff]
    %v679 = vld [vmem:[#allocation9 + $0xf00] sm:$0xff]
    %v680 = vld [vmem:[#allocation9 + $0xf08] sm:$0xff]
    %v681 = vld [vmem:[#allocation9 + $0xf10] sm:$0xff]
    %v682 = vld [vmem:[#allocation9 + $0xf18] sm:$0xff]
    %v683 = vld [vmem:[#allocation9 + $0xf20] sm:$0xff]
    %v684 = vld [vmem:[#allocation9 + $0xf28] sm:$0xff]
    %v685 = vld [vmem:[#allocation9 + $0xf30] sm:$0xff]
    %v686 = vld [vmem:[#allocation9 + $0xf38] sm:$0xff]
    %v687 = vld [vmem:[#allocation9 + $0xf40] sm:$0xff]
    %v688 = vld [vmem:[#allocation9 + $0xf48] sm:$0xff]
    %v689 = vld [vmem:[#allocation9 + $0xf50] sm:$0xff]
    %v690 = vld [vmem:[#allocation9 + $0xf58] sm:$0xff]
    %v691 = vld [vmem:[#allocation9 + $0xf60] sm:$0xff]
    %v692 = vld [vmem:[#allocation9 + $0xf68] sm:$0xff]
    %v693 = vld [vmem:[#allocation9 + $0xf70] sm:$0xff]
    %v694 = vld [vmem:[#allocation9 + $0xf78] sm:$0xff]
    %v695 = vld [vmem:[#allocation9 + $0xf80] sm:$0xff]
    %v696 = vld [vmem:[#allocation9 + $0xf88] sm:$0xff]
    %v697 = vld [vmem:[#allocation9 + $0xf90] sm:$0xff]
    %v698 = vld [vmem:[#allocation9 + $0xf98] sm:$0xff]
    %v699 = vld [vmem:[#allocation9 + $0xfa0] sm:$0xff]
    %v700 = vld [vmem:[#allocation9 + $0xfa8] sm:$0xff]
    %v701 = vld [vmem:[#allocation9 + $0xfb0] sm:$0xff]
    %v702 = vld [vmem:[#allocation9 + $0xfb8] sm:$0xff]
    %v703 = vld [vmem:[#allocation9 + $0xfc0] sm:$0xff]
    %v704 = vld [vmem:[#allocation9 + $0xfc8] sm:$0xff]
    %v705 = vld [vmem:[#allocation9 + $0xfd0] sm:$0xff]
    %v706 = vld [vmem:[#allocation9 + $0xfd8] sm:$0xff]
    %v707 = vld [vmem:[#allocation9 + $0xfe0] sm:$0xff]
    %v708 = vld [vmem:[#allocation9 + $0xfe8] sm:$0xff]
    %v709 = vld [vmem:[#allocation9 + $0xff0] sm:$0xff]
    %v710 = vld [vmem:[#allocation9 + $0xff8] sm:$0xff]
    %v711 = vld [vmem:[#allocation9 + $0x1000] sm:$0xff]
    %v712 = vld [vmem:[#allocation9 + $0x1008] sm:$0xff]
    %v713 = vld [vmem:[#allocation9 + $0x1010] sm:$0xff]
    %v714 = vld [vmem:[#allocation9 + $0x1018] sm:$0xff]
    %v715 = vld [vmem:[#allocation9 + $0x1020] sm:$0xff]
    %v716 = vld [vmem:[#allocation9 + $0x1028] sm:$0xff]
    %v717 = vld [vmem:[#allocation9 + $0x1030] sm:$0xff]
    %v718 = vld [vmem:[#allocation9 + $0x1038] sm:$0xff]
    %v719 = vld [vmem:[#allocation9 + $0x1040] sm:$0xff]
    %v720 = vld [vmem:[#allocation9 + $0x1048] sm:$0xff]
    %v721 = vld [vmem:[#allocation9 + $0x1050] sm:$0xff]
    %v722 = vld [vmem:[#allocation9 + $0x1058] sm:$0xff]
    %v723 = vld [vmem:[#allocation9 + $0x1060] sm:$0xff]
    %v724 = vld [vmem:[#allocation9 + $0x1068] sm:$0xff]
    %v725 = vld [vmem:[#allocation9 + $0x1070] sm:$0xff]
    %v726 = vld [vmem:[#allocation9 + $0x1078] sm:$0xff]
    %v727 = vld [vmem:[#allocation9 + $0x1080] sm:$0xff]
    %v728 = vld [vmem:[#allocation9 + $0x1088] sm:$0xff]
    %v729 = vld [vmem:[#allocation9 + $0x1090] sm:$0xff]
    %v730 = vld [vmem:[#allocation9 + $0x1098] sm:$0xff]
    %v731 = vld [vmem:[#allocation9 + $0x10a0] sm:$0xff]
    %v732 = vld [vmem:[#allocation9 + $0x10a8] sm:$0xff]
    %v733 = vld [vmem:[#allocation9 + $0x10b0] sm:$0xff]
    %v734 = vld [vmem:[#allocation9 + $0x10b8] sm:$0xff]
    %v735 = vld [vmem:[#allocation9 + $0x10c0] sm:$0xff]
    %v736 = vld [vmem:[#allocation9 + $0x10c8] sm:$0xff]
    %v737 = vld [vmem:[#allocation9 + $0x10d0] sm:$0xff]
    %v738 = vld [vmem:[#allocation9 + $0x10d8] sm:$0xff]
    %v739 = vld [vmem:[#allocation9 + $0x10e0] sm:$0xff]
    %v740 = vld [vmem:[#allocation9 + $0x10e8] sm:$0xff]
    %v741 = vld [vmem:[#allocation9 + $0x10f0] sm:$0xff]
    %v742 = vld [vmem:[#allocation9 + $0x10f8] sm:$0xff]
    %v743 = vld [vmem:[#allocation9 + $0x1100] sm:$0xff]
    %v744 = vld [vmem:[#allocation9 + $0x1108] sm:$0xff]
    %v745 = vld [vmem:[#allocation9 + $0x1110] sm:$0xff]
    %v746 = vld [vmem:[#allocation9 + $0x1118] sm:$0xff]
    %v747 = vld [vmem:[#allocation9 + $0x1120] sm:$0xff]
    %v748 = vld [vmem:[#allocation9 + $0x1128] sm:$0xff]
    %v749 = vld [vmem:[#allocation9 + $0x1130] sm:$0xff]
    %v750 = vld [vmem:[#allocation9 + $0x1138] sm:$0xff]
    %v751 = vld [vmem:[#allocation9 + $0x1140] sm:$0xff]
    %v752 = vld [vmem:[#allocation9 + $0x1148] sm:$0xff]
    %v753 = vld [vmem:[#allocation9 + $0x1150] sm:$0xff]
    %v754 = vld [vmem:[#allocation9 + $0x1158] sm:$0xff]
    %v755 = vld [vmem:[#allocation9 + $0x1160] sm:$0xff]
    %v756 = vld [vmem:[#allocation9 + $0x1168] sm:$0xff]
    %v757 = vld [vmem:[#allocation9 + $0x1170] sm:$0xff]
    %v758 = vld [vmem:[#allocation9 + $0x1178] sm:$0xff]
    %v759 = vld [vmem:[#allocation9 + $0x1180] sm:$0xff]
    %v760 = vld [vmem:[#allocation9 + $0x1188] sm:$0xff]
    %v761 = vld [vmem:[#allocation9 + $0x1190] sm:$0xff]
    %v762 = vld [vmem:[#allocation9 + $0x1198] sm:$0xff]
    %v763 = vld [vmem:[#allocation9 + $0x11a0] sm:$0xff]
    %v764 = vld [vmem:[#allocation9 + $0x11a8] sm:$0xff]
    %v765 = vld [vmem:[#allocation9 + $0x11b0] sm:$0xff]
    %v766 = vld [vmem:[#allocation9 + $0x11b8] sm:$0xff]
    %v767 = vld [vmem:[#allocation9 + $0x11c0] sm:$0xff]
    %v768 = vld [vmem:[#allocation9 + $0x11c8] sm:$0xff]
    %v769 = vld [vmem:[#allocation9 + $0x11d0] sm:$0xff]
    %v770 = vld [vmem:[#allocation9 + $0x11d8] sm:$0xff]
    %v771 = vld [vmem:[#allocation9 + $0x11e0] sm:$0xff]
    %v772 = vld [vmem:[#allocation9 + $0x11e8] sm:$0xff]
    %v773 = vld [vmem:[#allocation9 + $0x11f0] sm:$0xff]
    %v774 = vld [vmem:[#allocation9 + $0x11f8] sm:$0xff]
    %v775 = vld [vmem:[#allocation9 + $0x1200] sm:$0xff]
    %v776 = vld [vmem:[#allocation9 + $0x1208] sm:$0xff]
    %v777 = vld [vmem:[#allocation9 + $0x1210] sm:$0xff]
    %v778 = vld [vmem:[#allocation9 + $0x1218] sm:$0xff]
    %v779 = vld [vmem:[#allocation9 + $0x1220] sm:$0xff]
    %v780 = vld [vmem:[#allocation9 + $0x1228] sm:$0xff]
    %v781 = vld [vmem:[#allocation9 + $0x1230] sm:$0xff]
    %v782 = vld [vmem:[#allocation9 + $0x1238] sm:$0xff]
    %v783 = vld [vmem:[#allocation9 + $0x1240] sm:$0xff]
    %v784 = vld [vmem:[#allocation9 + $0x1248] sm:$0xff]
    %v785 = vld [vmem:[#allocation9 + $0x1250] sm:$0xff]
    %v786 = vld [vmem:[#allocation9 + $0x1258] sm:$0xff]
    %v787 = vld [vmem:[#allocation9 + $0x1260] sm:$0xff]
    %v788 = vld [vmem:[#allocation9 + $0x1268] sm:$0xff]
    %v789 = vld [vmem:[#allocation9 + $0x1270] sm:$0xff]
    %v790 = vld [vmem:[#allocation9 + $0x1278] sm:$0xff]
    %v791 = vld [vmem:[#allocation9 + $0x1280] sm:$0xff]
    %v792 = vld [vmem:[#allocation9 + $0x1288] sm:$0xff]
    %v793 = vld [vmem:[#allocation9 + $0x1290] sm:$0xff]
    %v794 = vld [vmem:[#allocation9 + $0x1298] sm:$0xff]
    %v795 = vld [vmem:[#allocation9 + $0x12a0] sm:$0xff]
    %v796 = vld [vmem:[#allocation9 + $0x12a8] sm:$0xff]
    %v797 = vld [vmem:[#allocation9 + $0x12b0] sm:$0xff]
    %v798 = vld [vmem:[#allocation9 + $0x12b8] sm:$0xff]
    %v799 = vld [vmem:[#allocation9 + $0x12c0] sm:$0xff]
    %v800 = vld [vmem:[#allocation9 + $0x12c8] sm:$0xff]
    %v801 = vld [vmem:[#allocation9 + $0x12d0] sm:$0xff]
    %v802 = vld [vmem:[#allocation9 + $0x12d8] sm:$0xff]
    %v803 = vld [vmem:[#allocation9 + $0x12e0] sm:$0xff]
    %v804 = vld [vmem:[#allocation9 + $0x12e8] sm:$0xff]
    %v805 = vld [vmem:[#allocation9 + $0x12f0] sm:$0xff]
    %v806 = vld [vmem:[#allocation9 + $0x12f8] sm:$0xff]
    %v807 = vld [vmem:[#allocation9 + $0x1300] sm:$0xff]
    %v808 = vld [vmem:[#allocation9 + $0x1308] sm:$0xff]
    %v809 = vld [vmem:[#allocation9 + $0x1310] sm:$0xff]
    %v810 = vld [vmem:[#allocation9 + $0x1318] sm:$0xff]
    %v811 = vld [vmem:[#allocation9 + $0x1320] sm:$0xff]
    %v812 = vld [vmem:[#allocation9 + $0x1328] sm:$0xff]
    %v813 = vld [vmem:[#allocation9 + $0x1330] sm:$0xff]
    %v814 = vld [vmem:[#allocation9 + $0x1338] sm:$0xff]
    %v815 = vld [vmem:[#allocation9 + $0x1340] sm:$0xff]
    %v816 = vld [vmem:[#allocation9 + $0x1348] sm:$0xff]
    %v817 = vld [vmem:[#allocation9 + $0x1350] sm:$0xff]
    %v818 = vld [vmem:[#allocation9 + $0x1358] sm:$0xff]
    %v819 = vld [vmem:[#allocation9 + $0x1360] sm:$0xff]
    %v820 = vld [vmem:[#allocation9 + $0x1368] sm:$0xff]
    %v821 = vld [vmem:[#allocation9 + $0x1370] sm:$0xff]
    %v822 = vld [vmem:[#allocation9 + $0x1378] sm:$0xff]
    %v823 = vld [vmem:[#allocation9 + $0x1380] sm:$0xff]
    %v824 = vld [vmem:[#allocation9 + $0x1388] sm:$0xff]
    %v825 = vld [vmem:[#allocation9 + $0x1390] sm:$0xff]
    %v826 = vld [vmem:[#allocation9 + $0x1398] sm:$0xff]
    %v827 = vld [vmem:[#allocation9 + $0x13a0] sm:$0xff]
    %v828 = vld [vmem:[#allocation9 + $0x13a8] sm:$0xff]
    %v829 = vld [vmem:[#allocation9 + $0x13b0] sm:$0xff]
    %v830 = vld [vmem:[#allocation9 + $0x13b8] sm:$0xff]
    %v831 = vld [vmem:[#allocation9 + $0x13c0] sm:$0xff]
    %v832 = vld [vmem:[#allocation9 + $0x13c8] sm:$0xff]
    %v833 = vld [vmem:[#allocation9 + $0x13d0] sm:$0xff]
    %v834 = vld [vmem:[#allocation9 + $0x13d8] sm:$0xff]
    %v835 = vld [vmem:[#allocation9 + $0x13e0] sm:$0xff]
    %v836 = vld [vmem:[#allocation9 + $0x13e8] sm:$0xff]
    %v837 = vld [vmem:[#allocation9 + $0x13f0] sm:$0xff]
    %v838 = vld [vmem:[#allocation9 + $0x13f8] sm:$0xff]
    %v839 = vld [vmem:[#allocation9 + $0x1400] sm:$0xff]
    %v840 = vld [vmem:[#allocation9 + $0x1408] sm:$0xff]
    %v841 = vld [vmem:[#allocation9 + $0x1410] sm:$0xff]
    %v842 = vld [vmem:[#allocation9 + $0x1418] sm:$0xff]
    %v843 = vld [vmem:[#allocation9 + $0x1420] sm:$0xff]
    %v844 = vld [vmem:[#allocation9 + $0x1428] sm:$0xff]
    %v845 = vld [vmem:[#allocation9 + $0x1430] sm:$0xff]
    %v846 = vld [vmem:[#allocation9 + $0x1438] sm:$0xff]
    %v847 = vld [vmem:[#allocation9 + $0x1440] sm:$0xff]
    %v848 = vld [vmem:[#allocation9 + $0x1448] sm:$0xff]
    %v849 = vld [vmem:[#allocation9 + $0x1450] sm:$0xff]
    %v850 = vld [vmem:[#allocation9 + $0x1458] sm:$0xff]
    %v851 = vld [vmem:[#allocation9 + $0x1460] sm:$0xff]
    %v852 = vld [vmem:[#allocation9 + $0x1468] sm:$0xff]
    %v853 = vld [vmem:[#allocation9 + $0x1470] sm:$0xff]
    %v854 = vld [vmem:[#allocation9 + $0x1478] sm:$0xff]
    %v855 = vld [vmem:[#allocation9 + $0x1480] sm:$0xff]
    %v856 = vld [vmem:[#allocation9 + $0x1488] sm:$0xff]
    %v857 = vld [vmem:[#allocation9 + $0x1490] sm:$0xff]
    %v858 = vld [vmem:[#allocation9 + $0x1498] sm:$0xff]
    %v859 = vld [vmem:[#allocation9 + $0x14a0] sm:$0xff]
    %v860 = vld [vmem:[#allocation9 + $0x14a8] sm:$0xff]
    %v861 = vld [vmem:[#allocation9 + $0x14b0] sm:$0xff]
    %v862 = vld [vmem:[#allocation9 + $0x14b8] sm:$0xff]
    %v863 = vld [vmem:[#allocation9 + $0x14c0] sm:$0xff]
    %v864 = vld [vmem:[#allocation9 + $0x14c8] sm:$0xff]
    %v865 = vld [vmem:[#allocation9 + $0x14d0] sm:$0xff]
    %v866 = vld [vmem:[#allocation9 + $0x14d8] sm:$0xff]
    %v867 = vld [vmem:[#allocation9 + $0x14e0] sm:$0xff]
    %v868 = vld [vmem:[#allocation9 + $0x14e8] sm:$0xff]
    %v869 = vld [vmem:[#allocation9 + $0x14f0] sm:$0xff]
    %v870 = vld [vmem:[#allocation9 + $0x14f8] sm:$0xff]
    %v871 = vld [vmem:[#allocation9 + $0x1500] sm:$0xff]
    %v872 = vld [vmem:[#allocation9 + $0x1508] sm:$0xff]
    %v873 = vld [vmem:[#allocation9 + $0x1510] sm:$0xff]
    %v874 = vld [vmem:[#allocation9 + $0x1518] sm:$0xff]
    %v875 = vld [vmem:[#allocation9 + $0x1520] sm:$0xff]
    %v876 = vld [vmem:[#allocation9 + $0x1528] sm:$0xff]
    %v877 = vld [vmem:[#allocation9 + $0x1530] sm:$0xff]
    %v878 = vld [vmem:[#allocation9 + $0x1538] sm:$0xff]
    %v879 = vld [vmem:[#allocation9 + $0x1540] sm:$0xff]
    %v880 = vld [vmem:[#allocation9 + $0x1548] sm:$0xff]
    %v881 = vld [vmem:[#allocation9 + $0x1550] sm:$0xff]
    %v882 = vld [vmem:[#allocation9 + $0x1558] sm:$0xff]
    %v883 = vld [vmem:[#allocation9 + $0x1560] sm:$0xff]
    %v884 = vld [vmem:[#allocation9 + $0x1568] sm:$0xff]
    %v885 = vld [vmem:[#allocation9 + $0x1570] sm:$0xff]
    %v886 = vld [vmem:[#allocation9 + $0x1578] sm:$0xff]
    %v887 = vld [vmem:[#allocation9 + $0x1580] sm:$0xff]
    %v888 = vld [vmem:[#allocation9 + $0x1588] sm:$0xff]
    %v889 = vld [vmem:[#allocation9 + $0x1590] sm:$0xff]
    %v890 = vld [vmem:[#allocation9 + $0x1598] sm:$0xff]
    %v891 = vld [vmem:[#allocation9 + $0x15a0] sm:$0xff]
    %v892 = vld [vmem:[#allocation9 + $0x15a8] sm:$0xff]
    %v893 = vld [vmem:[#allocation9 + $0x15b0] sm:$0xff]
    %v894 = vld [vmem:[#allocation9 + $0x15b8] sm:$0xff]
    %v895 = vld [vmem:[#allocation9 + $0x15c0] sm:$0xff]
    %v896 = vld [vmem:[#allocation9 + $0x15c8] sm:$0xff]
    %v897 = vld [vmem:[#allocation9 + $0x15d0] sm:$0xff]
    %v898 = vld [vmem:[#allocation9 + $0x15d8] sm:$0xff]
    %v899 = vld [vmem:[#allocation9 + $0x15e0] sm:$0xff]
    %v900 = vld [vmem:[#allocation9 + $0x15e8] sm:$0xff]
    %v901 = vld [vmem:[#allocation9 + $0x15f0] sm:$0xff]
    %v902 = vld [vmem:[#allocation9 + $0x15f8] sm:$0xff]
    %v903 = vld [vmem:[#allocation9 + $0x1600] sm:$0xff]
    %v904 = vld [vmem:[#allocation9 + $0x1608] sm:$0xff]
    %v905 = vld [vmem:[#allocation9 + $0x1610] sm:$0xff]
    %v906 = vld [vmem:[#allocation9 + $0x1618] sm:$0xff]
    %v907 = vld [vmem:[#allocation9 + $0x1620] sm:$0xff]
    %v908 = vld [vmem:[#allocation9 + $0x1628] sm:$0xff]
    %v909 = vld [vmem:[#allocation9 + $0x1630] sm:$0xff]
    %v910 = vld [vmem:[#allocation9 + $0x1638] sm:$0xff]
    %v911 = vld [vmem:[#allocation9 + $0x1640] sm:$0xff]
    %v912 = vld [vmem:[#allocation9 + $0x1648] sm:$0xff]
    %v913 = vld [vmem:[#allocation9 + $0x1650] sm:$0xff]
    %v914 = vld [vmem:[#allocation9 + $0x1658] sm:$0xff]
    %v915 = vld [vmem:[#allocation9 + $0x1660] sm:$0xff]
    %v916 = vld [vmem:[#allocation9 + $0x1668] sm:$0xff]
    %v917 = vld [vmem:[#allocation9 + $0x1670] sm:$0xff]
    %v918 = vld [vmem:[#allocation9 + $0x1678] sm:$0xff]
    %v919 = vld [vmem:[#allocation9 + $0x1680] sm:$0xff]
    %v920 = vld [vmem:[#allocation9 + $0x1688] sm:$0xff]
    %v921 = vld [vmem:[#allocation9 + $0x1690] sm:$0xff]
    %v922 = vld [vmem:[#allocation9 + $0x1698] sm:$0xff]
    %v923 = vld [vmem:[#allocation9 + $0x16a0] sm:$0xff]
    %v924 = vld [vmem:[#allocation9 + $0x16a8] sm:$0xff]
    %v925 = vld [vmem:[#allocation9 + $0x16b0] sm:$0xff]
    %v926 = vld [vmem:[#allocation9 + $0x16b8] sm:$0xff]
    %v927 = vld [vmem:[#allocation9 + $0x16c0] sm:$0xff]
    %v928 = vld [vmem:[#allocation9 + $0x16c8] sm:$0xff]
    %v929 = vld [vmem:[#allocation9 + $0x16d0] sm:$0xff]
    %v930 = vld [vmem:[#allocation9 + $0x16d8] sm:$0xff]
    %v931 = vld [vmem:[#allocation9 + $0x16e0] sm:$0xff]
    %v932 = vld [vmem:[#allocation9 + $0x16e8] sm:$0xff]
    %v933 = vld [vmem:[#allocation9 + $0x16f0] sm:$0xff]
    %v934 = vld [vmem:[#allocation9 + $0x16f8] sm:$0xff]
    %v935 = vld [vmem:[#allocation9 + $0x1700] sm:$0xff]
    %v936 = vld [vmem:[#allocation9 + $0x1708] sm:$0xff]
    %v937 = vld [vmem:[#allocation9 + $0x1710] sm:$0xff]
    %v938 = vld [vmem:[#allocation9 + $0x1718] sm:$0xff]
    %v939 = vld [vmem:[#allocation9 + $0x1720] sm:$0xff]
    %v940 = vld [vmem:[#allocation9 + $0x1728] sm:$0xff]
    %v941 = vld [vmem:[#allocation9 + $0x1730] sm:$0xff]
    %v942 = vld [vmem:[#allocation9 + $0x1738] sm:$0xff]
    %v943 = vld [vmem:[#allocation9 + $0x1740] sm:$0xff]
    %v944 = vld [vmem:[#allocation9 + $0x1748] sm:$0xff]
    %v945 = vld [vmem:[#allocation9 + $0x1750] sm:$0xff]
    %v946 = vld [vmem:[#allocation9 + $0x1758] sm:$0xff]
    %v947 = vld [vmem:[#allocation9 + $0x1760] sm:$0xff]
    %v948 = vld [vmem:[#allocation9 + $0x1768] sm:$0xff]
    %v949 = vld [vmem:[#allocation9 + $0x1770] sm:$0xff]
    %v950 = vld [vmem:[#allocation9 + $0x1778] sm:$0xff]
    %v951 = vld [vmem:[#allocation9 + $0x1780] sm:$0xff]
    %v952 = vld [vmem:[#allocation9 + $0x1788] sm:$0xff]
    %v953 = vld [vmem:[#allocation9 + $0x1790] sm:$0xff]
    %v954 = vld [vmem:[#allocation9 + $0x1798] sm:$0xff]
    %v955 = vld [vmem:[#allocation9 + $0x17a0] sm:$0xff]
    %v956 = vld [vmem:[#allocation9 + $0x17a8] sm:$0xff]
    %v957 = vld [vmem:[#allocation9 + $0x17b0] sm:$0xff]
    %v958 = vld [vmem:[#allocation9 + $0x17b8] sm:$0xff]
    %v959 = vld [vmem:[#allocation9 + $0x17c0] sm:$0xff]
    %v960 = vld [vmem:[#allocation9 + $0x17c8] sm:$0xff]
    %v961 = vld [vmem:[#allocation9 + $0x17d0] sm:$0xff]
    %v962 = vld [vmem:[#allocation9 + $0x17d8] sm:$0xff]
    %v963 = vld [vmem:[#allocation9 + $0x17e0] sm:$0xff]
    %v964 = vld [vmem:[#allocation9 + $0x17e8] sm:$0xff]
    %v965 = vld [vmem:[#allocation9 + $0x17f0] sm:$0xff]
    %v966 = vld [vmem:[#allocation9 + $0x17f8] sm:$0xff]
    %v967 = vld [vmem:[#allocation9 + $0x1800] sm:$0xff]
    %v968 = vld [vmem:[#allocation9 + $0x1808] sm:$0xff]
    %v969 = vld [vmem:[#allocation9 + $0x1810] sm:$0xff]
    %v970 = vld [vmem:[#allocation9 + $0x1818] sm:$0xff]
    %v971 = vld [vmem:[#allocation9 + $0x1820] sm:$0xff]
    %v972 = vld [vmem:[#allocation9 + $0x1828] sm:$0xff]
    %v973 = vld [vmem:[#allocation9 + $0x1830] sm:$0xff]
    %v974 = vld [vmem:[#allocation9 + $0x1838] sm:$0xff]
    %v975 = vld [vmem:[#allocation9 + $0x1840] sm:$0xff]
    %v976 = vld [vmem:[#allocation9 + $0x1848] sm:$0xff]
    %v977 = vld [vmem:[#allocation9 + $0x1850] sm:$0xff]
    %v978 = vld [vmem:[#allocation9 + $0x1858] sm:$0xff]
    %v979 = vld [vmem:[#allocation9 + $0x1860] sm:$0xff]
    %v980 = vld [vmem:[#allocation9 + $0x1868] sm:$0xff]
    %v981 = vld [vmem:[#allocation9 + $0x1870] sm:$0xff]
    %v982 = vld [vmem:[#allocation9 + $0x1878] sm:$0xff]
    %v983 = vld [vmem:[#allocation9 + $0x1880] sm:$0xff]
    %v984 = vld [vmem:[#allocation9 + $0x1888] sm:$0xff]
    %v985 = vld [vmem:[#allocation9 + $0x1890] sm:$0xff]
    %v986 = vld [vmem:[#allocation9 + $0x1898] sm:$0xff]
    %v987 = vld [vmem:[#allocation9 + $0x18a0] sm:$0xff]
    %v988 = vld [vmem:[#allocation9 + $0x18a8] sm:$0xff]
    %v989 = vld [vmem:[#allocation9 + $0x18b0] sm:$0xff]
    %v990 = vld [vmem:[#allocation9 + $0x18b8] sm:$0xff]
    %v991 = vld [vmem:[#allocation9 + $0x18c0] sm:$0xff]
    %v992 = vld [vmem:[#allocation9 + $0x18c8] sm:$0xff]
    %v993 = vld [vmem:[#allocation9 + $0x18d0] sm:$0xff]
    %v994 = vld [vmem:[#allocation9 + $0x18d8] sm:$0xff]
    %v995 = vld [vmem:[#allocation9 + $0x18e0] sm:$0xff]
    %v996 = vld [vmem:[#allocation9 + $0x18e8] sm:$0xff]
    %v997 = vld [vmem:[#allocation9 + $0x18f0] sm:$0xff]
    %v998 = vld [vmem:[#allocation9 + $0x18f8] sm:$0xff]
    %v999 = vld [vmem:[#allocation9 + $0x1900] sm:$0xff]
    %v1000 = vld [vmem:[#allocation9 + $0x1908] sm:$0xff]
    %v1001 = vld [vmem:[#allocation9 + $0x1910] sm:$0xff]
    %v1002 = vld [vmem:[#allocation9 + $0x1918] sm:$0xff]
    %v1003 = vld [vmem:[#allocation9 + $0x1920] sm:$0xff]
    %v1004 = vld [vmem:[#allocation9 + $0x1928] sm:$0xff]
    %v1005 = vld [vmem:[#allocation9 + $0x1930] sm:$0xff]
    %v1006 = vld [vmem:[#allocation9 + $0x1938] sm:$0xff]
    %v1007 = vld [vmem:[#allocation9 + $0x1940] sm:$0xff]
    %v1008 = vld [vmem:[#allocation9 + $0x1948] sm:$0xff]
    %v1009 = vld [vmem:[#allocation9 + $0x1950] sm:$0xff]
    %v1010 = vld [vmem:[#allocation9 + $0x1958] sm:$0xff]
    %v1011 = vld [vmem:[#allocation9 + $0x1960] sm:$0xff]
    %v1012 = vld [vmem:[#allocation9 + $0x1968] sm:$0xff]
    %v1013 = vld [vmem:[#allocation9 + $0x1970] sm:$0xff]
    %v1014 = vld [vmem:[#allocation9 + $0x1978] sm:$0xff]
    %v1015 = vld [vmem:[#allocation9 + $0x1980] sm:$0xff]
    %v1016 = vld [vmem:[#allocation9 + $0x1988] sm:$0xff]
    %v1017 = vld [vmem:[#allocation9 + $0x1990] sm:$0xff]
    %v1018 = vld [vmem:[#allocation9 + $0x1998] sm:$0xff]
    %v1019 = vld [vmem:[#allocation9 + $0x19a0] sm:$0xff]
    %v1020 = vld [vmem:[#allocation9 + $0x19a8] sm:$0xff]
    %v1021 = vld [vmem:[#allocation9 + $0x19b0] sm:$0xff]
    %v1022 = vld [vmem:[#allocation9 + $0x19b8] sm:$0xff]
    %v1023 = vld [vmem:[#allocation9 + $0x19c0] sm:$0xff]
    %v1024 = vld [vmem:[#allocation9 + $0x19c8] sm:$0xff]
    %v1025 = vld [vmem:[#allocation9 + $0x19d0] sm:$0xff]
    %v1026 = vld [vmem:[#allocation9 + $0x19d8] sm:$0xff]
    %v1027 = vld [vmem:[#allocation9 + $0x19e0] sm:$0xff]
    %v1028 = vld [vmem:[#allocation9 + $0x19e8] sm:$0xff]
    %v1029 = vld [vmem:[#allocation9 + $0x19f0] sm:$0xff]
    %v1030 = vld [vmem:[#allocation9 + $0x19f8] sm:$0xff]
    %v1031 = vld [vmem:[#allocation9 + $0x1a00] sm:$0xff]
    %v1032 = vld [vmem:[#allocation9 + $0x1a08] sm:$0xff]
    %v1033 = vld [vmem:[#allocation9 + $0x1a10] sm:$0xff]
    %v1034 = vld [vmem:[#allocation9 + $0x1a18] sm:$0xff]
    %v1035 = vld [vmem:[#allocation9 + $0x1a20] sm:$0xff]
    %v1036 = vld [vmem:[#allocation9 + $0x1a28] sm:$0xff]
    %v1037 = vld [vmem:[#allocation9 + $0x1a30] sm:$0xff]
    %v1038 = vld [vmem:[#allocation9 + $0x1a38] sm:$0xff]
    %v1039 = vld [vmem:[#allocation9 + $0x1a40] sm:$0xff]
    %v1040 = vld [vmem:[#allocation9 + $0x1a48] sm:$0xff]
    %v1041 = vld [vmem:[#allocation9 + $0x1a50] sm:$0xff]
    %v1042 = vld [vmem:[#allocation9 + $0x1a58] sm:$0xff]
    %v1043 = vld [vmem:[#allocation9 + $0x1a60] sm:$0xff]
    %v1044 = vld [vmem:[#allocation9 + $0x1a68] sm:$0xff]
    %v1045 = vld [vmem:[#allocation9 + $0x1a70] sm:$0xff]
    %v1046 = vld [vmem:[#allocation9 + $0x1a78] sm:$0xff]
    %v1047 = vld [vmem:[#allocation9 + $0x1a80] sm:$0xff]
    %v1048 = vld [vmem:[#allocation9 + $0x1a88] sm:$0xff]
    %v1049 = vld [vmem:[#allocation9 + $0x1a90] sm:$0xff]
    %v1050 = vld [vmem:[#allocation9 + $0x1a98] sm:$0xff]
    %v1051 = vld [vmem:[#allocation9 + $0x1aa0] sm:$0xff]
    %v1052 = vld [vmem:[#allocation9 + $0x1aa8] sm:$0xff]
    %v1053 = vld [vmem:[#allocation9 + $0x1ab0] sm:$0xff]
    %v1054 = vld [vmem:[#allocation9 + $0x1ab8] sm:$0xff]
    %v1055 = vld [vmem:[#allocation9 + $0x1ac0] sm:$0xff]
    %v1056 = vld [vmem:[#allocation9 + $0x1ac8] sm:$0xff]
    %v1057 = vld [vmem:[#allocation9 + $0x1ad0] sm:$0xff]
    %v1058 = vld [vmem:[#allocation9 + $0x1ad8] sm:$0xff]
    %v1059 = vld [vmem:[#allocation9 + $0x1ae0] sm:$0xff]
    %v1060 = vld [vmem:[#allocation9 + $0x1ae8] sm:$0xff]
    %v1061 = vld [vmem:[#allocation9 + $0x1af0] sm:$0xff]
    %v1062 = vld [vmem:[#allocation9 + $0x1af8] sm:$0xff]
    %v1063 = vld [vmem:[#allocation9 + $0x1b00] sm:$0xff]
    %v1064 = vld [vmem:[#allocation9 + $0x1b08] sm:$0xff]
    %v1065 = vld [vmem:[#allocation9 + $0x1b10] sm:$0xff]
    %v1066 = vld [vmem:[#allocation9 + $0x1b18] sm:$0xff]
    %v1067 = vld [vmem:[#allocation9 + $0x1b20] sm:$0xff]
    %v1068 = vld [vmem:[#allocation9 + $0x1b28] sm:$0xff]
    %v1069 = vld [vmem:[#allocation9 + $0x1b30] sm:$0xff]
    %v1070 = vld [vmem:[#allocation9 + $0x1b38] sm:$0xff]
    %v1071 = vld [vmem:[#allocation9 + $0x1b40] sm:$0xff]
    %v1072 = vld [vmem:[#allocation9 + $0x1b48] sm:$0xff]
    %v1073 = vld [vmem:[#allocation9 + $0x1b50] sm:$0xff]
    %v1074 = vld [vmem:[#allocation9 + $0x1b58] sm:$0xff]
    %v1075 = vld [vmem:[#allocation9 + $0x1b60] sm:$0xff]
    %v1076 = vld [vmem:[#allocation9 + $0x1b68] sm:$0xff]
    %v1077 = vld [vmem:[#allocation9 + $0x1b70] sm:$0xff]
    %v1078 = vld [vmem:[#allocation9 + $0x1b78] sm:$0xff]
    %v1079 = vld [vmem:[#allocation9 + $0x1b80] sm:$0xff]
    %v1080 = vld [vmem:[#allocation9 + $0x1b88] sm:$0xff]
    %v1081 = vld [vmem:[#allocation9 + $0x1b90] sm:$0xff]
    %v1082 = vld [vmem:[#allocation9 + $0x1b98] sm:$0xff]
    %v1083 = vld [vmem:[#allocation9 + $0x1ba0] sm:$0xff]
    %v1084 = vld [vmem:[#allocation9 + $0x1ba8] sm:$0xff]
    %v1085 = vld [vmem:[#allocation9 + $0x1bb0] sm:$0xff]
    %v1086 = vld [vmem:[#allocation9 + $0x1bb8] sm:$0xff]
    %v1087 = vld [vmem:[#allocation9 + $0x1bc0] sm:$0xff]
    %v1088 = vld [vmem:[#allocation9 + $0x1bc8] sm:$0xff]
    %v1089 = vld [vmem:[#allocation9 + $0x1bd0] sm:$0xff]
    %v1090 = vld [vmem:[#allocation9 + $0x1bd8] sm:$0xff]
    %v1091 = vld [vmem:[#allocation9 + $0x1be0] sm:$0xff]
    %v1092 = vld [vmem:[#allocation9 + $0x1be8] sm:$0xff]
    %v1093 = vld [vmem:[#allocation9 + $0x1bf0] sm:$0xff]
    %v1094 = vld [vmem:[#allocation9 + $0x1bf8] sm:$0xff]
    %v1095 = vld [vmem:[#allocation9 + $0x1c00] sm:$0xff]
    %v1096 = vld [vmem:[#allocation9 + $0x1c08] sm:$0xff]
    %v1097 = vld [vmem:[#allocation9 + $0x1c10] sm:$0xff]
    %v1098 = vld [vmem:[#allocation9 + $0x1c18] sm:$0xff]
    %v1099 = vld [vmem:[#allocation9 + $0x1c20] sm:$0xff]
    %v1100 = vld [vmem:[#allocation9 + $0x1c28] sm:$0xff]
    %v1101 = vld [vmem:[#allocation9 + $0x1c30] sm:$0xff]
    %v1102 = vld [vmem:[#allocation9 + $0x1c38] sm:$0xff]
    %v1103 = vld [vmem:[#allocation9 + $0x1c40] sm:$0xff]
    %v1104 = vld [vmem:[#allocation9 + $0x1c48] sm:$0xff]
    %v1105 = vld [vmem:[#allocation9 + $0x1c50] sm:$0xff]
    %v1106 = vld [vmem:[#allocation9 + $0x1c58] sm:$0xff]
    %v1107 = vld [vmem:[#allocation9 + $0x1c60] sm:$0xff]
    %v1108 = vld [vmem:[#allocation9 + $0x1c68] sm:$0xff]
    %v1109 = vld [vmem:[#allocation9 + $0x1c70] sm:$0xff]
    %v1110 = vld [vmem:[#allocation9 + $0x1c78] sm:$0xff]
    %v1111 = vld [vmem:[#allocation9 + $0x1c80] sm:$0xff]
    %v1112 = vld [vmem:[#allocation9 + $0x1c88] sm:$0xff]
    %v1113 = vld [vmem:[#allocation9 + $0x1c90] sm:$0xff]
    %v1114 = vld [vmem:[#allocation9 + $0x1c98] sm:$0xff]
    %v1115 = vld [vmem:[#allocation9 + $0x1ca0] sm:$0xff]
    %v1116 = vld [vmem:[#allocation9 + $0x1ca8] sm:$0xff]
    %v1117 = vld [vmem:[#allocation9 + $0x1cb0] sm:$0xff]
    %v1118 = vld [vmem:[#allocation9 + $0x1cb8] sm:$0xff]
    %v1119 = vld [vmem:[#allocation9 + $0x1cc0] sm:$0xff]
    %v1120 = vld [vmem:[#allocation9 + $0x1cc8] sm:$0xff]
    %v1121 = vld [vmem:[#allocation9 + $0x1cd0] sm:$0xff]
    %v1122 = vld [vmem:[#allocation9 + $0x1cd8] sm:$0xff]
    %v1123 = vld [vmem:[#allocation9 + $0x1ce0] sm:$0xff]
    %v1124 = vld [vmem:[#allocation9 + $0x1ce8] sm:$0xff]
    %v1125 = vld [vmem:[#allocation9 + $0x1cf0] sm:$0xff]
    %v1126 = vld [vmem:[#allocation9 + $0x1cf8] sm:$0xff]
    %v1127 = vld [vmem:[#allocation9 + $0x1d00] sm:$0xff]
    %v1128 = vld [vmem:[#allocation9 + $0x1d08] sm:$0xff]
    %v1129 = vld [vmem:[#allocation9 + $0x1d10] sm:$0xff]
    %v1130 = vld [vmem:[#allocation9 + $0x1d18] sm:$0xff]
    %v1131 = vld [vmem:[#allocation9 + $0x1d20] sm:$0xff]
    %v1132 = vld [vmem:[#allocation9 + $0x1d28] sm:$0xff]
    %v1133 = vld [vmem:[#allocation9 + $0x1d30] sm:$0xff]
    %v1134 = vld [vmem:[#allocation9 + $0x1d38] sm:$0xff]
    %v1135 = vld [vmem:[#allocation9 + $0x1d40] sm:$0xff]
    %v1136 = vld [vmem:[#allocation9 + $0x1d48] sm:$0xff]
    %v1137 = vld [vmem:[#allocation9 + $0x1d50] sm:$0xff]
    %v1138 = vld [vmem:[#allocation9 + $0x1d58] sm:$0xff]
    %v1139 = vld [vmem:[#allocation9 + $0x1d60] sm:$0xff]
    %v1140 = vld [vmem:[#allocation9 + $0x1d68] sm:$0xff]
    %v1141 = vld [vmem:[#allocation9 + $0x1d70] sm:$0xff]
    %v1142 = vld [vmem:[#allocation9 + $0x1d78] sm:$0xff]
    %v1143 = vld [vmem:[#allocation9 + $0x1d80] sm:$0xff]
    %v1144 = vld [vmem:[#allocation9 + $0x1d88] sm:$0xff]
    %v1145 = vld [vmem:[#allocation9 + $0x1d90] sm:$0xff]
    %v1146 = vld [vmem:[#allocation9 + $0x1d98] sm:$0xff]
    %v1147 = vld [vmem:[#allocation9 + $0x1da0] sm:$0xff]
    %v1148 = vld [vmem:[#allocation9 + $0x1da8] sm:$0xff]
    %v1149 = vld [vmem:[#allocation9 + $0x1db0] sm:$0xff]
    %v1150 = vld [vmem:[#allocation9 + $0x1db8] sm:$0xff]
    %v1151 = vld [vmem:[#allocation9 + $0x1dc0] sm:$0xff]
    %v1152 = vld [vmem:[#allocation9 + $0x1dc8] sm:$0xff]
    %v1153 = vld [vmem:[#allocation9 + $0x1dd0] sm:$0xff]
    %v1154 = vld [vmem:[#allocation9 + $0x1dd8] sm:$0xff]
    %v1155 = vld [vmem:[#allocation9 + $0x1de0] sm:$0xff]
    %v1156 = vld [vmem:[#allocation9 + $0x1de8] sm:$0xff]
    %v1157 = vld [vmem:[#allocation9 + $0x1df0] sm:$0xff]
    %v1158 = vld [vmem:[#allocation9 + $0x1df8] sm:$0xff]
    %v1159 = vld [vmem:[#allocation9 + $0x1e00] sm:$0xff]
    %v1160 = vld [vmem:[#allocation9 + $0x1e08] sm:$0xff]
    %v1161 = vld [vmem:[#allocation9 + $0x1e10] sm:$0xff]
    %v1162 = vld [vmem:[#allocation9 + $0x1e18] sm:$0xff]
    %v1163 = vld [vmem:[#allocation9 + $0x1e20] sm:$0xff]
    %v1164 = vld [vmem:[#allocation9 + $0x1e28] sm:$0xff]
    %v1165 = vld [vmem:[#allocation9 + $0x1e30] sm:$0xff]
    %v1166 = vld [vmem:[#allocation9 + $0x1e38] sm:$0xff]
    %v1167 = vld [vmem:[#allocation9 + $0x1e40] sm:$0xff]
    %v1168 = vld [vmem:[#allocation9 + $0x1e48] sm:$0xff]
    %v1169 = vld [vmem:[#allocation9 + $0x1e50] sm:$0xff]
    %v1170 = vld [vmem:[#allocation9 + $0x1e58] sm:$0xff]
    %v1171 = vld [vmem:[#allocation9 + $0x1e60] sm:$0xff]
    %v1172 = vld [vmem:[#allocation9 + $0x1e68] sm:$0xff]
    %v1173 = vld [vmem:[#allocation9 + $0x1e70] sm:$0xff]
    %v1174 = vld [vmem:[#allocation9 + $0x1e78] sm:$0xff]
    %v1175 = vld [vmem:[#allocation9 + $0x1e80] sm:$0xff]
    %v1176 = vld [vmem:[#allocation9 + $0x1e88] sm:$0xff]
    %v1177 = vld [vmem:[#allocation9 + $0x1e90] sm:$0xff]
    %v1178 = vld [vmem:[#allocation9 + $0x1e98] sm:$0xff]
    %v1179 = vld [vmem:[#allocation9 + $0x1ea0] sm:$0xff]
    %v1180 = vld [vmem:[#allocation9 + $0x1ea8] sm:$0xff]
    %v1181 = vld [vmem:[#allocation9 + $0x1eb0] sm:$0xff]
    %v1182 = vld [vmem:[#allocation9 + $0x1eb8] sm:$0xff]
    %v1183 = vld [vmem:[#allocation9 + $0x1ec0] sm:$0xff]
    %v1184 = vld [vmem:[#allocation9 + $0x1ec8] sm:$0xff]
    %v1185 = vld [vmem:[#allocation9 + $0x1ed0] sm:$0xff]
    %v1186 = vld [vmem:[#allocation9 + $0x1ed8] sm:$0xff]
    %v1187 = vld [vmem:[#allocation9 + $0x1ee0] sm:$0xff]
    %v1188 = vld [vmem:[#allocation9 + $0x1ee8] sm:$0xff]
    %v1189 = vld [vmem:[#allocation9 + $0x1ef0] sm:$0xff]
    %v1190 = vld [vmem:[#allocation9 + $0x1ef8] sm:$0xff]
    %v1191 = vld [vmem:[#allocation9 + $0x1f00] sm:$0xff]
    %v1192 = vld [vmem:[#allocation9 + $0x1f08] sm:$0xff]
    %v1193 = vld [vmem:[#allocation9 + $0x1f10] sm:$0xff]
    %v1194 = vld [vmem:[#allocation9 + $0x1f18] sm:$0xff]
    %v1195 = vld [vmem:[#allocation9 + $0x1f20] sm:$0xff]
    %v1196 = vld [vmem:[#allocation9 + $0x1f28] sm:$0xff]
    %v1197 = vld [vmem:[#allocation9 + $0x1f30] sm:$0xff]
    %v1198 = vld [vmem:[#allocation9 + $0x1f38] sm:$0xff]
    %v1199 = vld [vmem:[#allocation9 + $0x1f40] sm:$0xff]
    %v1200 = vld [vmem:[#allocation9 + $0x1f48] sm:$0xff]
    %v1201 = vld [vmem:[#allocation9 + $0x1f50] sm:$0xff]
    %v1202 = vld [vmem:[#allocation9 + $0x1f58] sm:$0xff]
    %v1203 = vld [vmem:[#allocation9 + $0x1f60] sm:$0xff]
    %v1204 = vld [vmem:[#allocation9 + $0x1f68] sm:$0xff]
    %v1205 = vld [vmem:[#allocation9 + $0x1f70] sm:$0xff]
    %v1206 = vld [vmem:[#allocation9 + $0x1f78] sm:$0xff]
    %v1207 = vld [vmem:[#allocation9 + $0x1f80] sm:$0xff]
    %v1208 = vld [vmem:[#allocation9 + $0x1f88] sm:$0xff]
    %v1209 = vld [vmem:[#allocation9 + $0x1f90] sm:$0xff]
    %v1210 = vld [vmem:[#allocation9 + $0x1f98] sm:$0xff]
    %v1211 = vld [vmem:[#allocation9 + $0x1fa0] sm:$0xff]
    %v1212 = vld [vmem:[#allocation9 + $0x1fa8] sm:$0xff]
    %v1213 = vld [vmem:[#allocation9 + $0x1fb0] sm:$0xff]
    %v1214 = vld [vmem:[#allocation9 + $0x1fb8] sm:$0xff]
    %v1215 = vld [vmem:[#allocation9 + $0x1fc0] sm:$0xff]
    %v1216 = vld [vmem:[#allocation9 + $0x1fc8] sm:$0xff]
    %v1217 = vld [vmem:[#allocation9 + $0x1fd0] sm:$0xff]
    %v1218 = vld [vmem:[#allocation9 + $0x1fd8] sm:$0xff]
    %v1219 = vld [vmem:[#allocation9 + $0x1fe0] sm:$0xff]
    %v1220 = vld [vmem:[#allocation9 + $0x1fe8] sm:$0xff]
    %v1221 = vld [vmem:[#allocation9 + $0x1ff0] sm:$0xff]
    %v1222 = vld [vmem:[#allocation9 + $0x1ff8] sm:$0xff]
    %v1223 = vsel %vm189, %v172, %v170
    %v1224 = vsel %vm189, %v173, %v171
    %1227 = vmatpush.msra.mxu0 %v679
    %1228 = vmatpush.msra.mxu0 %v647
    %1229 = vmatpush.msra.mxu0 %v615
    %1230 = vmatpush.msra.mxu0 %v583
    %1231 = vmatpush.msra.mxu0 %v551
    %1232 = vmatpush.msra.mxu0 %v519
    %1233 = vmatpush.msra.mxu0 %v487
    %1234 = vmatpush.msra.mxu0 %v455
    %1235 = vmatpush.msra.mxu0 %v423
    %1236 = vmatpush.msra.mxu0 %v391
    %1237 = vmatpush.msra.mxu0 %v359
    %1238 = vmatpush.msra.mxu0 %v327
    %1239 = vmatpush.msra.mxu0 %v295
    %1240 = vmatpush.msra.mxu0 %v263
    %1241 = vmatpush.msra.mxu0 %v231
    %1242 = vmatpush.msra.mxu0 %v199
    %1243 = vmatmul.f32.gmra.mxu0 %v1223
    %v1244 = vpop.f32.mrf.mxu0
    %v1245 = vadd.f32 0.0, %v1244
    %1246 = vdwg.mxu0
    %1247 = vmatpush.msra.mxu0 %v1191
    %1248 = vmatpush.msra.mxu0 %v1159
    %1249 = vmatpush.msra.mxu0 %v1127
    %1250 = vmatpush.msra.mxu0 %v1095
    %1251 = vmatpush.msra.mxu0 %v1063
    %1252 = vmatpush.msra.mxu0 %v1031
    %1253 = vmatpush.msra.mxu0 %v999
    %1254 = vmatpush.msra.mxu0 %v967
    %1255 = vmatpush.msra.mxu0 %v935
    %1256 = vmatpush.msra.mxu0 %v903
    %1257 = vmatpush.msra.mxu0 %v871
    %1258 = vmatpush.msra.mxu0 %v839
    %1259 = vmatpush.msra.mxu0 %v807
    %1260 = vmatpush.msra.mxu0 %v775
    %1261 = vmatpush.msra.mxu0 %v743
    %1262 = vmatpush.msra.mxu0 %v711
    %1263 = vmatmul.f32.gmra.mxu0 %v1224
    %v1264 = vpop.f32.mrf.mxu0
    %v1265 = vadd.f32 %v1245, %v1264
    %1266 = vdwg.mxu0
    %1267 = vmatpush.msra.mxu0 %v680
    %1268 = vmatpush.msra.mxu0 %v648
    %1269 = vmatpush.msra.mxu0 %v616
    %1270 = vmatpush.msra.mxu0 %v584
    %1271 = vmatpush.msra.mxu0 %v552
    %1272 = vmatpush.msra.mxu0 %v520
    %1273 = vmatpush.msra.mxu0 %v488
    %1274 = vmatpush.msra.mxu0 %v456
    %1275 = vmatpush.msra.mxu0 %v424
    %1276 = vmatpush.msra.mxu0 %v392
    %1277 = vmatpush.msra.mxu0 %v360
    %1278 = vmatpush.msra.mxu0 %v328
    %1279 = vmatpush.msra.mxu0 %v296
    %1280 = vmatpush.msra.mxu0 %v264
    %1281 = vmatpush.msra.mxu0 %v232
    %1282 = vmatpush.msra.mxu0 %v200
    %1283 = vmatmul.f32.gmra.mxu0 %v1223
    %v1284 = vpop.f32.mrf.mxu0
    %v1285 = vadd.f32 0.0, %v1284
    %1286 = vdwg.mxu0
    %1287 = vmatpush.msra.mxu0 %v1192
    %1288 = vmatpush.msra.mxu0 %v1160
    %1289 = vmatpush.msra.mxu0 %v1128
    %1290 = vmatpush.msra.mxu0 %v1096
    %1291 = vmatpush.msra.mxu0 %v1064
    %1292 = vmatpush.msra.mxu0 %v1032
    %1293 = vmatpush.msra.mxu0 %v1000
    %1294 = vmatpush.msra.mxu0 %v968
    %1295 = vmatpush.msra.mxu0 %v936
    %1296 = vmatpush.msra.mxu0 %v904
    %1297 = vmatpush.msra.mxu0 %v872
    %1298 = vmatpush.msra.mxu0 %v840
    %1299 = vmatpush.msra.mxu0 %v808
    %1300 = vmatpush.msra.mxu0 %v776
    %1301 = vmatpush.msra.mxu0 %v744
    %1302 = vmatpush.msra.mxu0 %v712
    %1303 = vmatmul.f32.gmra.mxu0 %v1224
    %v1304 = vpop.f32.mrf.mxu0
    %v1305 = vadd.f32 %v1285, %v1304
    %1306 = vdwg.mxu0
    %1307 = vmatpush.msra.mxu0 %v681
    %1308 = vmatpush.msra.mxu0 %v649
    %1309 = vmatpush.msra.mxu0 %v617
    %1310 = vmatpush.msra.mxu0 %v585
    %1311 = vmatpush.msra.mxu0 %v553
    %1312 = vmatpush.msra.mxu0 %v521
    %1313 = vmatpush.msra.mxu0 %v489
    %1314 = vmatpush.msra.mxu0 %v457
    %1315 = vmatpush.msra.mxu0 %v425
    %1316 = vmatpush.msra.mxu0 %v393
    %1317 = vmatpush.msra.mxu0 %v361
    %1318 = vmatpush.msra.mxu0 %v329
    %1319 = vmatpush.msra.mxu0 %v297
    %1320 = vmatpush.msra.mxu0 %v265
    %1321 = vmatpush.msra.mxu0 %v233
    %1322 = vmatpush.msra.mxu0 %v201
    %1323 = vmatmul.f32.gmra.mxu0 %v1223
    %v1324 = vpop.f32.mrf.mxu0
    %v1325 = vadd.f32 0.0, %v1324
    %1326 = vdwg.mxu0
    %1327 = vmatpush.msra.mxu0 %v1193
    %1328 = vmatpush.msra.mxu0 %v1161
    %1329 = vmatpush.msra.mxu0 %v1129
    %1330 = vmatpush.msra.mxu0 %v1097
    %1331 = vmatpush.msra.mxu0 %v1065
    %1332 = vmatpush.msra.mxu0 %v1033
    %1333 = vmatpush.msra.mxu0 %v1001
    %1334 = vmatpush.msra.mxu0 %v969
    %1335 = vmatpush.msra.mxu0 %v937
    %1336 = vmatpush.msra.mxu0 %v905
    %1337 = vmatpush.msra.mxu0 %v873
    %1338 = vmatpush.msra.mxu0 %v841
    %1339 = vmatpush.msra.mxu0 %v809
    %1340 = vmatpush.msra.mxu0 %v777
    %1341 = vmatpush.msra.mxu0 %v745
    %1342 = vmatpush.msra.mxu0 %v713
    %1343 = vmatmul.f32.gmra.mxu0 %v1224
    %v1344 = vpop.f32.mrf.mxu0
    %v1345 = vadd.f32 %v1325, %v1344
    %1346 = vdwg.mxu0
    %1347 = vmatpush.msra.mxu0 %v682
    %1348 = vmatpush.msra.mxu0 %v650
    %1349 = vmatpush.msra.mxu0 %v618
    %1350 = vmatpush.msra.mxu0 %v586
    %1351 = vmatpush.msra.mxu0 %v554
    %1352 = vmatpush.msra.mxu0 %v522
    %1353 = vmatpush.msra.mxu0 %v490
    %1354 = vmatpush.msra.mxu0 %v458
    %1355 = vmatpush.msra.mxu0 %v426
    %1356 = vmatpush.msra.mxu0 %v394
    %1357 = vmatpush.msra.mxu0 %v362
    %1358 = vmatpush.msra.mxu0 %v330
    %1359 = vmatpush.msra.mxu0 %v298
    %1360 = vmatpush.msra.mxu0 %v266
    %1361 = vmatpush.msra.mxu0 %v234
    %1362 = vmatpush.msra.mxu0 %v202
    %1363 = vmatmul.f32.gmra.mxu0 %v1223
    %v1364 = vpop.f32.mrf.mxu0
    %v1365 = vadd.f32 0.0, %v1364
    %1366 = vdwg.mxu0
    %1367 = vmatpush.msra.mxu0 %v1194
    %1368 = vmatpush.msra.mxu0 %v1162
    %1369 = vmatpush.msra.mxu0 %v1130
    %1370 = vmatpush.msra.mxu0 %v1098
    %1371 = vmatpush.msra.mxu0 %v1066
    %1372 = vmatpush.msra.mxu0 %v1034
    %1373 = vmatpush.msra.mxu0 %v1002
    %1374 = vmatpush.msra.mxu0 %v970
    %1375 = vmatpush.msra.mxu0 %v938
    %1376 = vmatpush.msra.mxu0 %v906
    %1377 = vmatpush.msra.mxu0 %v874
    %1378 = vmatpush.msra.mxu0 %v842
    %1379 = vmatpush.msra.mxu0 %v810
    %1380 = vmatpush.msra.mxu0 %v778
    %1381 = vmatpush.msra.mxu0 %v746
    %1382 = vmatpush.msra.mxu0 %v714
    %1383 = vmatmul.f32.gmra.mxu0 %v1224
    %v1384 = vpop.f32.mrf.mxu0
    %v1385 = vadd.f32 %v1365, %v1384
    %1386 = vdwg.mxu0
    %1387 = vmatpush.msra.mxu0 %v683
    %1388 = vmatpush.msra.mxu0 %v651
    %1389 = vmatpush.msra.mxu0 %v619
    %1390 = vmatpush.msra.mxu0 %v587
    %1391 = vmatpush.msra.mxu0 %v555
    %1392 = vmatpush.msra.mxu0 %v523
    %1393 = vmatpush.msra.mxu0 %v491
    %1394 = vmatpush.msra.mxu0 %v459
    %1395 = vmatpush.msra.mxu0 %v427
    %1396 = vmatpush.msra.mxu0 %v395
    %1397 = vmatpush.msra.mxu0 %v363
    %1398 = vmatpush.msra.mxu0 %v331
    %1399 = vmatpush.msra.mxu0 %v299
    %1400 = vmatpush.msra.mxu0 %v267
    %1401 = vmatpush.msra.mxu0 %v235
    %1402 = vmatpush.msra.mxu0 %v203
    %1403 = vmatmul.f32.gmra.mxu0 %v1223
    %v1404 = vpop.f32.mrf.mxu0
    %v1405 = vadd.f32 0.0, %v1404
    %1406 = vdwg.mxu0
    %1407 = vmatpush.msra.mxu0 %v1195
    %1408 = vmatpush.msra.mxu0 %v1163
    %1409 = vmatpush.msra.mxu0 %v1131
    %1410 = vmatpush.msra.mxu0 %v1099
    %1411 = vmatpush.msra.mxu0 %v1067
    %1412 = vmatpush.msra.mxu0 %v1035
    %1413 = vmatpush.msra.mxu0 %v1003
    %1414 = vmatpush.msra.mxu0 %v971
    %1415 = vmatpush.msra.mxu0 %v939
    %1416 = vmatpush.msra.mxu0 %v907
    %1417 = vmatpush.msra.mxu0 %v875
    %1418 = vmatpush.msra.mxu0 %v843
    %1419 = vmatpush.msra.mxu0 %v811
    %1420 = vmatpush.msra.mxu0 %v779
    %1421 = vmatpush.msra.mxu0 %v747
    %1422 = vmatpush.msra.mxu0 %v715
    %1423 = vmatmul.f32.gmra.mxu0 %v1224
    %v1424 = vpop.f32.mrf.mxu0
    %v1425 = vadd.f32 %v1405, %v1424
    %1426 = vdwg.mxu0
    %1427 = vmatpush.msra.mxu0 %v684
    %1428 = vmatpush.msra.mxu0 %v652
    %1429 = vmatpush.msra.mxu0 %v620
    %1430 = vmatpush.msra.mxu0 %v588
    %1431 = vmatpush.msra.mxu0 %v556
    %1432 = vmatpush.msra.mxu0 %v524
    %1433 = vmatpush.msra.mxu0 %v492
    %1434 = vmatpush.msra.mxu0 %v460
    %1435 = vmatpush.msra.mxu0 %v428
    %1436 = vmatpush.msra.mxu0 %v396
    %1437 = vmatpush.msra.mxu0 %v364
    %1438 = vmatpush.msra.mxu0 %v332
    %1439 = vmatpush.msra.mxu0 %v300
    %1440 = vmatpush.msra.mxu0 %v268
    %1441 = vmatpush.msra.mxu0 %v236
    %1442 = vmatpush.msra.mxu0 %v204
    %1443 = vmatmul.f32.gmra.mxu0 %v1223
    %v1444 = vpop.f32.mrf.mxu0
    %v1445 = vadd.f32 0.0, %v1444
    %1446 = vdwg.mxu0
    %1447 = vmatpush.msra.mxu0 %v1196
    %1448 = vmatpush.msra.mxu0 %v1164
    %1449 = vmatpush.msra.mxu0 %v1132
    %1450 = vmatpush.msra.mxu0 %v1100
    %1451 = vmatpush.msra.mxu0 %v1068
    %1452 = vmatpush.msra.mxu0 %v1036
    %1453 = vmatpush.msra.mxu0 %v1004
    %1454 = vmatpush.msra.mxu0 %v972
    %1455 = vmatpush.msra.mxu0 %v940
    %1456 = vmatpush.msra.mxu0 %v908
    %1457 = vmatpush.msra.mxu0 %v876
    %1458 = vmatpush.msra.mxu0 %v844
    %1459 = vmatpush.msra.mxu0 %v812
    %1460 = vmatpush.msra.mxu0 %v780
    %1461 = vmatpush.msra.mxu0 %v748
    %1462 = vmatpush.msra.mxu0 %v716
    %1463 = vmatmul.f32.gmra.mxu0 %v1224
    %v1464 = vpop.f32.mrf.mxu0
    %v1465 = vadd.f32 %v1445, %v1464
    %1466 = vdwg.mxu0
    %1467 = vmatpush.msra.mxu0 %v685
    %1468 = vmatpush.msra.mxu0 %v653
    %1469 = vmatpush.msra.mxu0 %v621
    %1470 = vmatpush.msra.mxu0 %v589
    %1471 = vmatpush.msra.mxu0 %v557
    %1472 = vmatpush.msra.mxu0 %v525
    %1473 = vmatpush.msra.mxu0 %v493
    %1474 = vmatpush.msra.mxu0 %v461
    %1475 = vmatpush.msra.mxu0 %v429
    %1476 = vmatpush.msra.mxu0 %v397
    %1477 = vmatpush.msra.mxu0 %v365
    %1478 = vmatpush.msra.mxu0 %v333
    %1479 = vmatpush.msra.mxu0 %v301
    %1480 = vmatpush.msra.mxu0 %v269
    %1481 = vmatpush.msra.mxu0 %v237
    %1482 = vmatpush.msra.mxu0 %v205
    %1483 = vmatmul.f32.gmra.mxu0 %v1223
    %v1484 = vpop.f32.mrf.mxu0
    %v1485 = vadd.f32 0.0, %v1484
    %1486 = vdwg.mxu0
    %1487 = vmatpush.msra.mxu0 %v1197
    %1488 = vmatpush.msra.mxu0 %v1165
    %1489 = vmatpush.msra.mxu0 %v1133
    %1490 = vmatpush.msra.mxu0 %v1101
    %1491 = vmatpush.msra.mxu0 %v1069
    %1492 = vmatpush.msra.mxu0 %v1037
    %1493 = vmatpush.msra.mxu0 %v1005
    %1494 = vmatpush.msra.mxu0 %v973
    %1495 = vmatpush.msra.mxu0 %v941
    %1496 = vmatpush.msra.mxu0 %v909
    %1497 = vmatpush.msra.mxu0 %v877
    %1498 = vmatpush.msra.mxu0 %v845
    %1499 = vmatpush.msra.mxu0 %v813
    %1500 = vmatpush.msra.mxu0 %v781
    %1501 = vmatpush.msra.mxu0 %v749
    %1502 = vmatpush.msra.mxu0 %v717
    %1503 = vmatmul.f32.gmra.mxu0 %v1224
    %v1504 = vpop.f32.mrf.mxu0
    %v1505 = vadd.f32 %v1485, %v1504
    %1506 = vdwg.mxu0
    %1507 = vmatpush.msra.mxu0 %v686
    %1508 = vmatpush.msra.mxu0 %v654
    %1509 = vmatpush.msra.mxu0 %v622
    %1510 = vmatpush.msra.mxu0 %v590
    %1511 = vmatpush.msra.mxu0 %v558
    %1512 = vmatpush.msra.mxu0 %v526
    %1513 = vmatpush.msra.mxu0 %v494
    %1514 = vmatpush.msra.mxu0 %v462
    %1515 = vmatpush.msra.mxu0 %v430
    %1516 = vmatpush.msra.mxu0 %v398
    %1517 = vmatpush.msra.mxu0 %v366
    %1518 = vmatpush.msra.mxu0 %v334
    %1519 = vmatpush.msra.mxu0 %v302
    %1520 = vmatpush.msra.mxu0 %v270
    %1521 = vmatpush.msra.mxu0 %v238
    %1522 = vmatpush.msra.mxu0 %v206
    %1523 = vmatmul.f32.gmra.mxu0 %v1223
    %v1524 = vpop.f32.mrf.mxu0
    %v1525 = vadd.f32 0.0, %v1524
    %1526 = vdwg.mxu0
    %1527 = vmatpush.msra.mxu0 %v1198
    %1528 = vmatpush.msra.mxu0 %v1166
    %1529 = vmatpush.msra.mxu0 %v1134
    %1530 = vmatpush.msra.mxu0 %v1102
    %1531 = vmatpush.msra.mxu0 %v1070
    %1532 = vmatpush.msra.mxu0 %v1038
    %1533 = vmatpush.msra.mxu0 %v1006
    %1534 = vmatpush.msra.mxu0 %v974
    %1535 = vmatpush.msra.mxu0 %v942
    %1536 = vmatpush.msra.mxu0 %v910
    %1537 = vmatpush.msra.mxu0 %v878
    %1538 = vmatpush.msra.mxu0 %v846
    %1539 = vmatpush.msra.mxu0 %v814
    %1540 = vmatpush.msra.mxu0 %v782
    %1541 = vmatpush.msra.mxu0 %v750
    %1542 = vmatpush.msra.mxu0 %v718
    %1543 = vmatmul.f32.gmra.mxu0 %v1224
    %v1544 = vpop.f32.mrf.mxu0
    %v1545 = vadd.f32 %v1525, %v1544
    %1546 = vdwg.mxu0
    %1547 = vmatpush.msra.mxu0 %v687
    %1548 = vmatpush.msra.mxu0 %v655
    %1549 = vmatpush.msra.mxu0 %v623
    %1550 = vmatpush.msra.mxu0 %v591
    %1551 = vmatpush.msra.mxu0 %v559
    %1552 = vmatpush.msra.mxu0 %v527
    %1553 = vmatpush.msra.mxu0 %v495
    %1554 = vmatpush.msra.mxu0 %v463
    %1555 = vmatpush.msra.mxu0 %v431
    %1556 = vmatpush.msra.mxu0 %v399
    %1557 = vmatpush.msra.mxu0 %v367
    %1558 = vmatpush.msra.mxu0 %v335
    %1559 = vmatpush.msra.mxu0 %v303
    %1560 = vmatpush.msra.mxu0 %v271
    %1561 = vmatpush.msra.mxu0 %v239
    %1562 = vmatpush.msra.mxu0 %v207
    %1563 = vmatmul.f32.gmra.mxu0 %v1223
    %v1564 = vpop.f32.mrf.mxu0
    %v1565 = vadd.f32 0.0, %v1564
    %1566 = vdwg.mxu0
    %1567 = vmatpush.msra.mxu0 %v1199
    %1568 = vmatpush.msra.mxu0 %v1167
    %1569 = vmatpush.msra.mxu0 %v1135
    %1570 = vmatpush.msra.mxu0 %v1103
    %1571 = vmatpush.msra.mxu0 %v1071
    %1572 = vmatpush.msra.mxu0 %v1039
    %1573 = vmatpush.msra.mxu0 %v1007
    %1574 = vmatpush.msra.mxu0 %v975
    %1575 = vmatpush.msra.mxu0 %v943
    %1576 = vmatpush.msra.mxu0 %v911
    %1577 = vmatpush.msra.mxu0 %v879
    %1578 = vmatpush.msra.mxu0 %v847
    %1579 = vmatpush.msra.mxu0 %v815
    %1580 = vmatpush.msra.mxu0 %v783
    %1581 = vmatpush.msra.mxu0 %v751
    %1582 = vmatpush.msra.mxu0 %v719
    %1583 = vmatmul.f32.gmra.mxu0 %v1224
    %v1584 = vpop.f32.mrf.mxu0
    %v1585 = vadd.f32 %v1565, %v1584
    %1586 = vdwg.mxu0
    %1587 = vmatpush.msra.mxu0 %v688
    %1588 = vmatpush.msra.mxu0 %v656
    %1589 = vmatpush.msra.mxu0 %v624
    %1590 = vmatpush.msra.mxu0 %v592
    %1591 = vmatpush.msra.mxu0 %v560
    %1592 = vmatpush.msra.mxu0 %v528
    %1593 = vmatpush.msra.mxu0 %v496
    %1594 = vmatpush.msra.mxu0 %v464
    %1595 = vmatpush.msra.mxu0 %v432
    %1596 = vmatpush.msra.mxu0 %v400
    %1597 = vmatpush.msra.mxu0 %v368
    %1598 = vmatpush.msra.mxu0 %v336
    %1599 = vmatpush.msra.mxu0 %v304
    %1600 = vmatpush.msra.mxu0 %v272
    %1601 = vmatpush.msra.mxu0 %v240
    %1602 = vmatpush.msra.mxu0 %v208
    %1603 = vmatmul.f32.gmra.mxu0 %v1223
    %v1604 = vpop.f32.mrf.mxu0
    %v1605 = vadd.f32 0.0, %v1604
    %1606 = vdwg.mxu0
    %1607 = vmatpush.msra.mxu0 %v1200
    %1608 = vmatpush.msra.mxu0 %v1168
    %1609 = vmatpush.msra.mxu0 %v1136
    %1610 = vmatpush.msra.mxu0 %v1104
    %1611 = vmatpush.msra.mxu0 %v1072
    %1612 = vmatpush.msra.mxu0 %v1040
    %1613 = vmatpush.msra.mxu0 %v1008
    %1614 = vmatpush.msra.mxu0 %v976
    %1615 = vmatpush.msra.mxu0 %v944
    %1616 = vmatpush.msra.mxu0 %v912
    %1617 = vmatpush.msra.mxu0 %v880
    %1618 = vmatpush.msra.mxu0 %v848
    %1619 = vmatpush.msra.mxu0 %v816
    %1620 = vmatpush.msra.mxu0 %v784
    %1621 = vmatpush.msra.mxu0 %v752
    %1622 = vmatpush.msra.mxu0 %v720
    %1623 = vmatmul.f32.gmra.mxu0 %v1224
    %v1624 = vpop.f32.mrf.mxu0
    %v1625 = vadd.f32 %v1605, %v1624
    %1626 = vdwg.mxu0
    %1627 = vmatpush.msra.mxu0 %v689
    %1628 = vmatpush.msra.mxu0 %v657
    %1629 = vmatpush.msra.mxu0 %v625
    %1630 = vmatpush.msra.mxu0 %v593
    %1631 = vmatpush.msra.mxu0 %v561
    %1632 = vmatpush.msra.mxu0 %v529
    %1633 = vmatpush.msra.mxu0 %v497
    %1634 = vmatpush.msra.mxu0 %v465
    %1635 = vmatpush.msra.mxu0 %v433
    %1636 = vmatpush.msra.mxu0 %v401
    %1637 = vmatpush.msra.mxu0 %v369
    %1638 = vmatpush.msra.mxu0 %v337
    %1639 = vmatpush.msra.mxu0 %v305
    %1640 = vmatpush.msra.mxu0 %v273
    %1641 = vmatpush.msra.mxu0 %v241
    %1642 = vmatpush.msra.mxu0 %v209
    %1643 = vmatmul.f32.gmra.mxu0 %v1223
    %v1644 = vpop.f32.mrf.mxu0
    %v1645 = vadd.f32 0.0, %v1644
    %1646 = vdwg.mxu0
    %1647 = vmatpush.msra.mxu0 %v1201
    %1648 = vmatpush.msra.mxu0 %v1169
    %1649 = vmatpush.msra.mxu0 %v1137
    %1650 = vmatpush.msra.mxu0 %v1105
    %1651 = vmatpush.msra.mxu0 %v1073
    %1652 = vmatpush.msra.mxu0 %v1041
    %1653 = vmatpush.msra.mxu0 %v1009
    %1654 = vmatpush.msra.mxu0 %v977
    %1655 = vmatpush.msra.mxu0 %v945
    %1656 = vmatpush.msra.mxu0 %v913
    %1657 = vmatpush.msra.mxu0 %v881
    %1658 = vmatpush.msra.mxu0 %v849
    %1659 = vmatpush.msra.mxu0 %v817
    %1660 = vmatpush.msra.mxu0 %v785
    %1661 = vmatpush.msra.mxu0 %v753
    %1662 = vmatpush.msra.mxu0 %v721
    %1663 = vmatmul.f32.gmra.mxu0 %v1224
    %v1664 = vpop.f32.mrf.mxu0
    %v1665 = vadd.f32 %v1645, %v1664
    %1666 = vdwg.mxu0
    %1667 = vmatpush.msra.mxu0 %v690
    %1668 = vmatpush.msra.mxu0 %v658
    %1669 = vmatpush.msra.mxu0 %v626
    %1670 = vmatpush.msra.mxu0 %v594
    %1671 = vmatpush.msra.mxu0 %v562
    %1672 = vmatpush.msra.mxu0 %v530
    %1673 = vmatpush.msra.mxu0 %v498
    %1674 = vmatpush.msra.mxu0 %v466
    %1675 = vmatpush.msra.mxu0 %v434
    %1676 = vmatpush.msra.mxu0 %v402
    %1677 = vmatpush.msra.mxu0 %v370
    %1678 = vmatpush.msra.mxu0 %v338
    %1679 = vmatpush.msra.mxu0 %v306
    %1680 = vmatpush.msra.mxu0 %v274
    %1681 = vmatpush.msra.mxu0 %v242
    %1682 = vmatpush.msra.mxu0 %v210
    %1683 = vmatmul.f32.gmra.mxu0 %v1223
    %v1684 = vpop.f32.mrf.mxu0
    %v1685 = vadd.f32 0.0, %v1684
    %1686 = vdwg.mxu0
    %1687 = vmatpush.msra.mxu0 %v1202
    %1688 = vmatpush.msra.mxu0 %v1170
    %1689 = vmatpush.msra.mxu0 %v1138
    %1690 = vmatpush.msra.mxu0 %v1106
    %1691 = vmatpush.msra.mxu0 %v1074
    %1692 = vmatpush.msra.mxu0 %v1042
    %1693 = vmatpush.msra.mxu0 %v1010
    %1694 = vmatpush.msra.mxu0 %v978
    %1695 = vmatpush.msra.mxu0 %v946
    %1696 = vmatpush.msra.mxu0 %v914
    %1697 = vmatpush.msra.mxu0 %v882
    %1698 = vmatpush.msra.mxu0 %v850
    %1699 = vmatpush.msra.mxu0 %v818
    %1700 = vmatpush.msra.mxu0 %v786
    %1701 = vmatpush.msra.mxu0 %v754
    %1702 = vmatpush.msra.mxu0 %v722
    %1703 = vmatmul.f32.gmra.mxu0 %v1224
    %v1704 = vpop.f32.mrf.mxu0
    %v1705 = vadd.f32 %v1685, %v1704
    %1706 = vdwg.mxu0
    %1707 = vmatpush.msra.mxu0 %v691
    %1708 = vmatpush.msra.mxu0 %v659
    %1709 = vmatpush.msra.mxu0 %v627
    %1710 = vmatpush.msra.mxu0 %v595
    %1711 = vmatpush.msra.mxu0 %v563
    %1712 = vmatpush.msra.mxu0 %v531
    %1713 = vmatpush.msra.mxu0 %v499
    %1714 = vmatpush.msra.mxu0 %v467
    %1715 = vmatpush.msra.mxu0 %v435
    %1716 = vmatpush.msra.mxu0 %v403
    %1717 = vmatpush.msra.mxu0 %v371
    %1718 = vmatpush.msra.mxu0 %v339
    %1719 = vmatpush.msra.mxu0 %v307
    %1720 = vmatpush.msra.mxu0 %v275
    %1721 = vmatpush.msra.mxu0 %v243
    %1722 = vmatpush.msra.mxu0 %v211
    %1723 = vmatmul.f32.gmra.mxu0 %v1223
    %v1724 = vpop.f32.mrf.mxu0
    %v1725 = vadd.f32 0.0, %v1724
    %1726 = vdwg.mxu0
    %1727 = vmatpush.msra.mxu0 %v1203
    %1728 = vmatpush.msra.mxu0 %v1171
    %1729 = vmatpush.msra.mxu0 %v1139
    %1730 = vmatpush.msra.mxu0 %v1107
    %1731 = vmatpush.msra.mxu0 %v1075
    %1732 = vmatpush.msra.mxu0 %v1043
    %1733 = vmatpush.msra.mxu0 %v1011
    %1734 = vmatpush.msra.mxu0 %v979
    %1735 = vmatpush.msra.mxu0 %v947
    %1736 = vmatpush.msra.mxu0 %v915
    %1737 = vmatpush.msra.mxu0 %v883
    %1738 = vmatpush.msra.mxu0 %v851
    %1739 = vmatpush.msra.mxu0 %v819
    %1740 = vmatpush.msra.mxu0 %v787
    %1741 = vmatpush.msra.mxu0 %v755
    %1742 = vmatpush.msra.mxu0 %v723
    %1743 = vmatmul.f32.gmra.mxu0 %v1224
    %v1744 = vpop.f32.mrf.mxu0
    %v1745 = vadd.f32 %v1725, %v1744
    %1746 = vdwg.mxu0
    %1747 = vmatpush.msra.mxu0 %v692
    %1748 = vmatpush.msra.mxu0 %v660
    %1749 = vmatpush.msra.mxu0 %v628
    %1750 = vmatpush.msra.mxu0 %v596
    %1751 = vmatpush.msra.mxu0 %v564
    %1752 = vmatpush.msra.mxu0 %v532
    %1753 = vmatpush.msra.mxu0 %v500
    %1754 = vmatpush.msra.mxu0 %v468
    %1755 = vmatpush.msra.mxu0 %v436
    %1756 = vmatpush.msra.mxu0 %v404
    %1757 = vmatpush.msra.mxu0 %v372
    %1758 = vmatpush.msra.mxu0 %v340
    %1759 = vmatpush.msra.mxu0 %v308
    %1760 = vmatpush.msra.mxu0 %v276
    %1761 = vmatpush.msra.mxu0 %v244
    %1762 = vmatpush.msra.mxu0 %v212
    %1763 = vmatmul.f32.gmra.mxu0 %v1223
    %v1764 = vpop.f32.mrf.mxu0
    %v1765 = vadd.f32 0.0, %v1764
    %1766 = vdwg.mxu0
    %1767 = vmatpush.msra.mxu0 %v1204
    %1768 = vmatpush.msra.mxu0 %v1172
    %1769 = vmatpush.msra.mxu0 %v1140
    %1770 = vmatpush.msra.mxu0 %v1108
    %1771 = vmatpush.msra.mxu0 %v1076
    %1772 = vmatpush.msra.mxu0 %v1044
    %1773 = vmatpush.msra.mxu0 %v1012
    %1774 = vmatpush.msra.mxu0 %v980
    %1775 = vmatpush.msra.mxu0 %v948
    %1776 = vmatpush.msra.mxu0 %v916
    %1777 = vmatpush.msra.mxu0 %v884
    %1778 = vmatpush.msra.mxu0 %v852
    %1779 = vmatpush.msra.mxu0 %v820
    %1780 = vmatpush.msra.mxu0 %v788
    %1781 = vmatpush.msra.mxu0 %v756
    %1782 = vmatpush.msra.mxu0 %v724
    %1783 = vmatmul.f32.gmra.mxu0 %v1224
    %v1784 = vpop.f32.mrf.mxu0
    %v1785 = vadd.f32 %v1765, %v1784
    %1786 = vdwg.mxu0
    %1787 = vmatpush.msra.mxu0 %v693
    %1788 = vmatpush.msra.mxu0 %v661
    %1789 = vmatpush.msra.mxu0 %v629
    %1790 = vmatpush.msra.mxu0 %v597
    %1791 = vmatpush.msra.mxu0 %v565
    %1792 = vmatpush.msra.mxu0 %v533
    %1793 = vmatpush.msra.mxu0 %v501
    %1794 = vmatpush.msra.mxu0 %v469
    %1795 = vmatpush.msra.mxu0 %v437
    %1796 = vmatpush.msra.mxu0 %v405
    %1797 = vmatpush.msra.mxu0 %v373
    %1798 = vmatpush.msra.mxu0 %v341
    %1799 = vmatpush.msra.mxu0 %v309
    %1800 = vmatpush.msra.mxu0 %v277
    %1801 = vmatpush.msra.mxu0 %v245
    %1802 = vmatpush.msra.mxu0 %v213
    %1803 = vmatmul.f32.gmra.mxu0 %v1223
    %v1804 = vpop.f32.mrf.mxu0
    %v1805 = vadd.f32 0.0, %v1804
    %1806 = vdwg.mxu0
    %1807 = vmatpush.msra.mxu0 %v1205
    %1808 = vmatpush.msra.mxu0 %v1173
    %1809 = vmatpush.msra.mxu0 %v1141
    %1810 = vmatpush.msra.mxu0 %v1109
    %1811 = vmatpush.msra.mxu0 %v1077
    %1812 = vmatpush.msra.mxu0 %v1045
    %1813 = vmatpush.msra.mxu0 %v1013
    %1814 = vmatpush.msra.mxu0 %v981
    %1815 = vmatpush.msra.mxu0 %v949
    %1816 = vmatpush.msra.mxu0 %v917
    %1817 = vmatpush.msra.mxu0 %v885
    %1818 = vmatpush.msra.mxu0 %v853
    %1819 = vmatpush.msra.mxu0 %v821
    %1820 = vmatpush.msra.mxu0 %v789
    %1821 = vmatpush.msra.mxu0 %v757
    %1822 = vmatpush.msra.mxu0 %v725
    %1823 = vmatmul.f32.gmra.mxu0 %v1224
    %v1824 = vpop.f32.mrf.mxu0
    %v1825 = vadd.f32 %v1805, %v1824
    %1826 = vdwg.mxu0
    %1827 = vmatpush.msra.mxu0 %v694
    %1828 = vmatpush.msra.mxu0 %v662
    %1829 = vmatpush.msra.mxu0 %v630
    %1830 = vmatpush.msra.mxu0 %v598
    %1831 = vmatpush.msra.mxu0 %v566
    %1832 = vmatpush.msra.mxu0 %v534
    %1833 = vmatpush.msra.mxu0 %v502
    %1834 = vmatpush.msra.mxu0 %v470
    %1835 = vmatpush.msra.mxu0 %v438
    %1836 = vmatpush.msra.mxu0 %v406
    %1837 = vmatpush.msra.mxu0 %v374
    %1838 = vmatpush.msra.mxu0 %v342
    %1839 = vmatpush.msra.mxu0 %v310
    %1840 = vmatpush.msra.mxu0 %v278
    %1841 = vmatpush.msra.mxu0 %v246
    %1842 = vmatpush.msra.mxu0 %v214
    %1843 = vmatmul.f32.gmra.mxu0 %v1223
    %v1844 = vpop.f32.mrf.mxu0
    %v1845 = vadd.f32 0.0, %v1844
    %1846 = vdwg.mxu0
    %1847 = vmatpush.msra.mxu0 %v1206
    %1848 = vmatpush.msra.mxu0 %v1174
    %1849 = vmatpush.msra.mxu0 %v1142
    %1850 = vmatpush.msra.mxu0 %v1110
    %1851 = vmatpush.msra.mxu0 %v1078
    %1852 = vmatpush.msra.mxu0 %v1046
    %1853 = vmatpush.msra.mxu0 %v1014
    %1854 = vmatpush.msra.mxu0 %v982
    %1855 = vmatpush.msra.mxu0 %v950
    %1856 = vmatpush.msra.mxu0 %v918
    %1857 = vmatpush.msra.mxu0 %v886
    %1858 = vmatpush.msra.mxu0 %v854
    %1859 = vmatpush.msra.mxu0 %v822
    %1860 = vmatpush.msra.mxu0 %v790
    %1861 = vmatpush.msra.mxu0 %v758
    %1862 = vmatpush.msra.mxu0 %v726
    %1863 = vmatmul.f32.gmra.mxu0 %v1224
    %v1864 = vpop.f32.mrf.mxu0
    %v1865 = vadd.f32 %v1845, %v1864
    %1866 = vdwg.mxu0
    %1867 = vmatpush.msra.mxu0 %v695
    %1868 = vmatpush.msra.mxu0 %v663
    %1869 = vmatpush.msra.mxu0 %v631
    %1870 = vmatpush.msra.mxu0 %v599
    %1871 = vmatpush.msra.mxu0 %v567
    %1872 = vmatpush.msra.mxu0 %v535
    %1873 = vmatpush.msra.mxu0 %v503
    %1874 = vmatpush.msra.mxu0 %v471
    %1875 = vmatpush.msra.mxu0 %v439
    %1876 = vmatpush.msra.mxu0 %v407
    %1877 = vmatpush.msra.mxu0 %v375
    %1878 = vmatpush.msra.mxu0 %v343
    %1879 = vmatpush.msra.mxu0 %v311
    %1880 = vmatpush.msra.mxu0 %v279
    %1881 = vmatpush.msra.mxu0 %v247
    %1882 = vmatpush.msra.mxu0 %v215
    %1883 = vmatmul.f32.gmra.mxu0 %v1223
    %v1884 = vpop.f32.mrf.mxu0
    %v1885 = vadd.f32 0.0, %v1884
    %1886 = vdwg.mxu0
    %1887 = vmatpush.msra.mxu0 %v1207
    %1888 = vmatpush.msra.mxu0 %v1175
    %1889 = vmatpush.msra.mxu0 %v1143
    %1890 = vmatpush.msra.mxu0 %v1111
    %1891 = vmatpush.msra.mxu0 %v1079
    %1892 = vmatpush.msra.mxu0 %v1047
    %1893 = vmatpush.msra.mxu0 %v1015
    %1894 = vmatpush.msra.mxu0 %v983
    %1895 = vmatpush.msra.mxu0 %v951
    %1896 = vmatpush.msra.mxu0 %v919
    %1897 = vmatpush.msra.mxu0 %v887
    %1898 = vmatpush.msra.mxu0 %v855
    %1899 = vmatpush.msra.mxu0 %v823
    %1900 = vmatpush.msra.mxu0 %v791
    %1901 = vmatpush.msra.mxu0 %v759
    %1902 = vmatpush.msra.mxu0 %v727
    %1903 = vmatmul.f32.gmra.mxu0 %v1224
    %v1904 = vpop.f32.mrf.mxu0
    %v1905 = vadd.f32 %v1885, %v1904
    %1906 = vdwg.mxu0
    %1907 = vmatpush.msra.mxu0 %v696
    %1908 = vmatpush.msra.mxu0 %v664
    %1909 = vmatpush.msra.mxu0 %v632
    %1910 = vmatpush.msra.mxu0 %v600
    %1911 = vmatpush.msra.mxu0 %v568
    %1912 = vmatpush.msra.mxu0 %v536
    %1913 = vmatpush.msra.mxu0 %v504
    %1914 = vmatpush.msra.mxu0 %v472
    %1915 = vmatpush.msra.mxu0 %v440
    %1916 = vmatpush.msra.mxu0 %v408
    %1917 = vmatpush.msra.mxu0 %v376
    %1918 = vmatpush.msra.mxu0 %v344
    %1919 = vmatpush.msra.mxu0 %v312
    %1920 = vmatpush.msra.mxu0 %v280
    %1921 = vmatpush.msra.mxu0 %v248
    %1922 = vmatpush.msra.mxu0 %v216
    %1923 = vmatmul.f32.gmra.mxu0 %v1223
    %v1924 = vpop.f32.mrf.mxu0
    %v1925 = vadd.f32 0.0, %v1924
    %1926 = vdwg.mxu0
    %1927 = vmatpush.msra.mxu0 %v1208
    %1928 = vmatpush.msra.mxu0 %v1176
    %1929 = vmatpush.msra.mxu0 %v1144
    %1930 = vmatpush.msra.mxu0 %v1112
    %1931 = vmatpush.msra.mxu0 %v1080
    %1932 = vmatpush.msra.mxu0 %v1048
    %1933 = vmatpush.msra.mxu0 %v1016
    %1934 = vmatpush.msra.mxu0 %v984
    %1935 = vmatpush.msra.mxu0 %v952
    %1936 = vmatpush.msra.mxu0 %v920
    %1937 = vmatpush.msra.mxu0 %v888
    %1938 = vmatpush.msra.mxu0 %v856
    %1939 = vmatpush.msra.mxu0 %v824
    %1940 = vmatpush.msra.mxu0 %v792
    %1941 = vmatpush.msra.mxu0 %v760
    %1942 = vmatpush.msra.mxu0 %v728
    %1943 = vmatmul.f32.gmra.mxu0 %v1224
    %v1944 = vpop.f32.mrf.mxu0
    %v1945 = vadd.f32 %v1925, %v1944
    %1946 = vdwg.mxu0
    %1947 = vmatpush.msra.mxu0 %v697
    %1948 = vmatpush.msra.mxu0 %v665
    %1949 = vmatpush.msra.mxu0 %v633
    %1950 = vmatpush.msra.mxu0 %v601
    %1951 = vmatpush.msra.mxu0 %v569
    %1952 = vmatpush.msra.mxu0 %v537
    %1953 = vmatpush.msra.mxu0 %v505
    %1954 = vmatpush.msra.mxu0 %v473
    %1955 = vmatpush.msra.mxu0 %v441
    %1956 = vmatpush.msra.mxu0 %v409
    %1957 = vmatpush.msra.mxu0 %v377
    %1958 = vmatpush.msra.mxu0 %v345
    %1959 = vmatpush.msra.mxu0 %v313
    %1960 = vmatpush.msra.mxu0 %v281
    %1961 = vmatpush.msra.mxu0 %v249
    %1962 = vmatpush.msra.mxu0 %v217
    %1963 = vmatmul.f32.gmra.mxu0 %v1223
    %v1964 = vpop.f32.mrf.mxu0
    %v1965 = vadd.f32 0.0, %v1964
    %1966 = vdwg.mxu0
    %1967 = vmatpush.msra.mxu0 %v1209
    %1968 = vmatpush.msra.mxu0 %v1177
    %1969 = vmatpush.msra.mxu0 %v1145
    %1970 = vmatpush.msra.mxu0 %v1113
    %1971 = vmatpush.msra.mxu0 %v1081
    %1972 = vmatpush.msra.mxu0 %v1049
    %1973 = vmatpush.msra.mxu0 %v1017
    %1974 = vmatpush.msra.mxu0 %v985
    %1975 = vmatpush.msra.mxu0 %v953
    %1976 = vmatpush.msra.mxu0 %v921
    %1977 = vmatpush.msra.mxu0 %v889
    %1978 = vmatpush.msra.mxu0 %v857
    %1979 = vmatpush.msra.mxu0 %v825
    %1980 = vmatpush.msra.mxu0 %v793
    %1981 = vmatpush.msra.mxu0 %v761
    %1982 = vmatpush.msra.mxu0 %v729
    %1983 = vmatmul.f32.gmra.mxu0 %v1224
    %v1984 = vpop.f32.mrf.mxu0
    %v1985 = vadd.f32 %v1965, %v1984
    %1986 = vdwg.mxu0
    %1987 = vmatpush.msra.mxu0 %v698
    %1988 = vmatpush.msra.mxu0 %v666
    %1989 = vmatpush.msra.mxu0 %v634
    %1990 = vmatpush.msra.mxu0 %v602
    %1991 = vmatpush.msra.mxu0 %v570
    %1992 = vmatpush.msra.mxu0 %v538
    %1993 = vmatpush.msra.mxu0 %v506
    %1994 = vmatpush.msra.mxu0 %v474
    %1995 = vmatpush.msra.mxu0 %v442
    %1996 = vmatpush.msra.mxu0 %v410
    %1997 = vmatpush.msra.mxu0 %v378
    %1998 = vmatpush.msra.mxu0 %v346
    %1999 = vmatpush.msra.mxu0 %v314
    %2000 = vmatpush.msra.mxu0 %v282
    %2001 = vmatpush.msra.mxu0 %v250
    %2002 = vmatpush.msra.mxu0 %v218
    %2003 = vmatmul.f32.gmra.mxu0 %v1223
    %v2004 = vpop.f32.mrf.mxu0
    %v2005 = vadd.f32 0.0, %v2004
    %2006 = vdwg.mxu0
    %2007 = vmatpush.msra.mxu0 %v1210
    %2008 = vmatpush.msra.mxu0 %v1178
    %2009 = vmatpush.msra.mxu0 %v1146
    %2010 = vmatpush.msra.mxu0 %v1114
    %2011 = vmatpush.msra.mxu0 %v1082
    %2012 = vmatpush.msra.mxu0 %v1050
    %2013 = vmatpush.msra.mxu0 %v1018
    %2014 = vmatpush.msra.mxu0 %v986
    %2015 = vmatpush.msra.mxu0 %v954
    %2016 = vmatpush.msra.mxu0 %v922
    %2017 = vmatpush.msra.mxu0 %v890
    %2018 = vmatpush.msra.mxu0 %v858
    %2019 = vmatpush.msra.mxu0 %v826
    %2020 = vmatpush.msra.mxu0 %v794
    %2021 = vmatpush.msra.mxu0 %v762
    %2022 = vmatpush.msra.mxu0 %v730
    %2023 = vmatmul.f32.gmra.mxu0 %v1224
    %v2024 = vpop.f32.mrf.mxu0
    %v2025 = vadd.f32 %v2005, %v2024
    %2026 = vdwg.mxu0
    %2027 = vmatpush.msra.mxu0 %v699
    %2028 = vmatpush.msra.mxu0 %v667
    %2029 = vmatpush.msra.mxu0 %v635
    %2030 = vmatpush.msra.mxu0 %v603
    %2031 = vmatpush.msra.mxu0 %v571
    %2032 = vmatpush.msra.mxu0 %v539
    %2033 = vmatpush.msra.mxu0 %v507
    %2034 = vmatpush.msra.mxu0 %v475
    %2035 = vmatpush.msra.mxu0 %v443
    %2036 = vmatpush.msra.mxu0 %v411
    %2037 = vmatpush.msra.mxu0 %v379
    %2038 = vmatpush.msra.mxu0 %v347
    %2039 = vmatpush.msra.mxu0 %v315
    %2040 = vmatpush.msra.mxu0 %v283
    %2041 = vmatpush.msra.mxu0 %v251
    %2042 = vmatpush.msra.mxu0 %v219
    %2043 = vmatmul.f32.gmra.mxu0 %v1223
    %v2044 = vpop.f32.mrf.mxu0
    %v2045 = vadd.f32 0.0, %v2044
    %2046 = vdwg.mxu0
    %2047 = vmatpush.msra.mxu0 %v1211
    %2048 = vmatpush.msra.mxu0 %v1179
    %2049 = vmatpush.msra.mxu0 %v1147
    %2050 = vmatpush.msra.mxu0 %v1115
    %2051 = vmatpush.msra.mxu0 %v1083
    %2052 = vmatpush.msra.mxu0 %v1051
    %2053 = vmatpush.msra.mxu0 %v1019
    %2054 = vmatpush.msra.mxu0 %v987
    %2055 = vmatpush.msra.mxu0 %v955
    %2056 = vmatpush.msra.mxu0 %v923
    %2057 = vmatpush.msra.mxu0 %v891
    %2058 = vmatpush.msra.mxu0 %v859
    %2059 = vmatpush.msra.mxu0 %v827
    %2060 = vmatpush.msra.mxu0 %v795
    %2061 = vmatpush.msra.mxu0 %v763
    %2062 = vmatpush.msra.mxu0 %v731
    %2063 = vmatmul.f32.gmra.mxu0 %v1224
    %v2064 = vpop.f32.mrf.mxu0
    %v2065 = vadd.f32 %v2045, %v2064
    %2066 = vdwg.mxu0
    %2067 = vmatpush.msra.mxu0 %v700
    %2068 = vmatpush.msra.mxu0 %v668
    %2069 = vmatpush.msra.mxu0 %v636
    %2070 = vmatpush.msra.mxu0 %v604
    %2071 = vmatpush.msra.mxu0 %v572
    %2072 = vmatpush.msra.mxu0 %v540
    %2073 = vmatpush.msra.mxu0 %v508
    %2074 = vmatpush.msra.mxu0 %v476
    %2075 = vmatpush.msra.mxu0 %v444
    %2076 = vmatpush.msra.mxu0 %v412
    %2077 = vmatpush.msra.mxu0 %v380
    %2078 = vmatpush.msra.mxu0 %v348
    %2079 = vmatpush.msra.mxu0 %v316
    %2080 = vmatpush.msra.mxu0 %v284
    %2081 = vmatpush.msra.mxu0 %v252
    %2082 = vmatpush.msra.mxu0 %v220
    %2083 = vmatmul.f32.gmra.mxu0 %v1223
    %v2084 = vpop.f32.mrf.mxu0
    %v2085 = vadd.f32 0.0, %v2084
    %2086 = vdwg.mxu0
    %2087 = vmatpush.msra.mxu0 %v1212
    %2088 = vmatpush.msra.mxu0 %v1180
    %2089 = vmatpush.msra.mxu0 %v1148
    %2090 = vmatpush.msra.mxu0 %v1116
    %2091 = vmatpush.msra.mxu0 %v1084
    %2092 = vmatpush.msra.mxu0 %v1052
    %2093 = vmatpush.msra.mxu0 %v1020
    %2094 = vmatpush.msra.mxu0 %v988
    %2095 = vmatpush.msra.mxu0 %v956
    %2096 = vmatpush.msra.mxu0 %v924
    %2097 = vmatpush.msra.mxu0 %v892
    %2098 = vmatpush.msra.mxu0 %v860
    %2099 = vmatpush.msra.mxu0 %v828
    %2100 = vmatpush.msra.mxu0 %v796
    %2101 = vmatpush.msra.mxu0 %v764
    %2102 = vmatpush.msra.mxu0 %v732
    %2103 = vmatmul.f32.gmra.mxu0 %v1224
    %v2104 = vpop.f32.mrf.mxu0
    %v2105 = vadd.f32 %v2085, %v2104
    %2106 = vdwg.mxu0
    %2107 = vmatpush.msra.mxu0 %v701
    %2108 = vmatpush.msra.mxu0 %v669
    %2109 = vmatpush.msra.mxu0 %v637
    %2110 = vmatpush.msra.mxu0 %v605
    %2111 = vmatpush.msra.mxu0 %v573
    %2112 = vmatpush.msra.mxu0 %v541
    %2113 = vmatpush.msra.mxu0 %v509
    %2114 = vmatpush.msra.mxu0 %v477
    %2115 = vmatpush.msra.mxu0 %v445
    %2116 = vmatpush.msra.mxu0 %v413
    %2117 = vmatpush.msra.mxu0 %v381
    %2118 = vmatpush.msra.mxu0 %v349
    %2119 = vmatpush.msra.mxu0 %v317
    %2120 = vmatpush.msra.mxu0 %v285
    %2121 = vmatpush.msra.mxu0 %v253
    %2122 = vmatpush.msra.mxu0 %v221
    %2123 = vmatmul.f32.gmra.mxu0 %v1223
    %v2124 = vpop.f32.mrf.mxu0
    %v2125 = vadd.f32 0.0, %v2124
    %2126 = vdwg.mxu0
    %2127 = vmatpush.msra.mxu0 %v1213
    %2128 = vmatpush.msra.mxu0 %v1181
    %2129 = vmatpush.msra.mxu0 %v1149
    %2130 = vmatpush.msra.mxu0 %v1117
    %2131 = vmatpush.msra.mxu0 %v1085
    %2132 = vmatpush.msra.mxu0 %v1053
    %2133 = vmatpush.msra.mxu0 %v1021
    %2134 = vmatpush.msra.mxu0 %v989
    %2135 = vmatpush.msra.mxu0 %v957
    %2136 = vmatpush.msra.mxu0 %v925
    %2137 = vmatpush.msra.mxu0 %v893
    %2138 = vmatpush.msra.mxu0 %v861
    %2139 = vmatpush.msra.mxu0 %v829
    %2140 = vmatpush.msra.mxu0 %v797
    %2141 = vmatpush.msra.mxu0 %v765
    %2142 = vmatpush.msra.mxu0 %v733
    %2143 = vmatmul.f32.gmra.mxu0 %v1224
    %v2144 = vpop.f32.mrf.mxu0
    %v2145 = vadd.f32 %v2125, %v2144
    %2146 = vdwg.mxu0
    %2147 = vmatpush.msra.mxu0 %v702
    %2148 = vmatpush.msra.mxu0 %v670
    %2149 = vmatpush.msra.mxu0 %v638
    %2150 = vmatpush.msra.mxu0 %v606
    %2151 = vmatpush.msra.mxu0 %v574
    %2152 = vmatpush.msra.mxu0 %v542
    %2153 = vmatpush.msra.mxu0 %v510
    %2154 = vmatpush.msra.mxu0 %v478
    %2155 = vmatpush.msra.mxu0 %v446
    %2156 = vmatpush.msra.mxu0 %v414
    %2157 = vmatpush.msra.mxu0 %v382
    %2158 = vmatpush.msra.mxu0 %v350
    %2159 = vmatpush.msra.mxu0 %v318
    %2160 = vmatpush.msra.mxu0 %v286
    %2161 = vmatpush.msra.mxu0 %v254
    %2162 = vmatpush.msra.mxu0 %v222
    %2163 = vmatmul.f32.gmra.mxu0 %v1223
    %v2164 = vpop.f32.mrf.mxu0
    %v2165 = vadd.f32 0.0, %v2164
    %2166 = vdwg.mxu0
    %2167 = vmatpush.msra.mxu0 %v1214
    %2168 = vmatpush.msra.mxu0 %v1182
    %2169 = vmatpush.msra.mxu0 %v1150
    %2170 = vmatpush.msra.mxu0 %v1118
    %2171 = vmatpush.msra.mxu0 %v1086
    %2172 = vmatpush.msra.mxu0 %v1054
    %2173 = vmatpush.msra.mxu0 %v1022
    %2174 = vmatpush.msra.mxu0 %v990
    %2175 = vmatpush.msra.mxu0 %v958
    %2176 = vmatpush.msra.mxu0 %v926
    %2177 = vmatpush.msra.mxu0 %v894
    %2178 = vmatpush.msra.mxu0 %v862
    %2179 = vmatpush.msra.mxu0 %v830
    %2180 = vmatpush.msra.mxu0 %v798
    %2181 = vmatpush.msra.mxu0 %v766
    %2182 = vmatpush.msra.mxu0 %v734
    %2183 = vmatmul.f32.gmra.mxu0 %v1224
    %v2184 = vpop.f32.mrf.mxu0
    %v2185 = vadd.f32 %v2165, %v2184
    %2186 = vdwg.mxu0
    %2187 = vmatpush.msra.mxu0 %v703
    %2188 = vmatpush.msra.mxu0 %v671
    %2189 = vmatpush.msra.mxu0 %v639
    %2190 = vmatpush.msra.mxu0 %v607
    %2191 = vmatpush.msra.mxu0 %v575
    %2192 = vmatpush.msra.mxu0 %v543
    %2193 = vmatpush.msra.mxu0 %v511
    %2194 = vmatpush.msra.mxu0 %v479
    %2195 = vmatpush.msra.mxu0 %v447
    %2196 = vmatpush.msra.mxu0 %v415
    %2197 = vmatpush.msra.mxu0 %v383
    %2198 = vmatpush.msra.mxu0 %v351
    %2199 = vmatpush.msra.mxu0 %v319
    %2200 = vmatpush.msra.mxu0 %v287
    %2201 = vmatpush.msra.mxu0 %v255
    %2202 = vmatpush.msra.mxu0 %v223
    %2203 = vmatmul.f32.gmra.mxu0 %v1223
    %v2204 = vpop.f32.mrf.mxu0
    %v2205 = vadd.f32 0.0, %v2204
    %2206 = vdwg.mxu0
    %2207 = vmatpush.msra.mxu0 %v1215
    %2208 = vmatpush.msra.mxu0 %v1183
    %2209 = vmatpush.msra.mxu0 %v1151
    %2210 = vmatpush.msra.mxu0 %v1119
    %2211 = vmatpush.msra.mxu0 %v1087
    %2212 = vmatpush.msra.mxu0 %v1055
    %2213 = vmatpush.msra.mxu0 %v1023
    %2214 = vmatpush.msra.mxu0 %v991
    %2215 = vmatpush.msra.mxu0 %v959
    %2216 = vmatpush.msra.mxu0 %v927
    %2217 = vmatpush.msra.mxu0 %v895
    %2218 = vmatpush.msra.mxu0 %v863
    %2219 = vmatpush.msra.mxu0 %v831
    %2220 = vmatpush.msra.mxu0 %v799
    %2221 = vmatpush.msra.mxu0 %v767
    %2222 = vmatpush.msra.mxu0 %v735
    %2223 = vmatmul.f32.gmra.mxu0 %v1224
    %v2224 = vpop.f32.mrf.mxu0
    %v2225 = vadd.f32 %v2205, %v2224
    %2226 = vdwg.mxu0
    %2227 = vmatpush.msra.mxu0 %v704
    %2228 = vmatpush.msra.mxu0 %v672
    %2229 = vmatpush.msra.mxu0 %v640
    %2230 = vmatpush.msra.mxu0 %v608
    %2231 = vmatpush.msra.mxu0 %v576
    %2232 = vmatpush.msra.mxu0 %v544
    %2233 = vmatpush.msra.mxu0 %v512
    %2234 = vmatpush.msra.mxu0 %v480
    %2235 = vmatpush.msra.mxu0 %v448
    %2236 = vmatpush.msra.mxu0 %v416
    %2237 = vmatpush.msra.mxu0 %v384
    %2238 = vmatpush.msra.mxu0 %v352
    %2239 = vmatpush.msra.mxu0 %v320
    %2240 = vmatpush.msra.mxu0 %v288
    %2241 = vmatpush.msra.mxu0 %v256
    %2242 = vmatpush.msra.mxu0 %v224
    %2243 = vmatmul.f32.gmra.mxu0 %v1223
    %v2244 = vpop.f32.mrf.mxu0
    %v2245 = vadd.f32 0.0, %v2244
    %2246 = vdwg.mxu0
    %2247 = vmatpush.msra.mxu0 %v1216
    %2248 = vmatpush.msra.mxu0 %v1184
    %2249 = vmatpush.msra.mxu0 %v1152
    %2250 = vmatpush.msra.mxu0 %v1120
    %2251 = vmatpush.msra.mxu0 %v1088
    %2252 = vmatpush.msra.mxu0 %v1056
    %2253 = vmatpush.msra.mxu0 %v1024
    %2254 = vmatpush.msra.mxu0 %v992
    %2255 = vmatpush.msra.mxu0 %v960
    %2256 = vmatpush.msra.mxu0 %v928
    %2257 = vmatpush.msra.mxu0 %v896
    %2258 = vmatpush.msra.mxu0 %v864
    %2259 = vmatpush.msra.mxu0 %v832
    %2260 = vmatpush.msra.mxu0 %v800
    %2261 = vmatpush.msra.mxu0 %v768
    %2262 = vmatpush.msra.mxu0 %v736
    %2263 = vmatmul.f32.gmra.mxu0 %v1224
    %v2264 = vpop.f32.mrf.mxu0
    %v2265 = vadd.f32 %v2245, %v2264
    %2266 = vdwg.mxu0
    %2267 = vmatpush.msra.mxu0 %v705
    %2268 = vmatpush.msra.mxu0 %v673
    %2269 = vmatpush.msra.mxu0 %v641
    %2270 = vmatpush.msra.mxu0 %v609
    %2271 = vmatpush.msra.mxu0 %v577
    %2272 = vmatpush.msra.mxu0 %v545
    %2273 = vmatpush.msra.mxu0 %v513
    %2274 = vmatpush.msra.mxu0 %v481
    %2275 = vmatpush.msra.mxu0 %v449
    %2276 = vmatpush.msra.mxu0 %v417
    %2277 = vmatpush.msra.mxu0 %v385
    %2278 = vmatpush.msra.mxu0 %v353
    %2279 = vmatpush.msra.mxu0 %v321
    %2280 = vmatpush.msra.mxu0 %v289
    %2281 = vmatpush.msra.mxu0 %v257
    %2282 = vmatpush.msra.mxu0 %v225
    %2283 = vmatmul.f32.gmra.mxu0 %v1223
    %v2284 = vpop.f32.mrf.mxu0
    %v2285 = vadd.f32 0.0, %v2284
    %2286 = vdwg.mxu0
    %2287 = vmatpush.msra.mxu0 %v1217
    %2288 = vmatpush.msra.mxu0 %v1185
    %2289 = vmatpush.msra.mxu0 %v1153
    %2290 = vmatpush.msra.mxu0 %v1121
    %2291 = vmatpush.msra.mxu0 %v1089
    %2292 = vmatpush.msra.mxu0 %v1057
    %2293 = vmatpush.msra.mxu0 %v1025
    %2294 = vmatpush.msra.mxu0 %v993
    %2295 = vmatpush.msra.mxu0 %v961
    %2296 = vmatpush.msra.mxu0 %v929
    %2297 = vmatpush.msra.mxu0 %v897
    %2298 = vmatpush.msra.mxu0 %v865
    %2299 = vmatpush.msra.mxu0 %v833
    %2300 = vmatpush.msra.mxu0 %v801
    %2301 = vmatpush.msra.mxu0 %v769
    %2302 = vmatpush.msra.mxu0 %v737
    %2303 = vmatmul.f32.gmra.mxu0 %v1224
    %v2304 = vpop.f32.mrf.mxu0
    %v2305 = vadd.f32 %v2285, %v2304
    %2306 = vdwg.mxu0
    %2307 = vmatpush.msra.mxu0 %v706
    %2308 = vmatpush.msra.mxu0 %v674
    %2309 = vmatpush.msra.mxu0 %v642
    %2310 = vmatpush.msra.mxu0 %v610
    %2311 = vmatpush.msra.mxu0 %v578
    %2312 = vmatpush.msra.mxu0 %v546
    %2313 = vmatpush.msra.mxu0 %v514
    %2314 = vmatpush.msra.mxu0 %v482
    %2315 = vmatpush.msra.mxu0 %v450
    %2316 = vmatpush.msra.mxu0 %v418
    %2317 = vmatpush.msra.mxu0 %v386
    %2318 = vmatpush.msra.mxu0 %v354
    %2319 = vmatpush.msra.mxu0 %v322
    %2320 = vmatpush.msra.mxu0 %v290
    %2321 = vmatpush.msra.mxu0 %v258
    %2322 = vmatpush.msra.mxu0 %v226
    %2323 = vmatmul.f32.gmra.mxu0 %v1223
    %v2324 = vpop.f32.mrf.mxu0
    %v2325 = vadd.f32 0.0, %v2324
    %2326 = vdwg.mxu0
    %2327 = vmatpush.msra.mxu0 %v1218
    %2328 = vmatpush.msra.mxu0 %v1186
    %2329 = vmatpush.msra.mxu0 %v1154
    %2330 = vmatpush.msra.mxu0 %v1122
    %2331 = vmatpush.msra.mxu0 %v1090
    %2332 = vmatpush.msra.mxu0 %v1058
    %2333 = vmatpush.msra.mxu0 %v1026
    %2334 = vmatpush.msra.mxu0 %v994
    %2335 = vmatpush.msra.mxu0 %v962
    %2336 = vmatpush.msra.mxu0 %v930
    %2337 = vmatpush.msra.mxu0 %v898
    %2338 = vmatpush.msra.mxu0 %v866
    %2339 = vmatpush.msra.mxu0 %v834
    %2340 = vmatpush.msra.mxu0 %v802
    %2341 = vmatpush.msra.mxu0 %v770
    %2342 = vmatpush.msra.mxu0 %v738
    %2343 = vmatmul.f32.gmra.mxu0 %v1224
    %v2344 = vpop.f32.mrf.mxu0
    %v2345 = vadd.f32 %v2325, %v2344
    %2346 = vdwg.mxu0
    %2347 = vmatpush.msra.mxu0 %v707
    %2348 = vmatpush.msra.mxu0 %v675
    %2349 = vmatpush.msra.mxu0 %v643
    %2350 = vmatpush.msra.mxu0 %v611
    %2351 = vmatpush.msra.mxu0 %v579
    %2352 = vmatpush.msra.mxu0 %v547
    %2353 = vmatpush.msra.mxu0 %v515
    %2354 = vmatpush.msra.mxu0 %v483
    %2355 = vmatpush.msra.mxu0 %v451
    %2356 = vmatpush.msra.mxu0 %v419
    %2357 = vmatpush.msra.mxu0 %v387
    %2358 = vmatpush.msra.mxu0 %v355
    %2359 = vmatpush.msra.mxu0 %v323
    %2360 = vmatpush.msra.mxu0 %v291
    %2361 = vmatpush.msra.mxu0 %v259
    %2362 = vmatpush.msra.mxu0 %v227
    %2363 = vmatmul.f32.gmra.mxu0 %v1223
    %v2364 = vpop.f32.mrf.mxu0
    %v2365 = vadd.f32 0.0, %v2364
    %2366 = vdwg.mxu0
    %2367 = vmatpush.msra.mxu0 %v1219
    %2368 = vmatpush.msra.mxu0 %v1187
    %2369 = vmatpush.msra.mxu0 %v1155
    %2370 = vmatpush.msra.mxu0 %v1123
    %2371 = vmatpush.msra.mxu0 %v1091
    %2372 = vmatpush.msra.mxu0 %v1059
    %2373 = vmatpush.msra.mxu0 %v1027
    %2374 = vmatpush.msra.mxu0 %v995
    %2375 = vmatpush.msra.mxu0 %v963
    %2376 = vmatpush.msra.mxu0 %v931
    %2377 = vmatpush.msra.mxu0 %v899
    %2378 = vmatpush.msra.mxu0 %v867
    %2379 = vmatpush.msra.mxu0 %v835
    %2380 = vmatpush.msra.mxu0 %v803
    %2381 = vmatpush.msra.mxu0 %v771
    %2382 = vmatpush.msra.mxu0 %v739
    %2383 = vmatmul.f32.gmra.mxu0 %v1224
    %v2384 = vpop.f32.mrf.mxu0
    %v2385 = vadd.f32 %v2365, %v2384
    %2386 = vdwg.mxu0
    %2387 = vmatpush.msra.mxu0 %v708
    %2388 = vmatpush.msra.mxu0 %v676
    %2389 = vmatpush.msra.mxu0 %v644
    %2390 = vmatpush.msra.mxu0 %v612
    %2391 = vmatpush.msra.mxu0 %v580
    %2392 = vmatpush.msra.mxu0 %v548
    %2393 = vmatpush.msra.mxu0 %v516
    %2394 = vmatpush.msra.mxu0 %v484
    %2395 = vmatpush.msra.mxu0 %v452
    %2396 = vmatpush.msra.mxu0 %v420
    %2397 = vmatpush.msra.mxu0 %v388
    %2398 = vmatpush.msra.mxu0 %v356
    %2399 = vmatpush.msra.mxu0 %v324
    %2400 = vmatpush.msra.mxu0 %v292
    %2401 = vmatpush.msra.mxu0 %v260
    %2402 = vmatpush.msra.mxu0 %v228
    %2403 = vmatmul.f32.gmra.mxu0 %v1223
    %v2404 = vpop.f32.mrf.mxu0
    %v2405 = vadd.f32 0.0, %v2404
    %2406 = vdwg.mxu0
    %2407 = vmatpush.msra.mxu0 %v1220
    %2408 = vmatpush.msra.mxu0 %v1188
    %2409 = vmatpush.msra.mxu0 %v1156
    %2410 = vmatpush.msra.mxu0 %v1124
    %2411 = vmatpush.msra.mxu0 %v1092
    %2412 = vmatpush.msra.mxu0 %v1060
    %2413 = vmatpush.msra.mxu0 %v1028
    %2414 = vmatpush.msra.mxu0 %v996
    %2415 = vmatpush.msra.mxu0 %v964
    %2416 = vmatpush.msra.mxu0 %v932
    %2417 = vmatpush.msra.mxu0 %v900
    %2418 = vmatpush.msra.mxu0 %v868
    %2419 = vmatpush.msra.mxu0 %v836
    %2420 = vmatpush.msra.mxu0 %v804
    %2421 = vmatpush.msra.mxu0 %v772
    %2422 = vmatpush.msra.mxu0 %v740
    %2423 = vmatmul.f32.gmra.mxu0 %v1224
    %v2424 = vpop.f32.mrf.mxu0
    %v2425 = vadd.f32 %v2405, %v2424
    %2426 = vdwg.mxu0
    %2427 = vmatpush.msra.mxu0 %v709
    %2428 = vmatpush.msra.mxu0 %v677
    %2429 = vmatpush.msra.mxu0 %v645
    %2430 = vmatpush.msra.mxu0 %v613
    %2431 = vmatpush.msra.mxu0 %v581
    %2432 = vmatpush.msra.mxu0 %v549
    %2433 = vmatpush.msra.mxu0 %v517
    %2434 = vmatpush.msra.mxu0 %v485
    %2435 = vmatpush.msra.mxu0 %v453
    %2436 = vmatpush.msra.mxu0 %v421
    %2437 = vmatpush.msra.mxu0 %v389
    %2438 = vmatpush.msra.mxu0 %v357
    %2439 = vmatpush.msra.mxu0 %v325
    %2440 = vmatpush.msra.mxu0 %v293
    %2441 = vmatpush.msra.mxu0 %v261
    %2442 = vmatpush.msra.mxu0 %v229
    %2443 = vmatmul.f32.gmra.mxu0 %v1223
    %v2444 = vpop.f32.mrf.mxu0
    %v2445 = vadd.f32 0.0, %v2444
    %2446 = vdwg.mxu0
    %2447 = vmatpush.msra.mxu0 %v1221
    %2448 = vmatpush.msra.mxu0 %v1189
    %2449 = vmatpush.msra.mxu0 %v1157
    %2450 = vmatpush.msra.mxu0 %v1125
    %2451 = vmatpush.msra.mxu0 %v1093
    %2452 = vmatpush.msra.mxu0 %v1061
    %2453 = vmatpush.msra.mxu0 %v1029
    %2454 = vmatpush.msra.mxu0 %v997
    %2455 = vmatpush.msra.mxu0 %v965
    %2456 = vmatpush.msra.mxu0 %v933
    %2457 = vmatpush.msra.mxu0 %v901
    %2458 = vmatpush.msra.mxu0 %v869
    %2459 = vmatpush.msra.mxu0 %v837
    %2460 = vmatpush.msra.mxu0 %v805
    %2461 = vmatpush.msra.mxu0 %v773
    %2462 = vmatpush.msra.mxu0 %v741
    %2463 = vmatmul.f32.gmra.mxu0 %v1224
    %v2464 = vpop.f32.mrf.mxu0
    %v2465 = vadd.f32 %v2445, %v2464
    %2466 = vdwg.mxu0
    %2467 = vmatpush.msra.mxu0 %v710
    %2468 = vmatpush.msra.mxu0 %v678
    %2469 = vmatpush.msra.mxu0 %v646
    %2470 = vmatpush.msra.mxu0 %v614
    %2471 = vmatpush.msra.mxu0 %v582
    %2472 = vmatpush.msra.mxu0 %v550
    %2473 = vmatpush.msra.mxu0 %v518
    %2474 = vmatpush.msra.mxu0 %v486
    %2475 = vmatpush.msra.mxu0 %v454
    %2476 = vmatpush.msra.mxu0 %v422
    %2477 = vmatpush.msra.mxu0 %v390
    %2478 = vmatpush.msra.mxu0 %v358
    %2479 = vmatpush.msra.mxu0 %v326
    %2480 = vmatpush.msra.mxu0 %v294
    %2481 = vmatpush.msra.mxu0 %v262
    %2482 = vmatpush.msra.mxu0 %v230
    %2483 = vmatmul.f32.gmra.mxu0 %v1223
    %v2484 = vpop.f32.mrf.mxu0
    %v2485 = vadd.f32 0.0, %v2484
    %2486 = vdwg.mxu0
    %2487 = vmatpush.msra.mxu0 %v1222
    %2488 = vmatpush.msra.mxu0 %v1190
    %2489 = vmatpush.msra.mxu0 %v1158
    %2490 = vmatpush.msra.mxu0 %v1126
    %2491 = vmatpush.msra.mxu0 %v1094
    %2492 = vmatpush.msra.mxu0 %v1062
    %2493 = vmatpush.msra.mxu0 %v1030
    %2494 = vmatpush.msra.mxu0 %v998
    %2495 = vmatpush.msra.mxu0 %v966
    %2496 = vmatpush.msra.mxu0 %v934
    %2497 = vmatpush.msra.mxu0 %v902
    %2498 = vmatpush.msra.mxu0 %v870
    %2499 = vmatpush.msra.mxu0 %v838
    %2500 = vmatpush.msra.mxu0 %v806
    %2501 = vmatpush.msra.mxu0 %v774
    %2502 = vmatpush.msra.mxu0 %v742
    %2503 = vmatmul.f32.gmra.mxu0 %v1224
    %v2504 = vpop.f32.mrf.mxu0
    %v2505 = vadd.f32 %v2485, %v2504
    %2506 = vdwg.mxu0
    %v2539 = vrot.slane %v1305, 6
    %v2540 = vrot.slane %v1345, 4
    %v2541 = vrot.slane %v1385, 2
    %v2542 = vrot.slane %v1465, 6
    %v2543 = vrot.slane %v1505, 4
    %v2544 = vrot.slane %v1545, 2
    %v2545 = vrot.slane %v1625, 6
    %v2546 = vrot.slane %v1665, 4
    %v2547 = vrot.slane %v1705, 2
    %v2548 = vrot.slane %v1785, 6
    %v2549 = vrot.slane %v1825, 4
    %v2550 = vrot.slane %v1865, 2
    %v2551 = vrot.slane %v1945, 6
    %v2552 = vrot.slane %v1985, 4
    %v2553 = vrot.slane %v2025, 2
    %v2554 = vrot.slane %v2105, 6
    %v2555 = vrot.slane %v2145, 4
    %v2556 = vrot.slane %v2185, 2
    %v2557 = vrot.slane %v2265, 6
    %v2558 = vrot.slane %v2305, 4
    %v2559 = vrot.slane %v2345, 2
    %v2560 = vrot.slane %v2425, 6
    %v2561 = vrot.slane %v2465, 4
    %v2562 = vrot.slane %v2505, 2
    %v2563 = vsel %vm180, %v1265, %v2539
    %vm2564 = vcmask 1045508
    %v2565 = vsel %vm2564, %v2540, %v2541
    %vm2566 = vcmask 1043456
    %v2567 = vsel %vm2566, %v2563, %v2565
    %v2568 = vsel %vm180, %v1425, %v2542
    %v2569 = vsel %vm2564, %v2543, %v2544
    %v2570 = vsel %vm2566, %v2568, %v2569
    %v2571 = vsel %vm180, %v1585, %v2545
    %v2572 = vsel %vm2564, %v2546, %v2547
    %v2573 = vsel %vm2566, %v2571, %v2572
    %v2574 = vsel %vm180, %v1745, %v2548
    %v2575 = vsel %vm2564, %v2549, %v2550
    %v2576 = vsel %vm2566, %v2574, %v2575
    %v2577 = vsel %vm180, %v1905, %v2551
    %v2578 = vsel %vm2564, %v2552, %v2553
    %v2579 = vsel %vm2566, %v2577, %v2578
    %v2580 = vsel %vm180, %v2065, %v2554
    %v2581 = vsel %vm2564, %v2555, %v2556
    %v2582 = vsel %vm2566, %v2580, %v2581
    %v2583 = vsel %vm180, %v2225, %v2557
    %v2584 = vsel %vm2564, %v2558, %v2559
    %v2585 = vsel %vm2566, %v2583, %v2584
    %v2586 = vsel %vm180, %v2385, %v2560
    %v2587 = vsel %vm2564, %v2561, %v2562
    %v2588 = vsel %vm2566, %v2586, %v2587
    %2597 = vst [vmem:[#allocation10] sm:$0xff] %v2567
    %2598 = vst [vmem:[#allocation10 + $0x8] sm:$0xff] %v2570
    %2599 = vst [vmem:[#allocation10 + $0x10] sm:$0xff] %v2573
    %2600 = vst [vmem:[#allocation10 + $0x18] sm:$0xff] %v2576
    %2601 = vst [vmem:[#allocation10 + $0x20] sm:$0xff] %v2579
    %2602 = vst [vmem:[#allocation10 + $0x28] sm:$0xff] %v2582
    %2603 = vst [vmem:[#allocation10 + $0x30] sm:$0xff] %v2585
    %2604 = vst [vmem:[#allocation10 + $0x38] sm:$0xff] %v2588
    %vm2605 = vcmp.gt.f32.partialorder %v1265, 0.0
    %vm2606 = vcmp.gt.f32.partialorder %v1305, 0.0
    %vm2607 = vcmp.gt.f32.partialorder %v1345, 0.0
    %vm2608 = vcmp.gt.f32.partialorder %v1385, 0.0
    %vm2609 = vcmp.gt.f32.partialorder %v1425, 0.0
    %vm2610 = vcmp.gt.f32.partialorder %v1465, 0.0
    %vm2611 = vcmp.gt.f32.partialorder %v1505, 0.0
    %vm2612 = vcmp.gt.f32.partialorder %v1545, 0.0
    %vm2613 = vcmp.gt.f32.partialorder %v1585, 0.0
    %vm2614 = vcmp.gt.f32.partialorder %v1625, 0.0
    %vm2615 = vcmp.gt.f32.partialorder %v1665, 0.0
    %vm2616 = vcmp.gt.f32.partialorder %v1705, 0.0
    %vm2617 = vcmp.gt.f32.partialorder %v1745, 0.0
    %vm2618 = vcmp.gt.f32.partialorder %v1785, 0.0
    %vm2619 = vcmp.gt.f32.partialorder %v1825, 0.0
    %vm2620 = vcmp.gt.f32.partialorder %v1865, 0.0
    %vm2621 = vcmp.gt.f32.partialorder %v1905, 0.0
    %vm2622 = vcmp.gt.f32.partialorder %v1945, 0.0
    %vm2623 = vcmp.gt.f32.partialorder %v1985, 0.0
    %vm2624 = vcmp.gt.f32.partialorder %v2025, 0.0
    %vm2625 = vcmp.gt.f32.partialorder %v2065, 0.0
    %vm2626 = vcmp.gt.f32.partialorder %v2105, 0.0
    %vm2627 = vcmp.gt.f32.partialorder %v2145, 0.0
    %vm2628 = vcmp.gt.f32.partialorder %v2185, 0.0
    %vm2629 = vcmp.gt.f32.partialorder %v2225, 0.0
    %vm2630 = vcmp.gt.f32.partialorder %v2265, 0.0
    %vm2631 = vcmp.gt.f32.partialorder %v2305, 0.0
    %vm2632 = vcmp.gt.f32.partialorder %v2345, 0.0
    %vm2633 = vcmp.gt.f32.partialorder %v2385, 0.0
    %vm2634 = vcmp.gt.f32.partialorder %v2425, 0.0
    %vm2635 = vcmp.gt.f32.partialorder %v2465, 0.0
    %vm2636 = vcmp.gt.f32.partialorder %v2505, 0.0
    %v2637 = vsel %vm2605, 255, 0
    %v2638 = vsel %vm2606, 255, 0
    %v2639 = vsel %vm2607, 255, 0
    %v2640 = vsel %vm2608, 255, 0
    %v2641 = vsel %vm2609, 255, 0
    %v2642 = vsel %vm2610, 255, 0
    %v2643 = vsel %vm2611, 255, 0
    %v2644 = vsel %vm2612, 255, 0
    %v2645 = vsel %vm2613, 255, 0
    %v2646 = vsel %vm2614, 255, 0
    %v2647 = vsel %vm2615, 255, 0
    %v2648 = vsel %vm2616, 255, 0
    %v2649 = vsel %vm2617, 255, 0
    %v2650 = vsel %vm2618, 255, 0
    %v2651 = vsel %vm2619, 255, 0
    %v2652 = vsel %vm2620, 255, 0
    %v2653 = vsel %vm2621, 255, 0
    %v2654 = vsel %vm2622, 255, 0
    %v2655 = vsel %vm2623, 255, 0
    %v2656 = vsel %vm2624, 255, 0
    %v2657 = vsel %vm2625, 255, 0
    %v2658 = vsel %vm2626, 255, 0
    %v2659 = vsel %vm2627, 255, 0
    %v2660 = vsel %vm2628, 255, 0
    %v2661 = vsel %vm2629, 255, 0
    %v2662 = vsel %vm2630, 255, 0
    %v2663 = vsel %vm2631, 255, 0
    %v2664 = vsel %vm2632, 255, 0
    %v2665 = vsel %vm2633, 255, 0
    %v2666 = vsel %vm2634, 255, 0
    %v2667 = vsel %vm2635, 255, 0
    %v2668 = vsel %vm2636, 255, 0
    %v2669 = vpack.c.b16 %v2637, %v2637
    %v2670 = vpack.c.b8 %v2669, %v2669
    %v2671 = vpack.c.b16 %v2638, %v2638
    %v2672 = vpack.c.b8 %v2671, %v2671
    %v2673 = vpack.c.b16 %v2639, %v2639
    %v2674 = vpack.c.b8 %v2673, %v2673
    %v2675 = vpack.c.b16 %v2640, %v2640
    %v2676 = vpack.c.b8 %v2675, %v2675
    %v2677 = vpack.c.b16 %v2641, %v2641
    %v2678 = vpack.c.b8 %v2677, %v2677
    %v2679 = vpack.c.b16 %v2642, %v2642
    %v2680 = vpack.c.b8 %v2679, %v2679
    %v2681 = vpack.c.b16 %v2643, %v2643
    %v2682 = vpack.c.b8 %v2681, %v2681
    %v2683 = vpack.c.b16 %v2644, %v2644
    %v2684 = vpack.c.b8 %v2683, %v2683
    %v2685 = vpack.c.b16 %v2645, %v2645
    %v2686 = vpack.c.b8 %v2685, %v2685
    %v2687 = vpack.c.b16 %v2646, %v2646
    %v2688 = vpack.c.b8 %v2687, %v2687
    %v2689 = vpack.c.b16 %v2647, %v2647
    %v2690 = vpack.c.b8 %v2689, %v2689
    %v2691 = vpack.c.b16 %v2648, %v2648
    %v2692 = vpack.c.b8 %v2691, %v2691
    %v2693 = vpack.c.b16 %v2649, %v2649
    %v2694 = vpack.c.b8 %v2693, %v2693
    %v2695 = vpack.c.b16 %v2650, %v2650
    %v2696 = vpack.c.b8 %v2695, %v2695
    %v2697 = vpack.c.b16 %v2651, %v2651
    %v2698 = vpack.c.b8 %v2697, %v2697
    %v2699 = vpack.c.b16 %v2652, %v2652
    %v2700 = vpack.c.b8 %v2699, %v2699
    %v2701 = vpack.c.b16 %v2653, %v2653
    %v2702 = vpack.c.b8 %v2701, %v2701
    %v2703 = vpack.c.b16 %v2654, %v2654
    %v2704 = vpack.c.b8 %v2703, %v2703
    %v2705 = vpack.c.b16 %v2655, %v2655
    %v2706 = vpack.c.b8 %v2705, %v2705
    %v2707 = vpack.c.b16 %v2656, %v2656
    %v2708 = vpack.c.b8 %v2707, %v2707
    %v2709 = vpack.c.b16 %v2657, %v2657
    %v2710 = vpack.c.b8 %v2709, %v2709
    %v2711 = vpack.c.b16 %v2658, %v2658
    %v2712 = vpack.c.b8 %v2711, %v2711
    %v2713 = vpack.c.b16 %v2659, %v2659
    %v2714 = vpack.c.b8 %v2713, %v2713
    %v2715 = vpack.c.b16 %v2660, %v2660
    %v2716 = vpack.c.b8 %v2715, %v2715
    %v2717 = vpack.c.b16 %v2661, %v2661
    %v2718 = vpack.c.b8 %v2717, %v2717
    %v2719 = vpack.c.b16 %v2662, %v2662
    %v2720 = vpack.c.b8 %v2719, %v2719
    %v2721 = vpack.c.b16 %v2663, %v2663
    %v2722 = vpack.c.b8 %v2721, %v2721
    %v2723 = vpack.c.b16 %v2664, %v2664
    %v2724 = vpack.c.b8 %v2723, %v2723
    %v2725 = vpack.c.b16 %v2665, %v2665
    %v2726 = vpack.c.b8 %v2725, %v2725
    %v2727 = vpack.c.b16 %v2666, %v2666
    %v2728 = vpack.c.b8 %v2727, %v2727
    %v2729 = vpack.c.b16 %v2667, %v2667
    %v2730 = vpack.c.b8 %v2729, %v2729
    %v2731 = vpack.c.b16 %v2668, %v2668
    %v2732 = vpack.c.b8 %v2731, %v2731
    %v2733 = vrot.slane %v2672, 7
    %v2734 = vrot.slane %v2674, 6
    %v2735 = vrot.slane %v2676, 5
    %v2736 = vrot.slane %v2678, 4
    %v2737 = vrot.slane %v2680, 3
    %v2738 = vrot.slane %v2682, 2
    %v2739 = vrot.slane %v2684, 1
    %v2740 = vrot.slane %v2688, 7
    %v2741 = vrot.slane %v2690, 6
    %v2742 = vrot.slane %v2692, 5
    %v2743 = vrot.slane %v2694, 4
    %v2744 = vrot.slane %v2696, 3
    %v2745 = vrot.slane %v2698, 2
    %v2746 = vrot.slane %v2700, 1
    %v2747 = vrot.slane %v2704, 7
    %v2748 = vrot.slane %v2706, 6
    %v2749 = vrot.slane %v2708, 5
    %v2750 = vrot.slane %v2710, 4
    %v2751 = vrot.slane %v2712, 3
    %v2752 = vrot.slane %v2714, 2
    %v2753 = vrot.slane %v2716, 1
    %v2754 = vrot.slane %v2720, 7
    %v2755 = vrot.slane %v2722, 6
    %v2756 = vrot.slane %v2724, 5
    %v2757 = vrot.slane %v2726, 4
    %v2758 = vrot.slane %v2728, 3
    %v2759 = vrot.slane %v2730, 2
    %v2760 = vrot.slane %v2732, 1
    %vm2761 = vcmask 1040384
    %v2764 = vsel %vm2761, %v2670, %v2733
    %v2767 = vsel %vm183, %v2734, %v2735
    %v2768 = vsel %vm180, %v2764, %v2767
    %v2771 = vsel %vm184, %v2736, %v2737
    %v2774 = vsel %vm186, %v2738, %v2739
    %v2775 = vsel %vm2564, %v2771, %v2774
    %v2776 = vsel %vm2566, %v2768, %v2775
    %v2780 = vsel %vm2761, %v2686, %v2740
    %v2783 = vsel %vm183, %v2741, %v2742
    %v2784 = vsel %vm180, %v2780, %v2783
    %v2787 = vsel %vm184, %v2743, %v2744
    %v2790 = vsel %vm186, %v2745, %v2746
    %v2791 = vsel %vm2564, %v2787, %v2790
    %v2792 = vsel %vm2566, %v2784, %v2791
    %v2796 = vsel %vm2761, %v2702, %v2747
    %v2799 = vsel %vm183, %v2748, %v2749
    %v2800 = vsel %vm180, %v2796, %v2799
    %v2803 = vsel %vm184, %v2750, %v2751
    %v2806 = vsel %vm186, %v2752, %v2753
    %v2807 = vsel %vm2564, %v2803, %v2806
    %v2808 = vsel %vm2566, %v2800, %v2807
    %v2812 = vsel %vm2761, %v2718, %v2754
    %v2815 = vsel %vm183, %v2755, %v2756
    %v2816 = vsel %vm180, %v2812, %v2815
    %v2819 = vsel %vm184, %v2757, %v2758
    %v2822 = vsel %vm186, %v2759, %v2760
    %v2823 = vsel %vm2564, %v2819, %v2822
    %v2824 = vsel %vm2566, %v2816, %v2823
    %vm2826 = vcmask 1040384
    %vm2827 = vsmask.f32 256
    %vm2828 = vmand %vm2826, %vm2827
    %vm2829 = vcmask 1041409
    %vm2830 = vsmask.f32 1280
    %vm2831 = vmand %vm2829, %vm2830
    %vm2832 = vmor %vm2831, %vm2828
    %vm2833 = vcmask 1042434
    %vm2834 = vsmask.f32 2304
    %vm2835 = vmand %vm2833, %vm2834
    %vm2836 = vmor %vm2835, %vm2832
    %vm2837 = vcmask 1043459
    %vm2838 = vsmask.f32 3328
    %vm2839 = vmand %vm2837, %vm2838
    %vm2840 = vmor %vm2839, %vm2836
    %vm2841 = vcmask 1044484
    %vm2842 = vsmask.f32 4352
    %vm2843 = vmand %vm2841, %vm2842
    %vm2844 = vmor %vm2843, %vm2840
    %vm2845 = vcmask 1045509
    %vm2846 = vsmask.f32 5376
    %vm2847 = vmand %vm2845, %vm2846
    %vm2848 = vmor %vm2847, %vm2844
    %vm2849 = vcmask 1046534
    %vm2850 = vsmask.f32 6400
    %vm2851 = vmand %vm2849, %vm2850
    %vm2852 = vmor %vm2851, %vm2848
    %vm2853 = vcmask 1047559
    %vm2854 = vsmask.f32 7424
    %vm2855 = vmand %vm2853, %vm2854
    %vm2856 = vmor %vm2855, %vm2852
    %v2857 = vld [vmem:[#allocation11] sm:$0xff]
    %v2858 = vsel %vm2856, %v2776, %v2857
    %2859 = vst [vmem:[#allocation11] sm:$0xff] %v2858
    %v2860 = vld [vmem:[#allocation11 + $0x8] sm:$0xff]
    %v2861 = vsel %vm2856, %v2792, %v2860
    %2862 = vst [vmem:[#allocation11 + $0x8] sm:$0xff] %v2861
    %v2863 = vld [vmem:[#allocation11 + $0x10] sm:$0xff]
    %v2864 = vsel %vm2856, %v2808, %v2863
    %2865 = vst [vmem:[#allocation11 + $0x10] sm:$0xff] %v2864
    %v2866 = vld [vmem:[#allocation11 + $0x18] sm:$0xff]
    %v2867 = vsel %vm2856, %v2824, %v2866
    %2868 = vst [vmem:[#allocation11 + $0x18] sm:$0xff] %v2867
    %v2869 = vadd.f32 %v76, %v77
    %2870 = vadd.xlane.f32.xlu0 %v2869
    %v2871 = vpop.xlane.xlu0 %2870
    %v2872 = vadd.f32 %v78, %v79
    %2873 = vadd.xlane.f32.xlu0 %v2872
    %v2874 = vpop.xlane.xlu0 %2873
    %v2875 = vadd.f32 %v80, %v81
    %2876 = vadd.xlane.f32.xlu0 %v2875
    %v2877 = vpop.xlane.xlu0 %2876
    %v2878 = vadd.f32 %v82, %v83
    %2879 = vadd.xlane.f32.xlu0 %v2878
    %v2880 = vpop.xlane.xlu0 %2879
    %v2881 = vadd.f32 %v84, %v85
    %2882 = vadd.xlane.f32.xlu0 %v2881
    %v2883 = vpop.xlane.xlu0 %2882
    %v2884 = vadd.f32 %v86, %v87
    %2885 = vadd.xlane.f32.xlu0 %v2884
    %v2886 = vpop.xlane.xlu0 %2885
    %v2887 = vadd.f32 %v88, %v89
    %2888 = vadd.xlane.f32.xlu0 %v2887
    %v2889 = vpop.xlane.xlu0 %2888
    %v2890 = vadd.f32 %v90, %v91
    %2891 = vadd.xlane.f32.xlu0 %v2890
    %v2892 = vpop.xlane.xlu0 %2891
    %v2893 = vrcp.pop 256.0
    %v2894 = vmul.f32 256.0, %v2893
    %v2895 = vsub.f32 1.0, %v2894
    %v2896 = vmul.f32 %v2893, %v2895
    %v2897 = vadd.f32 %v2893, %v2896
    %vm2898 = vweird.f32 %v2893
    %v2899 = vsel %vm2898, %v2893, %v2897
    %v2900 = vmul.f32 %v2871, %v2899
    %v2901 = vmul.f32 %v2874, %v2899
    %v2902 = vmul.f32 %v2877, %v2899
    %v2903 = vmul.f32 %v2880, %v2899
    %v2904 = vmul.f32 %v2883, %v2899
    %v2905 = vmul.f32 %v2886, %v2899
    %v2906 = vmul.f32 %v2889, %v2899
    %v2907 = vmul.f32 %v2892, %v2899
    %v2908 = vld [vmem:[#allocation7] sm:$0x1]
    %v2910 = vperm.slane %v2908, 0
    %v2911 = vlaneseq
    %v2912 = vshrl.u32 %v2911, 7
    %2914 = vset.pattern.permute.xlu0 %v2912
    %2915 = vperm.xlu0 %2914, %v2910
    %v2916 = vpop.permute.xlu0 %2915
    %v2917 = vlaneseq
    %v2918 = vshrl.u32 %v2917, 7
    %v2919 = vadd.s32 %v2918, 8
    %2920 = vset.pattern.permute.xlu0 %v2919
    %2921 = vperm.xlu0 %2920, %v2910
    %v2922 = vpop.permute.xlu0 %2921
    %v2923 = vlaneseq
    %v2924 = vshrl.u32 %v2923, 7
    %v2925 = vadd.s32 %v2924, 16
    %2926 = vset.pattern.permute.xlu0 %v2925
    %2927 = vperm.xlu0 %2926, %v2910
    %v2928 = vpop.permute.xlu0 %2927
    %v2929 = vlaneseq
    %v2930 = vshrl.u32 %v2929, 7
    %v2931 = vadd.s32 %v2930, 24
    %2932 = vset.pattern.permute.xlu0 %v2931
    %2933 = vperm.xlu0 %2932, %v2910
    %v2934 = vpop.permute.xlu0 %2933
    %v2939 = vmul.f32 %v2900, %v2916
    %v2940 = vmul.f32 %v2901, %v2922
    %v2941 = vmul.f32 %v2902, %v2928
    %v2942 = vmul.f32 %v2903, %v2934
    %v2943 = vmul.f32 %v2904, %v2916
    %v2944 = vmul.f32 %v2905, %v2922
    %v2945 = vmul.f32 %v2906, %v2928
    %v2946 = vmul.f32 %v2907, %v2934
    %2955 = vset.pattern.permute.xlu0 0
    %2956 = vperm.xlu0 %2955, %v2939
    %v2957 = vpop.permute.xlu0 %2956
    %2958 = vset.pattern.permute.xlu0 0
    %2959 = vperm.xlu0 %2958, %v2940
    %v2960 = vpop.permute.xlu0 %2959
    %2961 = vset.pattern.permute.xlu0 0
    %2962 = vperm.xlu0 %2961, %v2941
    %v2963 = vpop.permute.xlu0 %2962
    %2964 = vset.pattern.permute.xlu0 0
    %2965 = vperm.xlu0 %2964, %v2942
    %v2966 = vpop.permute.xlu0 %2965
    %2967 = vset.pattern.permute.xlu0 0
    %2968 = vperm.xlu0 %2967, %v2943
    %v2969 = vpop.permute.xlu0 %2968
    %2970 = vset.pattern.permute.xlu0 0
    %2971 = vperm.xlu0 %2970, %v2944
    %v2972 = vpop.permute.xlu0 %2971
    %2973 = vset.pattern.permute.xlu0 0
    %2974 = vperm.xlu0 %2973, %v2945
    %v2975 = vpop.permute.xlu0 %2974
    %2976 = vset.pattern.permute.xlu0 0
    %2977 = vperm.xlu0 %2976, %v2946
    %v2978 = vpop.permute.xlu0 %2977
    %v2979 = vlaneseq
    %v2980 = vand.u32 %v2979, 127
    %v2981 = vperm.slane %v2957, %v2980
    %v2982 = vadd.s32 %v2980, 4294967288
    %v2983 = vperm.slane %v2960, %v2982
    %vm2984 = vcmask 130112
    %v2985 = vsel %vm2984, %v2983, %v2981
    %v2986 = vadd.s32 %v2980, 4294967280
    %v2987 = vperm.slane %v2963, %v2986
    %vm2988 = vcmask 195712
    %v2989 = vsel %vm2988, %v2987, %v2985
    %v2990 = vadd.s32 %v2980, 4294967272
    %v2991 = vperm.slane %v2966, %v2990
    %vm2992 = vcmask 261312
    %v2993 = vsel %vm2992, %v2991, %v2989
    %v2994 = vperm.slane %v2969, %v2980
    %v2995 = vperm.slane %v2972, %v2982
    %v2996 = vsel %vm2984, %v2995, %v2994
    %v2997 = vperm.slane %v2975, %v2986
    %v2998 = vsel %vm2988, %v2997, %v2996
    %v2999 = vperm.slane %v2978, %v2990
    %v3000 = vsel %vm2992, %v2999, %v2998
    %v3001 = vsel %vm189, %v3000, %v2993
    %vm3003 = vcmask 254976
    %v3004 = vsel %vm3003, %v3001, 0.0
    %3005 = vadd.xlane.f32.xlu0 %v3004
    %v3006 = vpop.xlane.xlu0 %3005
    %s3007 = sld [smem:[#allocation3]]
    %v3008 = vstv %s3007
    %v3009 = vadd.f32 %v3006, %v3008
    %v3010 = vxor.u32 %v3009, 2147483648
    %v3011 = vmul.f32 %v3010, 1.442695
    %v3012 = vpow.pop %v3011
    %v3013 = vadd.f32 %v3012, 1.0
    %v3014 = vrcp.pop %v3013
    %v3015 = vmul.f32 %v3013, %v3014
    %v3016 = vsub.f32 1.0, %v3015
    %v3017 = vmul.f32 %v3014, %v3016
    %v3018 = vadd.f32 %v3014, %v3017
    %vm3019 = vweird.f32 %v3013
    %vm3020 = vweird.f32 %v3014
    %vm3021 = vmor %vm3019, %vm3020
    %v3022 = vsel %vm3021, %v3014, %v3018
    %v3023 = vand.u32 2147483647, %v3013
    %vm3024 = vcmp.eq.f32.partialorder %v3023, 8.507059e+37
    %v3025 = vand.u32 %v3013, 2147483648
    %v3026 = vor.u32 1.1754944e-38, %v3025
    %v3027 = vsel %vm3024, %v3026, %v3022
    %v3028 = vmul.f32 1.0, %v3027
    %vm3029 = vcmask 1024
    %3030 = vst.msk [vmem:[%s9] sm:$0x3] %vm3029, %v3028
    // Predicated region
    $region38: #{tpu_custom_call.1} parent=1 // pred_check
      _
    $region39: #{tpu_custom_call.1} parent=1 // pred_check_branch
      %3032 = sbr.rel (0) target = $region41
    $region40: #{tpu_custom_call.1} parent=1 // pred_region
      %3034 = vsyncadd [#allocation6], 0
      %s3036 = sshll.u32 [#allocation10], 4
      %s3037 = int_to_ptr.vmem [resolvable:$true] %s3036
      %s3038 = sshll.u32 %s6, 4
      %s3039 = int_to_ptr.hbm [resolvable:$true] %s3038
      %3041 = dma.vmem_to_hbm [thread:$0]  %s3037, 1024, %s3039, [#allocation6]
    $region41: #{tpu_custom_call.1} parent=1 // pred_fallthru
      _
    // Predicated region
    $region42: #{tpu_custom_call.1} parent=1 // pred_check
      _
    $region43: #{tpu_custom_call.1} parent=1 // pred_check_branch
      %3043 = sbr.rel (0) target = $region45
    $region44: #{tpu_custom_call.1} parent=1 // pred_region
      %3045 = vsyncadd [#allocation12], 0
      %s3047 = sshll.u32 [#allocation11], 4
      %s3048 = int_to_ptr.vmem [resolvable:$true] %s3047
      %s3049 = sshll.u32 %s7, 4
      %s3050 = int_to_ptr.hbm [resolvable:$true] %s3049
      %3052 = dma.vmem_to_hbm [thread:$0]  %s3048, 512, %s3050, [#allocation12]
    $region45: #{tpu_custom_call.1} parent=1 // pred_fallthru
      _
    // Predicated region
    $region46: #{tpu_custom_call.1} parent=1 // pred_check
      _
    $region47: #{tpu_custom_call.1} parent=1 // pred_check_branch
      %3054 = sbr.rel (0) target = $region49
    $region48: #{tpu_custom_call.1} parent=1 // pred_region
      %3056 = vsyncadd [#allocation12], 0
      %s3058 = sshll.u32 [#allocation13], 4
      %s3059 = int_to_ptr.vmem [resolvable:$true] %s3058
      %s3060 = sshll.u32 %s8, 4
      %s3061 = int_to_ptr.hbm [resolvable:$true] %s3060
      %3063 = dma.vmem_to_hbm [thread:$0]  %s3059, 64, %s3061, [#allocation12]
    $region49: #{tpu_custom_call.1} parent=1 // pred_fallthru
      _
    // Predicated region
    $region50: #{tpu_custom_call.1} parent=1 // pred_check
      _
    $region51: #{tpu_custom_call.1} parent=1 // pred_check_branch
      %3065 = sbr.rel (0) target = $region53
    $region52: #{tpu_custom_call.1} parent=1 // pred_region
      _
    $region53: #{tpu_custom_call.1} parent=1 // pred_fallthru
      _
    // Predicated region
    $region54: #{tpu_custom_call.1} parent=1 // pred_check
      _
    $region55: #{tpu_custom_call.1} parent=1 // pred_check_branch
      %3067 = sbr.rel (0) target = $region57
    $region56: #{tpu_custom_call.1} parent=1 // pred_region
      %3069 = dma.done [#allocation6], 1024
    $region57: #{tpu_custom_call.1} parent=1 // pred_fallthru
      _
    // Predicated region
    $region58: #{tpu_custom_call.1} parent=1 // pred_check
      _
    $region59: #{tpu_custom_call.1} parent=1 // pred_check_branch
      %3071 = sbr.rel (0) target = $region61
    $region60: #{tpu_custom_call.1} parent=1 // pred_region
      %3073 = dma.done [#allocation12], 512
    $region61: #{tpu_custom_call.1} parent=1 // pred_fallthru
      _
    // Predicated region
    $region62: #{tpu_custom_call.1} parent=1 // pred_check
      _
    $region63: #{tpu_custom_call.1} parent=1 // pred_check_branch
      %3075 = sbr.rel (0) target = $region65
    $region64: #{tpu_custom_call.1} parent=1 // pred_region
      %3077 = dma.done [#allocation12], 64
    $region65: #{tpu_custom_call.1} parent=1 // pred_fallthru
      _
    // Predicated region
    $region66: #{tpu_custom_call.1} parent=1 // pred_check
      _
    $region67: #{tpu_custom_call.1} parent=1 // pred_check_branch
      %3079 = sbr.rel (0) target = $region69
    $region68: #{tpu_custom_call.1} parent=1 // pred_region
      _
    $region69: #{tpu_custom_call.1} parent=1 // pred_fallthru
      _
    %3080 = vsyncpa [#allocation5], 1
    %3081 = vsyncpa [#allocation8], 1
    %3082 = vsyncpa [#allocation6], 1
    %3083 = vsyncpa [#allocation12], 1

</llo_original>
